<compile_context>
chip_gen: v6e
topology: v6e:2x2x1
jax: 0.10.0
libtpu: 0.0.40
codegen_flags: <defaults>
</compile_context>

<pallas_src>
from math import factorial

import numpy as np

import jax
import jax.numpy as jnp
from jax.experimental import pallas as pl
from jax.experimental.pallas import tpu as pltpu

# ----------------------------- configuration --------------------------------
LMAX = 2
MUL = 4
N_LAYERS = 3
RS_IN = [(4, 0, 1)]                  # dim(Rs_in)  = 4
RS_OUT = [(2, 0, 1), (2, 1, -1)]     # dim(Rs_out) = 2*1 + 2*3 = 8
S2_GRID_POINTS = 128                 # TODO(synk): e3nn uses a res=20*(lmax+1) equiangular
                                     # grid with 'component' normalization; here a smaller
                                     # Fibonacci grid + pseudo-inverse is used.


def rs_dim(Rs):
    return sum(m * (2 * l + 1) for (m, l, _p) in Rs)


DIM_IN = rs_dim(RS_IN)               # 4
DIM_OUT = rs_dim(RS_OUT)             # 8
DL = (LMAX + 1) ** 2                 # 9  = dim(act1.Rs_in) == dim(act2.Rs_in)
DIM_HID = MUL * 2 * DL               # 72 per-layer linear output dim (un-padded)
H = 128                              # hidden width padded to one full lane row
G = S2_GRID_POINTS                   # grid points per sphere
NSW = MUL * G                        # 512: swish (act1) grid lanes
NG = 2 * MUL * G                     # 1024: total grid lanes (swish | tanh)
OUT_PAD = 128                        # lane-dense output slab; real outputs in [:DIM_OUT]
ROW_TILE_CAP = 512


# ----------------------- S2 grid (plain numpy, parameter setup) -------------
def _assoc_legendre(lmax, x):
    P = np.zeros((lmax + 1, lmax + 1, x.shape[0]), dtype=np.float64)
    P[0, 0] = 1.0
    s = np.sqrt(np.maximum(0.0, 1.0 - x * x))
    for m in range(1, lmax + 1):
        P[m, m] = -(2 * m - 1) * s * P[m - 1, m - 1]
    for m in range(0, lmax):
        P[m + 1, m] = (2 * m + 1) * x * P[m, m]
    for m in range(0, lmax + 1):
        for l in range(m + 2, lmax + 1):
            P[l, m] = ((2 * l - 1) * x * P[l - 1, m] - (l + m - 1) * P[l - 2, m]) / (l - m)
    return P


def _real_sph_harm(lmax, theta, phi):
    x = np.cos(theta)
    P = _assoc_legendre(lmax, x)
    cols = []
    for l in range(lmax + 1):
        for m in range(-l, l + 1):
            am = abs(m)
            K = np.sqrt((2 * l + 1) / (4 * np.pi) * factorial(l - am) / factorial(l + am))
            if m == 0:
                cols.append(K * P[l, 0])
            elif m > 0:
                cols.append(np.sqrt(2.0) * K * np.cos(m * phi) * P[l, m])
            else:
                cols.append(np.sqrt(2.0) * K * np.sin(am * phi) * P[l, am])
    return np.stack(cols, axis=-1)           # [n_points, (lmax+1)^2]


def _fibonacci_sphere(n):
    i = np.arange(n, dtype=np.float64)
    z = 1.0 - 2.0 * (i + 0.5) / n
    theta = np.arccos(np.clip(z, -1.0, 1.0))
    phi = (np.pi * (3.0 - np.sqrt(5.0)) * i) % (2.0 * np.pi)
    return theta, phi


def make_s2_grid_matrices(lmax, n_grid):
    theta, phi = _fibonacci_sphere(n_grid)
    y = _real_sph_harm(lmax, theta, phi)      # [G, Dl]
    bt = y.T                                  # coeffs -> grid,  [Dl, G]
    a = np.linalg.pinv(bt)                    # grid -> coeffs,  [G, Dl]
    return bt.astype(np.float32), a.astype(np.float32)


# ------------------------------ parameters -----------------------------------
def init_params(key):
    """Raw (un-padded) f32 parameters, same distribution/layout as before."""
    layer_ws = []
    d_in = DIM_IN
    for _ in range(N_LAYERS):
        key, k = jax.random.split(key)
        layer_ws.append(
            jax.random.normal(k, (d_in, DIM_HID), dtype=jnp.float32) / np.sqrt(d_in)
        )
        d_in = DIM_HID
    key, k = jax.random.split(key)
    w_tail = jax.random.normal(k, (d_in * d_in, DIM_OUT), dtype=jnp.float32) / np.sqrt(
        d_in * d_in
    )
    bt, a = make_s2_grid_matrices(LMAX, S2_GRID_POINTS)
    return {
        "layer_ws": layer_ws,
        "w_tail": w_tail,
        "bt": jnp.asarray(bt),
        "a": jnp.asarray(a),
    }


def pack_params(raw):
    """Repack raw weights into lane-dense, block-diagonal bf16 operands."""
    w1, w2, w3 = [np.asarray(w, dtype=np.float32) for w in raw["layer_ws"]]
    w_tail = np.asarray(raw["w_tail"], dtype=np.float32)
    bt = np.asarray(raw["bt"], dtype=np.float32)      # [DL, G]
    a = np.asarray(raw["a"], dtype=np.float32)        # [G, DL]

    # Layer linears padded to an H=128-lane hidden slab (pad rows/cols are zero so the
    # padded lanes of h stay exactly zero through the whole network).
    w1_pad = np.zeros((DIM_IN, H), np.float32)
    w1_pad[:, :DIM_HID] = w1
    w2_pad = np.zeros((H, H), np.float32)
    w2_pad[:DIM_HID, :DIM_HID] = w2
    w3_pad = np.zeros((H, H), np.float32)
    w3_pad[:DIM_HID, :DIM_HID] = w3

    # Block-diagonal coeff<->grid transforms covering all `mul` copies and both
    # parities in one matmul.  Swish (act1) grids occupy lanes [0, NSW), tanh (act2)
    # grids occupy [NSW, NG).
    bt_big = np.zeros((H, NG), np.float32)
    a_big = np.zeros((NG, H), np.float32)
    for m in range(MUL):
        c0 = m * 2 * DL
        bt_big[c0:c0 + DL, m * G:(m + 1) * G] = bt
        bt_big[c0 + DL:c0 + 2 * DL, NSW + m * G:NSW + (m + 1) * G] = bt
        a_big[m * G:(m + 1) * G, c0:c0 + DL] = a
        a_big[NSW + m * G:NSW + (m + 1) * G, c0 + DL:c0 + 2 * DL] = a

    # Fold the hidden linears into the preceding grid->coeff matrices (free, offline):
    #   act_out @ w2 == g @ (a_big @ w2_pad)   etc.
    a_l1 = a_big @ w2_pad          # layer-1 activation, w2 folded in
    a_l2 = a_big @ w3_pad          # layer-2 activation, w3 folded in
    a_l3 = a_big                   # layer-3 activation (feeds the tail)

    # Tail bilinear restructured so h ⊗ h never materializes:
    #   wt_stack[a, o*H + b] = W_tail[a*DIM_HID + b, o]  (zero-padded to H-lane blocks)
    wt3 = w_tail.reshape(DIM_HID, DIM_HID, DIM_OUT)
    wt_stack = np.zeros((H, DIM_OUT * H), np.float32)
    for o in range(DIM_OUT):
        wt_stack[:DIM_HID, o * H:o * H + DIM_HID] = wt3[:, :, o]

    # Block-reduction selector, padded to a 128-lane output slab (lane-dense stores).
    sel = np.zeros((DIM_OUT * H, OUT_PAD), np.float32)
    for o in range(DIM_OUT):
        sel[o * H:(o + 1) * H, o] = 1.0

    bf16 = jnp.bfloat16
    return {
        "w1_pad": jnp.asarray(w1_pad, dtype=jnp.float32),   # tiny K=4 matmul stays f32
        "bt_big": jnp.asarray(bt_big, dtype=bf16),
        "a_l1": jnp.asarray(a_l1, dtype=bf16),
        "a_l2": jnp.asarray(a_l2, dtype=bf16),
        "a_l3": jnp.asarray(a_l3, dtype=bf16),
        "wt_stack": jnp.asarray(wt_stack, dtype=bf16),
        "sel": jnp.asarray(sel, dtype=bf16),
    }


# ------------------------------- fused kernel --------------------------------
def _fused_forward_kernel(x_ref, w1_ref, bt_ref, a1_ref, a2_ref, a3_ref,
                          wt_ref, sel_ref, o_ref):
    f32 = jnp.float32
    bf16 = jnp.bfloat16
    bt = bt_ref[...]                               # [H, NG] bf16, coeff -> grid

    def s2_act(h_f32, a_ref_):
        """S2 activation (swish | tanh over all mul copies) + any folded linear.

        bf16 operands, f32 MXU accumulation; transcendentals in f32 (portable)."""
        hb = h_f32.astype(bf16)
        g = jnp.dot(hb, bt, preferred_element_type=f32)          # [tn, NG] f32 grids
        g1 = g[:, :NSW]                                          # swish (act1) grids
        g2 = g[:, NSW:]                                          # tanh  (act2) grids
        # swish(x) = x*sigmoid(x); sigmoid(x) = 0.5*(1+tanh(x/2)) -> tanh on EUP slot.
        g1 = (g1 * (0.5 * (jnp.tanh(0.5 * g1) + 1.0))).astype(bf16)
        g2 = jnp.tanh(g2).astype(bf16)
        return (jnp.dot(g1, a_ref_[:NSW, :], preferred_element_type=f32)
                + jnp.dot(g2, a_ref_[NSW:, :], preferred_element_type=f32))  # [tn,H] f32

    # Layer 1 linear (K=4, negligible; stays f32), then three fused (act [+folded lin]).
    h = jnp.dot(x_ref[...], w1_ref[...], preferred_element_type=f32)   # [tn, H] f32
    h = s2_act(h, a1_ref)          # act of layer 1, w2 folded into a1
    h = s2_act(h, a2_ref)          # act of layer 2, w3 folded into a2
    h = s2_act(h, a3_ref)          # act of layer 3

    # Tail bilinear y[n,o] = h[n,:] @ W_o @ h[n,:]^T without materializing h ⊗ h
    # and without replicating h:
    #   hW[n, o*H+b] = sum_a h[n,a] * W_o[a,b]          (one MXU matmul)
    #   prod block o = hW[:, o*H:(o+1)*H] * h            (static 128-lane slices)
    #   y[n, o]      = sum_b prod[n, o*H+b]              (padded block-reduce matmul)
    hb = h.astype(bf16)
    hW = jnp.dot(hb, wt_ref[...], preferred_element_type=f32)          # [tn, DIM_OUT*H]
    prod = jnp.concatenate(
        [(hW[:, o * H:(o + 1) * H] * h).astype(bf16) for o in range(DIM_OUT)],
        axis=1)                                                        # [tn, DIM_OUT*H]
    y = jnp.dot(prod, sel_ref[...], preferred_element_type=f32)        # [tn, OUT_PAD]
    o_ref[...] = y.astype(o_ref.dtype)


def _round_up(x, m):
    return ((x + m - 1) // m) * m


def _num_tensorcores_per_chip():
    """Best-effort: v7x-class chips have 2 TensorCores per chip; v5e/v6e have 1."""
    try:
        kind = jax.devices()[0].device_kind.lower()
    except Exception:
        return 1
    return 2 if "7" in kind else 1


def _choose_row_tile(n_rows, n_cores):
    """Row tile: multiple of 8.  Single grid step for small inputs (no forced split on
    1-TC v5e/v6e); split into 2 even steps (>=256 rows each) only on 2-TC chips;
    512-row cap for large inputs."""
    n8 = _round_up(max(n_rows, 1), 8)
    if n8 <= ROW_TILE_CAP:
        if n_cores >= 2 and n8 >= 512:
            tn = _round_up((n8 + 1) // 2, 8)
        else:
            tn = n8
    else:
        tn = ROW_TILE_CAP
    return tn, _round_up(n8, tn)


# ------------------------------- forward -------------------------------------
def s2_parity_network_forward(packed, x):
    lead = x.shape[:-1]
    n = int(np.prod(lead)) if lead else 1
    xf = x.reshape(n, DIM_IN).astype(jnp.float32)

    tn, n_pad = _choose_row_tile(n, _num_tensorcores_per_chip())
    if n_pad != n:
        xf = jnp.pad(xf, ((0, n_pad - n), (0, 0)))

    out = pl.pallas_call(
        _fused_forward_kernel,
        out_shape=jax.ShapeDtypeStruct((n_pad, OUT_PAD), jnp.float32),
        grid=(n_pad // tn,),
        in_specs=[
            pl.BlockSpec((tn, DIM_IN), lambda i: (i, 0)),             # x rows
            pl.BlockSpec((DIM_IN, H), lambda i: (0, 0)),              # w1 (f32, resident)
            pl.BlockSpec((H, NG), lambda i: (0, 0)),                  # coeff->grid (bf16)
            pl.BlockSpec((NG, H), lambda i: (0, 0)),                  # grid->coeff ∘ w2
            pl.BlockSpec((NG, H), lambda i: (0, 0)),                  # grid->coeff ∘ w3
            pl.BlockSpec((NG, H), lambda i: (0, 0)),                  # grid->coeff (layer 3)
            pl.BlockSpec((H, DIM_OUT * H), lambda i: (0, 0)),         # tail weight stack
            pl.BlockSpec((DIM_OUT * H, OUT_PAD), lambda i: (0, 0)),   # padded block-reduce
        ],
        out_specs=pl.BlockSpec((tn, OUT_PAD), lambda i: (i, 0)),      # lane-dense output
        compiler_params=pltpu.CompilerParams(
            dimension_semantics=("parallel",),
            vmem_limit_bytes=32 * 1024 * 1024,
        ),
    )(xf, packed["w1_pad"], packed["bt_big"], packed["a_l1"], packed["a_l2"],
      packed["a_l3"], packed["wt_stack"], packed["sel"])

    return out[:n, :DIM_OUT].reshape(*lead, DIM_OUT)


# pure-JAX reference (for correctness check of the Pallas kernel)
def s2_parity_network_ref(raw, x):
    hp = jax.lax.Precision.HIGHEST
    lead = x.shape[:-1]
    n = int(np.prod(lead)) if lead else 1
    h = x.reshape(n, x.shape[-1]).astype(jnp.float32)
    for w in raw["layer_ws"]:
        h = jnp.dot(h, w, precision=hp)
        z = h.reshape(n * MUL, 2 * DL)
        g1 = jnp.dot(z[:, :DL], raw["bt"], precision=hp)
        g2 = jnp.dot(z[:, DL:], raw["bt"], precision=hp)
        g1 = g1 * jax.nn.sigmoid(g1)
        g2 = jnp.tanh(g2)
        z = jnp.concatenate(
            [jnp.dot(g1, raw["a"], precision=hp), jnp.dot(g2, raw["a"], precision=hp)],
            axis=-1,
        )
        h = z.reshape(n, MUL * 2 * DL)
    # TODO(synk): generic learnable bilinear instead of CG-restricted tensor square.
    xx = (h[:, :, None] * h[:, None, :]).reshape(n, -1)
    y = jnp.dot(xx, raw["w_tail"], precision=hp)
    return y.reshape(*lead, DIM_OUT)


# --------------------------------- main ---------------------------------------
if __name__ == "__main__":
    key = jax.random.PRNGKey(0)
    raw_params = init_params(key)
    packed_params = pack_params(raw_params)

    x = jax.random.normal(jax.random.fold_in(key, 123), (2, 16, DIM_IN), dtype=jnp.float32)

    y = s2_parity_network_forward(packed_params, x)
    y = jax.block_until_ready(y)

    assert y.shape == (2, 16, DIM_OUT), y.shape
    y_ref = jax.block_until_ready(s2_parity_network_ref(raw_params, x))
    # Tolerance accounts for bf16 MXU operands vs the f32 HIGHEST-precision reference.
    np.testing.assert_allclose(np.asarray(y), np.asarray(y_ref), rtol=3e-2, atol=3e-2)

    print("KERNEL_OK")
</pallas_src>

<mosaic_0001>
module attributes {stable_mosaic.version = 11 : i64} {
  func.func @_fused_forward_kernel(%arg0: i32, %arg1: memref<32x4xf32, #tpu.memory_space<vmem>>, %arg2: memref<4x128xf32, #tpu.memory_space<vmem>>, %arg3: memref<128x1024xbf16, #tpu.memory_space<vmem>>, %arg4: memref<1024x128xbf16, #tpu.memory_space<vmem>>, %arg5: memref<1024x128xbf16, #tpu.memory_space<vmem>>, %arg6: memref<1024x128xbf16, #tpu.memory_space<vmem>>, %arg7: memref<128x1024xbf16, #tpu.memory_space<vmem>>, %arg8: memref<1024x128xbf16, #tpu.memory_space<vmem>>, %arg9: memref<32x128xf32, #tpu.memory_space<vmem>>) attributes {dimension_semantics = [#tpu.dimension_semantics<parallel>], iteration_bounds = array<i64: 1>, scalar_prefetch = 0 : i64, scratch_operands = 0 : i64, tpu.core_type = #tpu.core_type<tc>, window_params = [{transform_indices = @transform_0, window_bounds = array<i64: 32, 4>}, {pipeline_mode = #tpu.pipeline_mode<synchronous>, transform_indices = @transform_1, window_bounds = array<i64: 4, 128>}, {pipeline_mode = #tpu.pipeline_mode<synchronous>, transform_indices = @transform_2, window_bounds = array<i64: 128, 1024>}, {pipeline_mode = #tpu.pipeline_mode<synchronous>, transform_indices = @transform_3, window_bounds = array<i64: 1024, 128>}, {pipeline_mode = #tpu.pipeline_mode<synchronous>, transform_indices = @transform_4, window_bounds = array<i64: 1024, 128>}, {pipeline_mode = #tpu.pipeline_mode<synchronous>, transform_indices = @transform_5, window_bounds = array<i64: 1024, 128>}, {pipeline_mode = #tpu.pipeline_mode<synchronous>, transform_indices = @transform_6, window_bounds = array<i64: 128, 1024>}, {pipeline_mode = #tpu.pipeline_mode<synchronous>, transform_indices = @transform_7, window_bounds = array<i64: 1024, 128>}, {transform_indices = @transform_8, window_bounds = array<i64: 32, 128>}]} {
    %c0 = arith.constant 0 : index
    %c0_0 = arith.constant 0 : index
    %0 = vector.load %arg3[%c0, %c0_0] : memref<128x1024xbf16, #tpu.memory_space<vmem>>, vector<128x1024xbf16>
    %c0_1 = arith.constant 0 : index
    %c0_2 = arith.constant 0 : index
    %1 = vector.load %arg1[%c0_1, %c0_2] : memref<32x4xf32, #tpu.memory_space<vmem>>, vector<32x4xf32>
    %c0_3 = arith.constant 0 : index
    %c0_4 = arith.constant 0 : index
    %2 = vector.load %arg2[%c0_3, %c0_4] : memref<4x128xf32, #tpu.memory_space<vmem>>, vector<4x128xf32>
    %cst = arith.constant dense<0.000000e+00> : vector<32x128xf32>
    %3 = tpu.matmul %1, %2, %cst {dimension_numbers = #tpu.dot_dimension_numbers<[1], [0], [0], [1], [0, 0, 1, 1], [], []>} : vector<32x4xf32>, vector<4x128xf32>, vector<32x128xf32> -> vector<32x128xf32>
    %4 = arith.truncf %3 : vector<32x128xf32> to vector<32x128xbf16>
    %cst_5 = arith.constant dense<0.000000e+00> : vector<32x1024xf32>
    %5 = tpu.matmul %4, %0, %cst_5 {dimension_numbers = #tpu.dot_dimension_numbers<[1], [0], [0], [1], [0, 0, 1, 1], [], []>} : vector<32x128xbf16>, vector<128x1024xbf16>, vector<32x1024xf32> -> vector<32x1024xf32>
    %6 = vector.extract_strided_slice %5 {offsets = [0, 0], sizes = [32, 512], strides = [1, 1]} : vector<32x1024xf32> to vector<32x512xf32>
    %7 = vector.extract_strided_slice %5 {offsets = [0, 512], sizes = [32, 512], strides = [1, 1]} : vector<32x1024xf32> to vector<32x512xf32>
    %cst_6 = arith.constant 5.000000e-01 : f32
    %8 = vector.broadcast %cst_6 : f32 to vector<32x512xf32>
    %9 = arith.mulf %8, %6 : vector<32x512xf32>
    %10 = math.tanh %9 : vector<32x512xf32>
    %cst_7 = arith.constant 1.000000e+00 : f32
    %11 = vector.broadcast %cst_7 : f32 to vector<32x512xf32>
    %12 = arith.addf %10, %11 : vector<32x512xf32>
    %cst_8 = arith.constant 5.000000e-01 : f32
    %13 = vector.broadcast %cst_8 : f32 to vector<32x512xf32>
    %14 = arith.mulf %13, %12 : vector<32x512xf32>
    %15 = arith.mulf %6, %14 : vector<32x512xf32>
    %16 = arith.truncf %15 : vector<32x512xf32> to vector<32x512xbf16>
    %17 = math.tanh %7 : vector<32x512xf32>
    %18 = arith.truncf %17 : vector<32x512xf32> to vector<32x512xbf16>
    %c0_9 = arith.constant 0 : index
    %c0_10 = arith.constant 0 : index
    %19 = vector.load %arg4[%c0_9, %c0_10] : memref<1024x128xbf16, #tpu.memory_space<vmem>>, vector<512x128xbf16>
    %cst_11 = arith.constant dense<0.000000e+00> : vector<32x128xf32>
    %20 = tpu.matmul %16, %19, %cst_11 {dimension_numbers = #tpu.dot_dimension_numbers<[1], [0], [0], [1], [0, 0, 1, 1], [], []>} : vector<32x512xbf16>, vector<512x128xbf16>, vector<32x128xf32> -> vector<32x128xf32>
    %c512 = arith.constant 512 : index
    %c0_12 = arith.constant 0 : index
    %21 = vector.load %arg4[%c512, %c0_12] : memref<1024x128xbf16, #tpu.memory_space<vmem>>, vector<512x128xbf16>
    %cst_13 = arith.constant dense<0.000000e+00> : vector<32x128xf32>
    %22 = tpu.matmul %18, %21, %cst_13 {dimension_numbers = #tpu.dot_dimension_numbers<[1], [0], [0], [1], [0, 0, 1, 1], [], []>} : vector<32x512xbf16>, vector<512x128xbf16>, vector<32x128xf32> -> vector<32x128xf32>
    %23 = arith.addf %20, %22 : vector<32x128xf32>
    %24 = arith.truncf %23 : vector<32x128xf32> to vector<32x128xbf16>
    %cst_14 = arith.constant dense<0.000000e+00> : vector<32x1024xf32>
    %25 = tpu.matmul %24, %0, %cst_14 {dimension_numbers = #tpu.dot_dimension_numbers<[1], [0], [0], [1], [0, 0, 1, 1], [], []>} : vector<32x128xbf16>, vector<128x1024xbf16>, vector<32x1024xf32> -> vector<32x1024xf32>
    %26 = vector.extract_strided_slice %25 {offsets = [0, 0], sizes = [32, 512], strides = [1, 1]} : vector<32x1024xf32> to vector<32x512xf32>
    %27 = vector.extract_strided_slice %25 {offsets = [0, 512], sizes = [32, 512], strides = [1, 1]} : vector<32x1024xf32> to vector<32x512xf32>
    %cst_15 = arith.constant 5.000000e-01 : f32
    %28 = vector.broadcast %cst_15 : f32 to vector<32x512xf32>
    %29 = arith.mulf %28, %26 : vector<32x512xf32>
    %30 = math.tanh %29 : vector<32x512xf32>
    %cst_16 = arith.constant 1.000000e+00 : f32
    %31 = vector.broadcast %cst_16 : f32 to vector<32x512xf32>
    %32 = arith.addf %30, %31 : vector<32x512xf32>
    %cst_17 = arith.constant 5.000000e-01 : f32
    %33 = vector.broadcast %cst_17 : f32 to vector<32x512xf32>
    %34 = arith.mulf %33, %32 : vector<32x512xf32>
    %35 = arith.mulf %26, %34 : vector<32x512xf32>
    %36 = arith.truncf %35 : vector<32x512xf32> to vector<32x512xbf16>
    %37 = math.tanh %27 : vector<32x512xf32>
    %38 = arith.truncf %37 : vector<32x512xf32> to vector<32x512xbf16>
    %c0_18 = arith.constant 0 : index
    %c0_19 = arith.constant 0 : index
    %39 = vector.load %arg5[%c0_18, %c0_19] : memref<1024x128xbf16, #tpu.memory_space<vmem>>, vector<512x128xbf16>
    %cst_20 = arith.constant dense<0.000000e+00> : vector<32x128xf32>
    %40 = tpu.matmul %36, %39, %cst_20 {dimension_numbers = #tpu.dot_dimension_numbers<[1], [0], [0], [1], [0, 0, 1, 1], [], []>} : vector<32x512xbf16>, vector<512x128xbf16>, vector<32x128xf32> -> vector<32x128xf32>
    %c512_21 = arith.constant 512 : index
    %c0_22 = arith.constant 0 : index
    %41 = vector.load %arg5[%c512_21, %c0_22] : memref<1024x128xbf16, #tpu.memory_space<vmem>>, vector<512x128xbf16>
    %cst_23 = arith.constant dense<0.000000e+00> : vector<32x128xf32>
    %42 = tpu.matmul %38, %41, %cst_23 {dimension_numbers = #tpu.dot_dimension_numbers<[1], [0], [0], [1], [0, 0, 1, 1], [], []>} : vector<32x512xbf16>, vector<512x128xbf16>, vector<32x128xf32> -> vector<32x128xf32>
    %43 = arith.addf %40, %42 : vector<32x128xf32>
    %44 = arith.truncf %43 : vector<32x128xf32> to vector<32x128xbf16>
    %cst_24 = arith.constant dense<0.000000e+00> : vector<32x1024xf32>
    %45 = tpu.matmul %44, %0, %cst_24 {dimension_numbers = #tpu.dot_dimension_numbers<[1], [0], [0], [1], [0, 0, 1, 1], [], []>} : vector<32x128xbf16>, vector<128x1024xbf16>, vector<32x1024xf32> -> vector<32x1024xf32>
    %46 = vector.extract_strided_slice %45 {offsets = [0, 0], sizes = [32, 512], strides = [1, 1]} : vector<32x1024xf32> to vector<32x512xf32>
    %47 = vector.extract_strided_slice %45 {offsets = [0, 512], sizes = [32, 512], strides = [1, 1]} : vector<32x1024xf32> to vector<32x512xf32>
    %cst_25 = arith.constant 5.000000e-01 : f32
    %48 = vector.broadcast %cst_25 : f32 to vector<32x512xf32>
    %49 = arith.mulf %48, %46 : vector<32x512xf32>
    %50 = math.tanh %49 : vector<32x512xf32>
    %cst_26 = arith.constant 1.000000e+00 : f32
    %51 = vector.broadcast %cst_26 : f32 to vector<32x512xf32>
    %52 = arith.addf %50, %51 : vector<32x512xf32>
    %cst_27 = arith.constant 5.000000e-01 : f32
    %53 = vector.broadcast %cst_27 : f32 to vector<32x512xf32>
    %54 = arith.mulf %53, %52 : vector<32x512xf32>
    %55 = arith.mulf %46, %54 : vector<32x512xf32>
    %56 = arith.truncf %55 : vector<32x512xf32> to vector<32x512xbf16>
    %57 = math.tanh %47 : vector<32x512xf32>
    %58 = arith.truncf %57 : vector<32x512xf32> to vector<32x512xbf16>
    %c0_28 = arith.constant 0 : index
    %c0_29 = arith.constant 0 : index
    %59 = vector.load %arg6[%c0_28, %c0_29] : memref<1024x128xbf16, #tpu.memory_space<vmem>>, vector<512x128xbf16>
    %cst_30 = arith.constant dense<0.000000e+00> : vector<32x128xf32>
    %60 = tpu.matmul %56, %59, %cst_30 {dimension_numbers = #tpu.dot_dimension_numbers<[1], [0], [0], [1], [0, 0, 1, 1], [], []>} : vector<32x512xbf16>, vector<512x128xbf16>, vector<32x128xf32> -> vector<32x128xf32>
    %c512_31 = arith.constant 512 : index
    %c0_32 = arith.constant 0 : index
    %61 = vector.load %arg6[%c512_31, %c0_32] : memref<1024x128xbf16, #tpu.memory_space<vmem>>, vector<512x128xbf16>
    %cst_33 = arith.constant dense<0.000000e+00> : vector<32x128xf32>
    %62 = tpu.matmul %58, %61, %cst_33 {dimension_numbers = #tpu.dot_dimension_numbers<[1], [0], [0], [1], [0, 0, 1, 1], [], []>} : vector<32x512xbf16>, vector<512x128xbf16>, vector<32x128xf32> -> vector<32x128xf32>
    %63 = arith.addf %60, %62 : vector<32x128xf32>
    %64 = arith.truncf %63 : vector<32x128xf32> to vector<32x128xbf16>
    %c0_34 = arith.constant 0 : index
    %c0_35 = arith.constant 0 : index
    %65 = vector.load %arg7[%c0_34, %c0_35] : memref<128x1024xbf16, #tpu.memory_space<vmem>>, vector<128x1024xbf16>
    %cst_36 = arith.constant dense<0.000000e+00> : vector<32x1024xf32>
    %66 = tpu.matmul %64, %65, %cst_36 {dimension_numbers = #tpu.dot_dimension_numbers<[1], [0], [0], [1], [0, 0, 1, 1], [], []>} : vector<32x128xbf16>, vector<128x1024xbf16>, vector<32x1024xf32> -> vector<32x1024xf32>
    %67 = vector.extract_strided_slice %66 {offsets = [0, 0], sizes = [32, 128], strides = [1, 1]} : vector<32x1024xf32> to vector<32x128xf32>
    %68 = arith.mulf %67, %63 : vector<32x128xf32>
    %69 = arith.truncf %68 : vector<32x128xf32> to vector<32x128xbf16>
    %70 = vector.extract_strided_slice %66 {offsets = [0, 128], sizes = [32, 128], strides = [1, 1]} : vector<32x1024xf32> to vector<32x128xf32>
    %71 = arith.mulf %70, %63 : vector<32x128xf32>
    %72 = arith.truncf %71 : vector<32x128xf32> to vector<32x128xbf16>
    %73 = vector.extract_strided_slice %66 {offsets = [0, 256], sizes = [32, 128], strides = [1, 1]} : vector<32x1024xf32> to vector<32x128xf32>
    %74 = arith.mulf %73, %63 : vector<32x128xf32>
    %75 = arith.truncf %74 : vector<32x128xf32> to vector<32x128xbf16>
    %76 = vector.extract_strided_slice %66 {offsets = [0, 384], sizes = [32, 128], strides = [1, 1]} : vector<32x1024xf32> to vector<32x128xf32>
    %77 = arith.mulf %76, %63 : vector<32x128xf32>
    %78 = arith.truncf %77 : vector<32x128xf32> to vector<32x128xbf16>
    %79 = vector.extract_strided_slice %66 {offsets = [0, 512], sizes = [32, 128], strides = [1, 1]} : vector<32x1024xf32> to vector<32x128xf32>
    %80 = arith.mulf %79, %63 : vector<32x128xf32>
    %81 = arith.truncf %80 : vector<32x128xf32> to vector<32x128xbf16>
    %82 = vector.extract_strided_slice %66 {offsets = [0, 640], sizes = [32, 128], strides = [1, 1]} : vector<32x1024xf32> to vector<32x128xf32>
    %83 = arith.mulf %82, %63 : vector<32x128xf32>
    %84 = arith.truncf %83 : vector<32x128xf32> to vector<32x128xbf16>
    %85 = vector.extract_strided_slice %66 {offsets = [0, 768], sizes = [32, 128], strides = [1, 1]} : vector<32x1024xf32> to vector<32x128xf32>
    %86 = arith.mulf %85, %63 : vector<32x128xf32>
    %87 = arith.truncf %86 : vector<32x128xf32> to vector<32x128xbf16>
    %88 = vector.extract_strided_slice %66 {offsets = [0, 896], sizes = [32, 128], strides = [1, 1]} : vector<32x1024xf32> to vector<32x128xf32>
    %89 = arith.mulf %88, %63 : vector<32x128xf32>
    %90 = arith.truncf %89 : vector<32x128xf32> to vector<32x128xbf16>
    %91 = tpu.concatenate %69, %72, %75, %78, %81, %84, %87, %90 in 1 : vector<32x128xbf16>, vector<32x128xbf16>, vector<32x128xbf16>, vector<32x128xbf16>, vector<32x128xbf16>, vector<32x128xbf16>, vector<32x128xbf16>, vector<32x128xbf16> -> vector<32x1024xbf16>
    %c0_37 = arith.constant 0 : index
    %c0_38 = arith.constant 0 : index
    %92 = vector.load %arg8[%c0_37, %c0_38] : memref<1024x128xbf16, #tpu.memory_space<vmem>>, vector<1024x128xbf16>
    %cst_39 = arith.constant dense<0.000000e+00> : vector<32x128xf32>
    %93 = tpu.matmul %91, %92, %cst_39 {dimension_numbers = #tpu.dot_dimension_numbers<[1], [0], [0], [1], [0, 0, 1, 1], [], []>} : vector<32x1024xbf16>, vector<1024x128xbf16>, vector<32x128xf32> -> vector<32x128xf32>
    %c0_40 = arith.constant 0 : index
    %c0_41 = arith.constant 0 : index
    %94 = vector.load %arg9[%c0_40, %c0_41] : memref<32x128xf32, #tpu.memory_space<vmem>>, vector<32x128xf32>
    tpu.vector_store %arg9[%c0_40, %c0_41], %93 {strides = array<i32>} : memref<32x128xf32, #tpu.memory_space<vmem>>, vector<32x128xf32>,
    return
  }
  func.func @transform_0(%arg0: i32) -> (i32, i32) {
    %c0_i32 = arith.constant 0 : i32
    %c0_i32_0 = arith.constant 0 : i32
    return %arg0, %c0_i32 : i32, i32
  }
  func.func @transform_1(%arg0: i32) -> (i32, i32) {
    %c0_i32 = arith.constant 0 : i32
    %c0_i32_0 = arith.constant 0 : i32
    %c0_i32_1 = arith.constant 0 : i32
    return %c0_i32, %c0_i32_0 : i32, i32
  }
  func.func @transform_2(%arg0: i32) -> (i32, i32) {
    %c0_i32 = arith.constant 0 : i32
    %c0_i32_0 = arith.constant 0 : i32
    %c0_i32_1 = arith.constant 0 : i32
    return %c0_i32, %c0_i32_0 : i32, i32
  }
  func.func @transform_3(%arg0: i32) -> (i32, i32) {
    %c0_i32 = arith.constant 0 : i32
    %c0_i32_0 = arith.constant 0 : i32
    %c0_i32_1 = arith.constant 0 : i32
    return %c0_i32, %c0_i32_0 : i32, i32
  }
  func.func @transform_4(%arg0: i32) -> (i32, i32) {
    %c0_i32 = arith.constant 0 : i32
    %c0_i32_0 = arith.constant 0 : i32
    %c0_i32_1 = arith.constant 0 : i32
    return %c0_i32, %c0_i32_0 : i32, i32
  }
  func.func @transform_5(%arg0: i32) -> (i32, i32) {
    %c0_i32 = arith.constant 0 : i32
    %c0_i32_0 = arith.constant 0 : i32
    %c0_i32_1 = arith.constant 0 : i32
    return %c0_i32, %c0_i32_0 : i32, i32
  }
  func.func @transform_6(%arg0: i32) -> (i32, i32) {
    %c0_i32 = arith.constant 0 : i32
    %c0_i32_0 = arith.constant 0 : i32
    %c0_i32_1 = arith.constant 0 : i32
    return %c0_i32, %c0_i32_0 : i32, i32
  }
  func.func @transform_7(%arg0: i32) -> (i32, i32) {
    %c0_i32 = arith.constant 0 : i32
    %c0_i32_0 = arith.constant 0 : i32
    %c0_i32_1 = arith.constant 0 : i32
    return %c0_i32, %c0_i32_0 : i32, i32
  }
  func.func @transform_8(%arg0: i32) -> (i32, i32) {
    %c0_i32 = arith.constant 0 : i32
    %c0_i32_0 = arith.constant 0 : i32
    return %arg0, %c0_i32 : i32, i32
  }
}

</mosaic_0001>

<llo_original>
// kernel: tpu_custom_call.1
$region0: #{tpu_custom_call.1}
  #allocation0 [shape = 'u32[]', space=smem, size = 0x4, offset = 0x4, fixed_abs, tag = 'smem constant byte address 0x4 - core index']
  #allocation1 [shape = 'u32[144,128]{1,0:T(1,128)}', space=vmem, size = 0x12000, scoped, tag = 'internal scratch']
  %s0 = inlined_call_operand.vmem [shape: f32[32,4], index: 0, kind: input, shape index: {}]
  %s1 = inlined_call_operand.vmem [shape: f32[4,128], index: 1, kind: input, shape index: {}]
  %s2 = inlined_call_operand.hbm [shape: bf16[128,1024], index: 2, kind: input, shape index: {}]
  %s3 = inlined_call_operand.hbm [shape: bf16[1024,128], index: 3, kind: input, shape index: {}]
  %s4 = inlined_call_operand.hbm [shape: bf16[1024,128], index: 4, kind: input, shape index: {}]
  %s5 = inlined_call_operand.hbm [shape: bf16[1024,128], index: 5, kind: input, shape index: {}]
  %s6 = inlined_call_operand.hbm [shape: bf16[128,1024], index: 6, kind: input, shape index: {}]
  %s7 = inlined_call_operand.hbm [shape: bf16[1024,128], index: 7, kind: input, shape index: {}]
  %s8 = inlined_call_operand.hbm [shape: f32[32,128], index: 8, kind: output, shape index: {}]
  %s9 = sld [smem:[#allocation0]]
  $region66: #{tpu_custom_call.1} parent=0
    _
  %s11 = ssub.s32 1, %s9
  %s12 = scalar_select 0, %s11, %s9
  $region1: #{tpu_custom_call.1} parent=0
    #allocation2 [shape = 'u8[262144]{0}', space=vmem, size = 0x40000, scoped, tag = 'input window, operand 2, single buffered']
    #allocation3 [shape = 's32[1]{0}', space=sflag, size = 0x4, scoped, tag = 'scoped memory for tpu_custom_call.1']
    #allocation4 [shape = 's32[1]{0}', space=sflag, size = 0x4, scoped, tag = 'scoped memory for tpu_custom_call.1']
    #allocation5 [shape = 'u8[262144]{0}', space=vmem, size = 0x40000, scoped, tag = 'input window, operand 3, single buffered']
    #allocation6 [shape = 's32[1]{0}', space=sflag, size = 0x4, scoped, tag = 'scoped memory for tpu_custom_call.1']
    #allocation7 [shape = 'u8[262144]{0}', space=vmem, size = 0x40000, scoped, tag = 'input window, operand 4, single buffered']
    #allocation8 [shape = 'u8[262144]{0}', space=vmem, size = 0x40000, scoped, tag = 'input window, operand 5, single buffered']
    #allocation9 [shape = 's32[1]{0}', space=sflag, size = 0x4, scoped, tag = 'scoped memory for tpu_custom_call.1']
    #allocation10 [shape = 'u8[262144]{0}', space=vmem, size = 0x40000, scoped, tag = 'input window, operand 6, single buffered']
    #allocation11 [shape = 'u8[262144]{0}', space=vmem, size = 0x40000, scoped, tag = 'input window, operand 7, single buffered']
    #allocation12 [shape = 's32[1]{0}', space=sflag, size = 0x4, scoped, tag = 'scoped memory for tpu_custom_call.1']
    #allocation13 [shape = 'u8[16384]{0}', space=vmem, size = 0x4000, scoped, tag = 'output window, operand 0, single buffered']
    %13 = vsyncpa [#allocation3], 0
    %14 = vsyncpa [#allocation6], 0
    %15 = vsyncpa [#allocation9], 0
    %16 = vsyncpa [#allocation12], 0
    %17 = vsyncpa [#allocation4], 0
    // Predicated region
    $region2: #{tpu_custom_call.1} parent=1 // pred_check
      _
    $region3: #{tpu_custom_call.1} parent=1 // pred_check_branch
      %19 = sbr.rel (0) target = $region5
    $region4: #{tpu_custom_call.1} parent=1 // pred_region
      _
    $region5: #{tpu_custom_call.1} parent=1 // pred_fallthru
      _
    // Predicated region
    $region6: #{tpu_custom_call.1} parent=1 // pred_check
      _
    $region7: #{tpu_custom_call.1} parent=1 // pred_check_branch
      %21 = sbr.rel (0) target = $region9
    $region8: #{tpu_custom_call.1} parent=1 // pred_region
      _
    $region9: #{tpu_custom_call.1} parent=1 // pred_fallthru
      _
    // Predicated region
    $region10: #{tpu_custom_call.1} parent=1 // pred_check
      _
    $region11: #{tpu_custom_call.1} parent=1 // pred_check_branch
      %23 = sbr.rel (0) target = $region13
    $region12: #{tpu_custom_call.1} parent=1 // pred_region
      %s25 = ssub.s32 8192, 8192
      %26 = vsyncadd [#allocation3], %s25
      %s27 = sshll.u32 [#allocation2], 4
      %s28 = int_to_ptr.vmem [resolvable:$true] %s27
      %33 = dma.hbm_to_vmem [thread:$0]  %s2, 8192, %s28, [#allocation3], 512, 512, 32
    $region13: #{tpu_custom_call.1} parent=1 // pred_fallthru
      _
    // Predicated region
    $region14: #{tpu_custom_call.1} parent=1 // pred_check
      _
    $region15: #{tpu_custom_call.1} parent=1 // pred_check_branch
      %35 = sbr.rel (0) target = $region17
    $region16: #{tpu_custom_call.1} parent=1 // pred_region
      %s37 = ssub.s32 8192, 8192
      %38 = vsyncadd [#allocation6], %s37
      %s39 = sshll.u32 [#allocation5], 4
      %s40 = int_to_ptr.vmem [resolvable:$true] %s39
      %45 = dma.hbm_to_vmem [thread:$0]  %s3, 8192, %s40, [#allocation6], 64, 64, 4
    $region17: #{tpu_custom_call.1} parent=1 // pred_fallthru
      _
    // Predicated region
    $region18: #{tpu_custom_call.1} parent=1 // pred_check
      _
    $region19: #{tpu_custom_call.1} parent=1 // pred_check_branch
      %47 = sbr.rel (0) target = $region21
    $region20: #{tpu_custom_call.1} parent=1 // pred_region
      %s49 = ssub.s32 8192, 8192
      %50 = vsyncadd [#allocation6], %s49
      %s51 = sshll.u32 [#allocation7], 4
      %s52 = int_to_ptr.vmem [resolvable:$true] %s51
      %57 = dma.hbm_to_vmem [thread:$0]  %s4, 8192, %s52, [#allocation6], 64, 64, 4
    $region21: #{tpu_custom_call.1} parent=1 // pred_fallthru
      _
    // Predicated region
    $region22: #{tpu_custom_call.1} parent=1 // pred_check
      _
    $region23: #{tpu_custom_call.1} parent=1 // pred_check_branch
      %59 = sbr.rel (0) target = $region25
    $region24: #{tpu_custom_call.1} parent=1 // pred_region
      %s61 = ssub.s32 8192, 8192
      %62 = vsyncadd [#allocation9], %s61
      %s63 = sshll.u32 [#allocation8], 4
      %s64 = int_to_ptr.vmem [resolvable:$true] %s63
      %69 = dma.hbm_to_vmem [thread:$0]  %s5, 8192, %s64, [#allocation9], 64, 64, 4
    $region25: #{tpu_custom_call.1} parent=1 // pred_fallthru
      _
    // Predicated region
    $region26: #{tpu_custom_call.1} parent=1 // pred_check
      _
    $region27: #{tpu_custom_call.1} parent=1 // pred_check_branch
      %71 = sbr.rel (0) target = $region29
    $region28: #{tpu_custom_call.1} parent=1 // pred_region
      %s73 = ssub.s32 8192, 8192
      %74 = vsyncadd [#allocation9], %s73
      %s75 = sshll.u32 [#allocation10], 4
      %s76 = int_to_ptr.vmem [resolvable:$true] %s75
      %81 = dma.hbm_to_vmem [thread:$0]  %s6, 8192, %s76, [#allocation9], 512, 512, 32
    $region29: #{tpu_custom_call.1} parent=1 // pred_fallthru
      _
    // Predicated region
    $region30: #{tpu_custom_call.1} parent=1 // pred_check
      _
    $region31: #{tpu_custom_call.1} parent=1 // pred_check_branch
      %83 = sbr.rel (0) target = $region33
    $region32: #{tpu_custom_call.1} parent=1 // pred_region
      %s85 = ssub.s32 8192, 8192
      %86 = vsyncadd [#allocation12], %s85
      %s87 = sshll.u32 [#allocation11], 4
      %s88 = int_to_ptr.vmem [resolvable:$true] %s87
      %93 = dma.hbm_to_vmem [thread:$0]  %s7, 8192, %s88, [#allocation12], 64, 64, 4
    $region33: #{tpu_custom_call.1} parent=1 // pred_fallthru
      _
    // Predicated region
    $region34: #{tpu_custom_call.1} parent=1 // pred_check
      _
    $region35: #{tpu_custom_call.1} parent=1 // pred_check_branch
      %95 = sbr.rel (0) target = $region37
    $region36: #{tpu_custom_call.1} parent=1 // pred_region
      %96 = dma.done [#allocation3], 8192
    $region37: #{tpu_custom_call.1} parent=1 // pred_fallthru
      _
    // Predicated region
    $region38: #{tpu_custom_call.1} parent=1 // pred_check
      _
    $region39: #{tpu_custom_call.1} parent=1 // pred_check_branch
      %98 = sbr.rel (0) target = $region41
    $region40: #{tpu_custom_call.1} parent=1 // pred_region
      %99 = dma.done [#allocation6], 8192
    $region41: #{tpu_custom_call.1} parent=1 // pred_fallthru
      _
    // Predicated region
    $region42: #{tpu_custom_call.1} parent=1 // pred_check
      _
    $region43: #{tpu_custom_call.1} parent=1 // pred_check_branch
      %101 = sbr.rel (0) target = $region45
    $region44: #{tpu_custom_call.1} parent=1 // pred_region
      %102 = dma.done [#allocation6], 8192
    $region45: #{tpu_custom_call.1} parent=1 // pred_fallthru
      _
    // Predicated region
    $region46: #{tpu_custom_call.1} parent=1 // pred_check
      _
    $region47: #{tpu_custom_call.1} parent=1 // pred_check_branch
      %104 = sbr.rel (0) target = $region49
    $region48: #{tpu_custom_call.1} parent=1 // pred_region
      %105 = dma.done [#allocation9], 8192
    $region49: #{tpu_custom_call.1} parent=1 // pred_fallthru
      _
    // Predicated region
    $region50: #{tpu_custom_call.1} parent=1 // pred_check
      _
    $region51: #{tpu_custom_call.1} parent=1 // pred_check_branch
      %107 = sbr.rel (0) target = $region53
    $region52: #{tpu_custom_call.1} parent=1 // pred_region
      %108 = dma.done [#allocation9], 8192
    $region53: #{tpu_custom_call.1} parent=1 // pred_fallthru
      _
    // Predicated region
    $region54: #{tpu_custom_call.1} parent=1 // pred_check
      _
    $region55: #{tpu_custom_call.1} parent=1 // pred_check_branch
      %110 = sbr.rel (0) target = $region57
    $region56: #{tpu_custom_call.1} parent=1 // pred_region
      %111 = dma.done [#allocation12], 8192
    $region57: #{tpu_custom_call.1} parent=1 // pred_fallthru
      _
    %v113 = vld [vmem:[#allocation2] sm:$0xff]
    %v114 = vld [vmem:[#allocation2 + $0x8] sm:$0xff]
    %v115 = vld [vmem:[#allocation2 + $0x10] sm:$0xff]
    %v116 = vld [vmem:[#allocation2 + $0x18] sm:$0xff]
    %v117 = vld [vmem:[#allocation2 + $0x20] sm:$0xff]
    %v118 = vld [vmem:[#allocation2 + $0x28] sm:$0xff]
    %v119 = vld [vmem:[#allocation2 + $0x30] sm:$0xff]
    %v120 = vld [vmem:[#allocation2 + $0x38] sm:$0xff]
    %v121 = vld [vmem:[#allocation2 + $0x40] sm:$0xff]
    %v122 = vld [vmem:[#allocation2 + $0x48] sm:$0xff]
    %v123 = vld [vmem:[#allocation2 + $0x50] sm:$0xff]
    %v124 = vld [vmem:[#allocation2 + $0x58] sm:$0xff]
    %v125 = vld [vmem:[#allocation2 + $0x60] sm:$0xff]
    %v126 = vld [vmem:[#allocation2 + $0x68] sm:$0xff]
    %v127 = vld [vmem:[#allocation2 + $0x70] sm:$0xff]
    %v128 = vld [vmem:[#allocation2 + $0x78] sm:$0xff]
    %v129 = vld [vmem:[#allocation2 + $0x80] sm:$0xff]
    %v130 = vld [vmem:[#allocation2 + $0x88] sm:$0xff]
    %v131 = vld [vmem:[#allocation2 + $0x90] sm:$0xff]
    %v132 = vld [vmem:[#allocation2 + $0x98] sm:$0xff]
    %v133 = vld [vmem:[#allocation2 + $0xa0] sm:$0xff]
    %v134 = vld [vmem:[#allocation2 + $0xa8] sm:$0xff]
    %v135 = vld [vmem:[#allocation2 + $0xb0] sm:$0xff]
    %v136 = vld [vmem:[#allocation2 + $0xb8] sm:$0xff]
    %v137 = vld [vmem:[#allocation2 + $0xc0] sm:$0xff]
    %v138 = vld [vmem:[#allocation2 + $0xc8] sm:$0xff]
    %v139 = vld [vmem:[#allocation2 + $0xd0] sm:$0xff]
    %v140 = vld [vmem:[#allocation2 + $0xd8] sm:$0xff]
    %v141 = vld [vmem:[#allocation2 + $0xe0] sm:$0xff]
    %v142 = vld [vmem:[#allocation2 + $0xe8] sm:$0xff]
    %v143 = vld [vmem:[#allocation2 + $0xf0] sm:$0xff]
    %v144 = vld [vmem:[#allocation2 + $0xf8] sm:$0xff]
    %v145 = vld [vmem:[#allocation2 + $0x100] sm:$0xff]
    %v146 = vld [vmem:[#allocation2 + $0x108] sm:$0xff]
    %v147 = vld [vmem:[#allocation2 + $0x110] sm:$0xff]
    %v148 = vld [vmem:[#allocation2 + $0x118] sm:$0xff]
    %v149 = vld [vmem:[#allocation2 + $0x120] sm:$0xff]
    %v150 = vld [vmem:[#allocation2 + $0x128] sm:$0xff]
    %v151 = vld [vmem:[#allocation2 + $0x130] sm:$0xff]
    %v152 = vld [vmem:[#allocation2 + $0x138] sm:$0xff]
    %v153 = vld [vmem:[#allocation2 + $0x140] sm:$0xff]
    %v154 = vld [vmem:[#allocation2 + $0x148] sm:$0xff]
    %v155 = vld [vmem:[#allocation2 + $0x150] sm:$0xff]
    %v156 = vld [vmem:[#allocation2 + $0x158] sm:$0xff]
    %v157 = vld [vmem:[#allocation2 + $0x160] sm:$0xff]
    %v158 = vld [vmem:[#allocation2 + $0x168] sm:$0xff]
    %v159 = vld [vmem:[#allocation2 + $0x170] sm:$0xff]
    %v160 = vld [vmem:[#allocation2 + $0x178] sm:$0xff]
    %v161 = vld [vmem:[#allocation2 + $0x180] sm:$0xff]
    %v162 = vld [vmem:[#allocation2 + $0x188] sm:$0xff]
    %v163 = vld [vmem:[#allocation2 + $0x190] sm:$0xff]
    %v164 = vld [vmem:[#allocation2 + $0x198] sm:$0xff]
    %v165 = vld [vmem:[#allocation2 + $0x1a0] sm:$0xff]
    %v166 = vld [vmem:[#allocation2 + $0x1a8] sm:$0xff]
    %v167 = vld [vmem:[#allocation2 + $0x1b0] sm:$0xff]
    %v168 = vld [vmem:[#allocation2 + $0x1b8] sm:$0xff]
    %v169 = vld [vmem:[#allocation2 + $0x1c0] sm:$0xff]
    %v170 = vld [vmem:[#allocation2 + $0x1c8] sm:$0xff]
    %v171 = vld [vmem:[#allocation2 + $0x1d0] sm:$0xff]
    %v172 = vld [vmem:[#allocation2 + $0x1d8] sm:$0xff]
    %v173 = vld [vmem:[#allocation2 + $0x1e0] sm:$0xff]
    %v174 = vld [vmem:[#allocation2 + $0x1e8] sm:$0xff]
    %v175 = vld [vmem:[#allocation2 + $0x1f0] sm:$0xff]
    %v176 = vld [vmem:[#allocation2 + $0x1f8] sm:$0xff]
    %v177 = vld [vmem:[%s0] sm:$0xff]
    %v178 = vld [vmem:[%s0 + $0x8] sm:$0xff]
    %v179 = vld [vmem:[%s0 + $0x10] sm:$0xff]
    %v180 = vld [vmem:[%s0 + $0x18] sm:$0xff]
    %v181 = vld [vmem:[%s1] sm:$0xf]
    %vm182 = vcmask 31744
    %v184 = vsel %vm182, %v177, 0
    %v187 = vsel %vm182, %v178, 0
    %v190 = vsel %vm182, %v179, 0
    %v193 = vsel %vm182, %v180, 0
    %vm195 = vcmask 1043456
    %v197 = vsel %vm195, %v181, 0
    %199 = vmatprep.subr.mxu0 0.0
    %200 = vmatpush1.msra.mxu0 0.0
    %201 = vmatprep.subr.mxu0 0.0
    %202 = vmatpush1.msra.mxu0 0.0
    %203 = vmatprep.subr.mxu0 0.0
    %204 = vmatpush1.msra.mxu0 0.0
    %205 = vmatprep.subr.mxu0 0.0
    %206 = vmatpush1.msra.mxu0 0.0
    %207 = vmatprep.subr.mxu0 0.0
    %208 = vmatpush1.msra.mxu0 0.0
    %209 = vmatprep.subr.mxu0 0.0
    %210 = vmatpush1.msra.mxu0 0.0
    %211 = vmatprep.subr.mxu0 0.0
    %212 = vmatpush1.msra.mxu0 0.0
    %213 = vmatprep.subr.mxu0 0.0
    %214 = vmatpush1.msra.mxu0 0.0
    %215 = vmatprep.subr.mxu0 0.0
    %216 = vmatpush1.msra.mxu0 0.0
    %217 = vmatprep.subr.mxu0 0.0
    %218 = vmatpush1.msra.mxu0 0.0
    %219 = vmatprep.subr.mxu0 0.0
    %220 = vmatpush1.msra.mxu0 0.0
    %221 = vmatprep.subr.mxu0 0.0
    %222 = vmatpush1.msra.mxu0 0.0
    %223 = vmatprep.subr.mxu0 0.0
    %224 = vmatpush1.msra.mxu0 0.0
    %225 = vmatprep.subr.mxu0 0.0
    %226 = vmatpush1.msra.mxu0 0.0
    %227 = vmatprep.subr.mxu0 0.0
    %228 = vmatpush1.msra.mxu0 0.0
    %229 = vmatprep.subr.mxu0 0.0
    %230 = vmatpush1.msra.mxu0 %v197
    %231 = vmatprep.subr.mxu0 0.0
    %232 = vmatpush2.msra.mxu0 0.0
    %233 = vmatprep.subr.mxu0 0.0
    %234 = vmatpush2.msra.mxu0 0.0
    %235 = vmatprep.subr.mxu0 0.0
    %236 = vmatpush2.msra.mxu0 0.0
    %237 = vmatprep.subr.mxu0 0.0
    %238 = vmatpush2.msra.mxu0 0.0
    %239 = vmatprep.subr.mxu0 0.0
    %240 = vmatpush2.msra.mxu0 0.0
    %241 = vmatprep.subr.mxu0 0.0
    %242 = vmatpush2.msra.mxu0 0.0
    %243 = vmatprep.subr.mxu0 0.0
    %244 = vmatpush2.msra.mxu0 0.0
    %245 = vmatprep.subr.mxu0 0.0
    %246 = vmatpush2.msra.mxu0 0.0
    %247 = vmatprep.subr.mxu0 0.0
    %248 = vmatpush2.msra.mxu0 0.0
    %249 = vmatprep.subr.mxu0 0.0
    %250 = vmatpush2.msra.mxu0 0.0
    %251 = vmatprep.subr.mxu0 0.0
    %252 = vmatpush2.msra.mxu0 0.0
    %253 = vmatprep.subr.mxu0 0.0
    %254 = vmatpush2.msra.mxu0 0.0
    %255 = vmatprep.subr.mxu0 0.0
    %256 = vmatpush2.msra.mxu0 0.0
    %257 = vmatprep.subr.mxu0 0.0
    %258 = vmatpush2.msra.mxu0 0.0
    %259 = vmatprep.subr.mxu0 0.0
    %260 = vmatpush2.msra.mxu0 0.0
    %261 = vmatprep.subr.mxu0 0.0
    %262 = vmatpush2.msra.mxu0 0.0
    %263 = vmatprep.mubr.f32.mxu0 0.0
    %264 = vmatmul.mubr.f32.gmra.mxu0 %v184
    %v265 = vpop.f32.mrf.mxu0
    %v266 = vadd.f32 0.0, %v265
    %v267 = vpop.f32.mrf.mxu0
    %268 = vmatprep.mubr.f32.mxu0 0.0
    %269 = vmatmul.mubr.f32.gmra.mxu0 %v187
    %v270 = vpop.f32.mrf.mxu0
    %v271 = vadd.f32 0.0, %v270
    %v272 = vpop.f32.mrf.mxu0
    %273 = vmatprep.mubr.f32.mxu0 0.0
    %274 = vmatmul.mubr.f32.gmra.mxu0 %v190
    %v275 = vpop.f32.mrf.mxu0
    %v276 = vadd.f32 0.0, %v275
    %v277 = vpop.f32.mrf.mxu0
    %278 = vmatprep.mubr.f32.mxu0 0.0
    %279 = vmatmul.mubr.f32.gmra.mxu0 %v193
    %v280 = vpop.f32.mrf.mxu0
    %v281 = vadd.f32 0.0, %v280
    %v282 = vpop.f32.mrf.mxu0
    %283 = vdwg.mxu0
    %v284 = vpack.c.bf16 %v271, %v266
    %v285 = vpack.c.bf16 %v281, %v276
    %v350 = vunpack.c.l.b16 %v113
    %v351 = vunpack.c.h.b16 %v113
    %v352 = vunpack.c.l.b16 %v114
    %v353 = vunpack.c.h.b16 %v114
    %v354 = vunpack.c.l.b16 %v115
    %v355 = vunpack.c.h.b16 %v115
    %v356 = vunpack.c.l.b16 %v116
    %v357 = vunpack.c.h.b16 %v116
    %v358 = vunpack.c.l.b16 %v117
    %v359 = vunpack.c.h.b16 %v117
    %v360 = vunpack.c.l.b16 %v118
    %v361 = vunpack.c.h.b16 %v118
    %v362 = vunpack.c.l.b16 %v119
    %v363 = vunpack.c.h.b16 %v119
    %v364 = vunpack.c.l.b16 %v120
    %v365 = vunpack.c.h.b16 %v120
    %v366 = vunpack.c.l.b16 %v121
    %v367 = vunpack.c.h.b16 %v121
    %v368 = vunpack.c.l.b16 %v122
    %v369 = vunpack.c.h.b16 %v122
    %v370 = vunpack.c.l.b16 %v123
    %v371 = vunpack.c.h.b16 %v123
    %v372 = vunpack.c.l.b16 %v124
    %v373 = vunpack.c.h.b16 %v124
    %v374 = vunpack.c.l.b16 %v125
    %v375 = vunpack.c.h.b16 %v125
    %v376 = vunpack.c.l.b16 %v126
    %v377 = vunpack.c.h.b16 %v126
    %v378 = vunpack.c.l.b16 %v127
    %v379 = vunpack.c.h.b16 %v127
    %v380 = vunpack.c.l.b16 %v128
    %v381 = vunpack.c.h.b16 %v128
    %v382 = vunpack.c.l.b16 %v129
    %v383 = vunpack.c.h.b16 %v129
    %v384 = vunpack.c.l.b16 %v130
    %v385 = vunpack.c.h.b16 %v130
    %v386 = vunpack.c.l.b16 %v131
    %v387 = vunpack.c.h.b16 %v131
    %v388 = vunpack.c.l.b16 %v132
    %v389 = vunpack.c.h.b16 %v132
    %v390 = vunpack.c.l.b16 %v133
    %v391 = vunpack.c.h.b16 %v133
    %v392 = vunpack.c.l.b16 %v134
    %v393 = vunpack.c.h.b16 %v134
    %v394 = vunpack.c.l.b16 %v135
    %v395 = vunpack.c.h.b16 %v135
    %v396 = vunpack.c.l.b16 %v136
    %v397 = vunpack.c.h.b16 %v136
    %v398 = vunpack.c.l.b16 %v137
    %v399 = vunpack.c.h.b16 %v137
    %v400 = vunpack.c.l.b16 %v138
    %v401 = vunpack.c.h.b16 %v138
    %v402 = vunpack.c.l.b16 %v139
    %v403 = vunpack.c.h.b16 %v139
    %v404 = vunpack.c.l.b16 %v140
    %v405 = vunpack.c.h.b16 %v140
    %v406 = vunpack.c.l.b16 %v141
    %v407 = vunpack.c.h.b16 %v141
    %v408 = vunpack.c.l.b16 %v142
    %v409 = vunpack.c.h.b16 %v142
    %v410 = vunpack.c.l.b16 %v143
    %v411 = vunpack.c.h.b16 %v143
    %v412 = vunpack.c.l.b16 %v144
    %v413 = vunpack.c.h.b16 %v144
    %v414 = vunpack.c.l.b16 %v145
    %v415 = vunpack.c.h.b16 %v145
    %v416 = vunpack.c.l.b16 %v146
    %v417 = vunpack.c.h.b16 %v146
    %v418 = vunpack.c.l.b16 %v147
    %v419 = vunpack.c.h.b16 %v147
    %v420 = vunpack.c.l.b16 %v148
    %v421 = vunpack.c.h.b16 %v148
    %v422 = vunpack.c.l.b16 %v149
    %v423 = vunpack.c.h.b16 %v149
    %v424 = vunpack.c.l.b16 %v150
    %v425 = vunpack.c.h.b16 %v150
    %v426 = vunpack.c.l.b16 %v151
    %v427 = vunpack.c.h.b16 %v151
    %v428 = vunpack.c.l.b16 %v152
    %v429 = vunpack.c.h.b16 %v152
    %v430 = vunpack.c.l.b16 %v153
    %v431 = vunpack.c.h.b16 %v153
    %v432 = vunpack.c.l.b16 %v154
    %v433 = vunpack.c.h.b16 %v154
    %v434 = vunpack.c.l.b16 %v155
    %v435 = vunpack.c.h.b16 %v155
    %v436 = vunpack.c.l.b16 %v156
    %v437 = vunpack.c.h.b16 %v156
    %v438 = vunpack.c.l.b16 %v157
    %v439 = vunpack.c.h.b16 %v157
    %v440 = vunpack.c.l.b16 %v158
    %v441 = vunpack.c.h.b16 %v158
    %v442 = vunpack.c.l.b16 %v159
    %v443 = vunpack.c.h.b16 %v159
    %v444 = vunpack.c.l.b16 %v160
    %v445 = vunpack.c.h.b16 %v160
    %v446 = vunpack.c.l.b16 %v161
    %v447 = vunpack.c.h.b16 %v161
    %v448 = vunpack.c.l.b16 %v162
    %v449 = vunpack.c.h.b16 %v162
    %v450 = vunpack.c.l.b16 %v163
    %v451 = vunpack.c.h.b16 %v163
    %v452 = vunpack.c.l.b16 %v164
    %v453 = vunpack.c.h.b16 %v164
    %v454 = vunpack.c.l.b16 %v165
    %v455 = vunpack.c.h.b16 %v165
    %v456 = vunpack.c.l.b16 %v166
    %v457 = vunpack.c.h.b16 %v166
    %v458 = vunpack.c.l.b16 %v167
    %v459 = vunpack.c.h.b16 %v167
    %v460 = vunpack.c.l.b16 %v168
    %v461 = vunpack.c.h.b16 %v168
    %v462 = vunpack.c.l.b16 %v169
    %v463 = vunpack.c.h.b16 %v169
    %v464 = vunpack.c.l.b16 %v170
    %v465 = vunpack.c.h.b16 %v170
    %v466 = vunpack.c.l.b16 %v171
    %v467 = vunpack.c.h.b16 %v171
    %v468 = vunpack.c.l.b16 %v172
    %v469 = vunpack.c.h.b16 %v172
    %v470 = vunpack.c.l.b16 %v173
    %v471 = vunpack.c.h.b16 %v173
    %v472 = vunpack.c.l.b16 %v174
    %v473 = vunpack.c.h.b16 %v174
    %v474 = vunpack.c.l.b16 %v175
    %v475 = vunpack.c.h.b16 %v175
    %v476 = vunpack.c.l.b16 %v176
    %v477 = vunpack.c.h.b16 %v176
    %v478 = vpack.c.b16 %v358, %v350
    %v479 = vpack.c.b16 %v359, %v351
    %v480 = vpack.c.b16 %v360, %v352
    %v481 = vpack.c.b16 %v361, %v353
    %v482 = vpack.c.b16 %v362, %v354
    %v483 = vpack.c.b16 %v363, %v355
    %v484 = vpack.c.b16 %v364, %v356
    %v485 = vpack.c.b16 %v365, %v357
    %v486 = vpack.c.b16 %v374, %v366
    %v487 = vpack.c.b16 %v375, %v367
    %v488 = vpack.c.b16 %v376, %v368
    %v489 = vpack.c.b16 %v377, %v369
    %v490 = vpack.c.b16 %v378, %v370
    %v491 = vpack.c.b16 %v379, %v371
    %v492 = vpack.c.b16 %v380, %v372
    %v493 = vpack.c.b16 %v381, %v373
    %v494 = vpack.c.b16 %v390, %v382
    %v495 = vpack.c.b16 %v391, %v383
    %v496 = vpack.c.b16 %v392, %v384
    %v497 = vpack.c.b16 %v393, %v385
    %v498 = vpack.c.b16 %v394, %v386
    %v499 = vpack.c.b16 %v395, %v387
    %v500 = vpack.c.b16 %v396, %v388
    %v501 = vpack.c.b16 %v397, %v389
    %v502 = vpack.c.b16 %v406, %v398
    %v503 = vpack.c.b16 %v407, %v399
    %v504 = vpack.c.b16 %v408, %v400
    %v505 = vpack.c.b16 %v409, %v401
    %v506 = vpack.c.b16 %v410, %v402
    %v507 = vpack.c.b16 %v411, %v403
    %v508 = vpack.c.b16 %v412, %v404
    %v509 = vpack.c.b16 %v413, %v405
    %v510 = vpack.c.b16 %v422, %v414
    %v511 = vpack.c.b16 %v423, %v415
    %v512 = vpack.c.b16 %v424, %v416
    %v513 = vpack.c.b16 %v425, %v417
    %v514 = vpack.c.b16 %v426, %v418
    %v515 = vpack.c.b16 %v427, %v419
    %v516 = vpack.c.b16 %v428, %v420
    %v517 = vpack.c.b16 %v429, %v421
    %v518 = vpack.c.b16 %v438, %v430
    %v519 = vpack.c.b16 %v439, %v431
    %v520 = vpack.c.b16 %v440, %v432
    %v521 = vpack.c.b16 %v441, %v433
    %v522 = vpack.c.b16 %v442, %v434
    %v523 = vpack.c.b16 %v443, %v435
    %v524 = vpack.c.b16 %v444, %v436
    %v525 = vpack.c.b16 %v445, %v437
    %v526 = vpack.c.b16 %v454, %v446
    %v527 = vpack.c.b16 %v455, %v447
    %v528 = vpack.c.b16 %v456, %v448
    %v529 = vpack.c.b16 %v457, %v449
    %v530 = vpack.c.b16 %v458, %v450
    %v531 = vpack.c.b16 %v459, %v451
    %v532 = vpack.c.b16 %v460, %v452
    %v533 = vpack.c.b16 %v461, %v453
    %v534 = vpack.c.b16 %v470, %v462
    %v535 = vpack.c.b16 %v471, %v463
    %v536 = vpack.c.b16 %v472, %v464
    %v537 = vpack.c.b16 %v473, %v465
    %v538 = vpack.c.b16 %v474, %v466
    %v539 = vpack.c.b16 %v475, %v467
    %v540 = vpack.c.b16 %v476, %v468
    %v541 = vpack.c.b16 %v477, %v469
    %606 = vmatprep.subr.bf16.mxu0 %v535
    %607 = vmatpush1.bf16.msra.mxu0 %v534
    %608 = vmatprep.subr.bf16.mxu0 %v527
    %609 = vmatpush1.bf16.msra.mxu0 %v526
    %610 = vmatprep.subr.bf16.mxu0 %v519
    %611 = vmatpush1.bf16.msra.mxu0 %v518
    %612 = vmatprep.subr.bf16.mxu0 %v511
    %613 = vmatpush1.bf16.msra.mxu0 %v510
    %614 = vmatprep.subr.bf16.mxu0 %v503
    %615 = vmatpush1.bf16.msra.mxu0 %v502
    %616 = vmatprep.subr.bf16.mxu0 %v495
    %617 = vmatpush1.bf16.msra.mxu0 %v494
    %618 = vmatprep.subr.bf16.mxu0 %v487
    %619 = vmatpush1.bf16.msra.mxu0 %v486
    %620 = vmatprep.subr.bf16.mxu0 %v479
    %621 = vmatpush1.bf16.msra.mxu0 %v478
    %622 = vmatprep.subr.bf16.mxu0 0
    %623 = vmatpush2.bf16.msra.mxu0 0
    %624 = vmatprep.subr.bf16.mxu0 0
    %625 = vmatpush2.bf16.msra.mxu0 0
    %626 = vmatprep.subr.bf16.mxu0 0
    %627 = vmatpush2.bf16.msra.mxu0 0
    %628 = vmatprep.subr.bf16.mxu0 0
    %629 = vmatpush2.bf16.msra.mxu0 0
    %630 = vmatprep.subr.bf16.mxu0 0
    %631 = vmatpush2.bf16.msra.mxu0 0
    %632 = vmatprep.subr.bf16.mxu0 0
    %633 = vmatpush2.bf16.msra.mxu0 0
    %634 = vmatprep.subr.bf16.mxu0 0
    %635 = vmatpush2.bf16.msra.mxu0 0
    %636 = vmatprep.subr.bf16.mxu0 0
    %637 = vmatpush2.bf16.msra.mxu0 0
    %638 = vmatprep.mubr.bf16.mxu0 0
    %639 = vmatmul.mubr.bf16.gmra.mxu0 %v284
    %v640 = vpop.f32.mrf.mxu0
    %v641 = vadd.f32 0.0, %v640
    %v642 = vpop.f32.mrf.mxu0
    %v643 = vadd.f32 0.0, %v642
    %v644 = vpop.f32.mrf.mxu0
    %v645 = vadd.f32 0.0, %v644
    %v646 = vpop.f32.mrf.mxu0
    %v647 = vadd.f32 0.0, %v646
    %648 = vmatprep.mubr.bf16.mxu0 0
    %649 = vmatmul.mubr.bf16.gmra.mxu0 %v285
    %v650 = vpop.f32.mrf.mxu0
    %v651 = vadd.f32 0.0, %v650
    %v652 = vpop.f32.mrf.mxu0
    %v653 = vadd.f32 0.0, %v652
    %v654 = vpop.f32.mrf.mxu0
    %v655 = vadd.f32 0.0, %v654
    %v656 = vpop.f32.mrf.mxu0
    %v657 = vadd.f32 0.0, %v656
    %658 = vdwg.mxu0
    %659 = vmatprep.subr.bf16.mxu0 %v537
    %660 = vmatpush1.bf16.msra.mxu0 %v536
    %661 = vmatprep.subr.bf16.mxu0 %v529
    %662 = vmatpush1.bf16.msra.mxu0 %v528
    %663 = vmatprep.subr.bf16.mxu0 %v521
    %664 = vmatpush1.bf16.msra.mxu0 %v520
    %665 = vmatprep.subr.bf16.mxu0 %v513
    %666 = vmatpush1.bf16.msra.mxu0 %v512
    %667 = vmatprep.subr.bf16.mxu0 %v505
    %668 = vmatpush1.bf16.msra.mxu0 %v504
    %669 = vmatprep.subr.bf16.mxu0 %v497
    %670 = vmatpush1.bf16.msra.mxu0 %v496
    %671 = vmatprep.subr.bf16.mxu0 %v489
    %672 = vmatpush1.bf16.msra.mxu0 %v488
    %673 = vmatprep.subr.bf16.mxu0 %v481
    %674 = vmatpush1.bf16.msra.mxu0 %v480
    %675 = vmatprep.subr.bf16.mxu0 0
    %676 = vmatpush2.bf16.msra.mxu0 0
    %677 = vmatprep.subr.bf16.mxu0 0
    %678 = vmatpush2.bf16.msra.mxu0 0
    %679 = vmatprep.subr.bf16.mxu0 0
    %680 = vmatpush2.bf16.msra.mxu0 0
    %681 = vmatprep.subr.bf16.mxu0 0
    %682 = vmatpush2.bf16.msra.mxu0 0
    %683 = vmatprep.subr.bf16.mxu0 0
    %684 = vmatpush2.bf16.msra.mxu0 0
    %685 = vmatprep.subr.bf16.mxu0 0
    %686 = vmatpush2.bf16.msra.mxu0 0
    %687 = vmatprep.subr.bf16.mxu0 0
    %688 = vmatpush2.bf16.msra.mxu0 0
    %689 = vmatprep.subr.bf16.mxu0 0
    %690 = vmatpush2.bf16.msra.mxu0 0
    %691 = vmatprep.mubr.bf16.mxu0 0
    %692 = vmatmul.mubr.bf16.gmra.mxu0 %v284
    %v693 = vpop.f32.mrf.mxu0
    %v694 = vadd.f32 0.0, %v693
    %v695 = vpop.f32.mrf.mxu0
    %v696 = vadd.f32 0.0, %v695
    %v697 = vpop.f32.mrf.mxu0
    %v698 = vadd.f32 0.0, %v697
    %v699 = vpop.f32.mrf.mxu0
    %v700 = vadd.f32 0.0, %v699
    %701 = vmatprep.mubr.bf16.mxu0 0
    %702 = vmatmul.mubr.bf16.gmra.mxu0 %v285
    %v703 = vpop.f32.mrf.mxu0
    %v704 = vadd.f32 0.0, %v703
    %v705 = vpop.f32.mrf.mxu0
    %v706 = vadd.f32 0.0, %v705
    %v707 = vpop.f32.mrf.mxu0
    %v708 = vadd.f32 0.0, %v707
    %v709 = vpop.f32.mrf.mxu0
    %v710 = vadd.f32 0.0, %v709
    %711 = vdwg.mxu0
    %712 = vmatprep.subr.bf16.mxu0 %v539
    %713 = vmatpush1.bf16.msra.mxu0 %v538
    %714 = vmatprep.subr.bf16.mxu0 %v531
    %715 = vmatpush1.bf16.msra.mxu0 %v530
    %716 = vmatprep.subr.bf16.mxu0 %v523
    %717 = vmatpush1.bf16.msra.mxu0 %v522
    %718 = vmatprep.subr.bf16.mxu0 %v515
    %719 = vmatpush1.bf16.msra.mxu0 %v514
    %720 = vmatprep.subr.bf16.mxu0 %v507
    %721 = vmatpush1.bf16.msra.mxu0 %v506
    %722 = vmatprep.subr.bf16.mxu0 %v499
    %723 = vmatpush1.bf16.msra.mxu0 %v498
    %724 = vmatprep.subr.bf16.mxu0 %v491
    %725 = vmatpush1.bf16.msra.mxu0 %v490
    %726 = vmatprep.subr.bf16.mxu0 %v483
    %727 = vmatpush1.bf16.msra.mxu0 %v482
    %728 = vmatprep.subr.bf16.mxu0 0
    %729 = vmatpush2.bf16.msra.mxu0 0
    %730 = vmatprep.subr.bf16.mxu0 0
    %731 = vmatpush2.bf16.msra.mxu0 0
    %732 = vmatprep.subr.bf16.mxu0 0
    %733 = vmatpush2.bf16.msra.mxu0 0
    %734 = vmatprep.subr.bf16.mxu0 0
    %735 = vmatpush2.bf16.msra.mxu0 0
    %736 = vmatprep.subr.bf16.mxu0 0
    %737 = vmatpush2.bf16.msra.mxu0 0
    %738 = vmatprep.subr.bf16.mxu0 0
    %739 = vmatpush2.bf16.msra.mxu0 0
    %740 = vmatprep.subr.bf16.mxu0 0
    %741 = vmatpush2.bf16.msra.mxu0 0
    %742 = vmatprep.subr.bf16.mxu0 0
    %743 = vmatpush2.bf16.msra.mxu0 0
    %744 = vmatprep.mubr.bf16.mxu0 0
    %745 = vmatmul.mubr.bf16.gmra.mxu0 %v284
    %v746 = vpop.f32.mrf.mxu0
    %v747 = vadd.f32 0.0, %v746
    %v748 = vpop.f32.mrf.mxu0
    %v749 = vadd.f32 0.0, %v748
    %v750 = vpop.f32.mrf.mxu0
    %v751 = vadd.f32 0.0, %v750
    %v752 = vpop.f32.mrf.mxu0
    %v753 = vadd.f32 0.0, %v752
    %754 = vmatprep.mubr.bf16.mxu0 0
    %755 = vmatmul.mubr.bf16.gmra.mxu0 %v285
    %v756 = vpop.f32.mrf.mxu0
    %v757 = vadd.f32 0.0, %v756
    %v758 = vpop.f32.mrf.mxu0
    %v759 = vadd.f32 0.0, %v758
    %v760 = vpop.f32.mrf.mxu0
    %v761 = vadd.f32 0.0, %v760
    %v762 = vpop.f32.mrf.mxu0
    %v763 = vadd.f32 0.0, %v762
    %764 = vdwg.mxu0
    %765 = vmatprep.subr.bf16.mxu0 %v541
    %766 = vmatpush1.bf16.msra.mxu0 %v540
    %767 = vmatprep.subr.bf16.mxu0 %v533
    %768 = vmatpush1.bf16.msra.mxu0 %v532
    %769 = vmatprep.subr.bf16.mxu0 %v525
    %770 = vmatpush1.bf16.msra.mxu0 %v524
    %771 = vmatprep.subr.bf16.mxu0 %v517
    %772 = vmatpush1.bf16.msra.mxu0 %v516
    %773 = vmatprep.subr.bf16.mxu0 %v509
    %774 = vmatpush1.bf16.msra.mxu0 %v508
    %775 = vmatprep.subr.bf16.mxu0 %v501
    %776 = vmatpush1.bf16.msra.mxu0 %v500
    %777 = vmatprep.subr.bf16.mxu0 %v493
    %778 = vmatpush1.bf16.msra.mxu0 %v492
    %779 = vmatprep.subr.bf16.mxu0 %v485
    %780 = vmatpush1.bf16.msra.mxu0 %v484
    %781 = vmatprep.subr.bf16.mxu0 0
    %782 = vmatpush2.bf16.msra.mxu0 0
    %783 = vmatprep.subr.bf16.mxu0 0
    %784 = vmatpush2.bf16.msra.mxu0 0
    %785 = vmatprep.subr.bf16.mxu0 0
    %786 = vmatpush2.bf16.msra.mxu0 0
    %787 = vmatprep.subr.bf16.mxu0 0
    %788 = vmatpush2.bf16.msra.mxu0 0
    %789 = vmatprep.subr.bf16.mxu0 0
    %790 = vmatpush2.bf16.msra.mxu0 0
    %791 = vmatprep.subr.bf16.mxu0 0
    %792 = vmatpush2.bf16.msra.mxu0 0
    %793 = vmatprep.subr.bf16.mxu0 0
    %794 = vmatpush2.bf16.msra.mxu0 0
    %795 = vmatprep.subr.bf16.mxu0 0
    %796 = vmatpush2.bf16.msra.mxu0 0
    %797 = vmatprep.mubr.bf16.mxu0 0
    %798 = vmatmul.mubr.bf16.gmra.mxu0 %v284
    %v799 = vpop.f32.mrf.mxu0
    %v800 = vadd.f32 0.0, %v799
    %v801 = vpop.f32.mrf.mxu0
    %v802 = vadd.f32 0.0, %v801
    %v803 = vpop.f32.mrf.mxu0
    %v804 = vadd.f32 0.0, %v803
    %v805 = vpop.f32.mrf.mxu0
    %v806 = vadd.f32 0.0, %v805
    %807 = vmatprep.mubr.bf16.mxu0 0
    %808 = vmatmul.mubr.bf16.gmra.mxu0 %v285
    %v809 = vpop.f32.mrf.mxu0
    %v810 = vadd.f32 0.0, %v809
    %v811 = vpop.f32.mrf.mxu0
    %v812 = vadd.f32 0.0, %v811
    %v813 = vpop.f32.mrf.mxu0
    %v814 = vadd.f32 0.0, %v813
    %v815 = vpop.f32.mrf.mxu0
    %v816 = vadd.f32 0.0, %v815
    %817 = vdwg.mxu0
    %v818 = vmul.f32 %v641, 0.5
    %v819 = vmul.f32 %v643, 0.5
    %v820 = vmul.f32 %v694, 0.5
    %v821 = vmul.f32 %v696, 0.5
    %v822 = vmul.f32 %v645, 0.5
    %v823 = vmul.f32 %v647, 0.5
    %v824 = vmul.f32 %v698, 0.5
    %v825 = vmul.f32 %v700, 0.5
    %v826 = vmul.f32 %v651, 0.5
    %v827 = vmul.f32 %v653, 0.5
    %v828 = vmul.f32 %v704, 0.5
    %v829 = vmul.f32 %v706, 0.5
    %v830 = vmul.f32 %v655, 0.5
    %v831 = vmul.f32 %v657, 0.5
    %v832 = vmul.f32 %v708, 0.5
    %v833 = vmul.f32 %v710, 0.5
    %v834 = vtanh.pop %v818
    %v835 = vtanh.pop %v819
    %v836 = vtanh.pop %v820
    %v837 = vtanh.pop %v821
    %v838 = vtanh.pop %v822
    %v839 = vtanh.pop %v823
    %v840 = vtanh.pop %v824
    %v841 = vtanh.pop %v825
    %v842 = vtanh.pop %v826
    %v843 = vtanh.pop %v827
    %v844 = vtanh.pop %v828
    %v845 = vtanh.pop %v829
    %v846 = vtanh.pop %v830
    %v847 = vtanh.pop %v831
    %v848 = vtanh.pop %v832
    %v849 = vtanh.pop %v833
    %v850 = vadd.f32 %v834, 1.0
    %v851 = vadd.f32 %v835, 1.0
    %v852 = vadd.f32 %v836, 1.0
    %v853 = vadd.f32 %v837, 1.0
    %v854 = vadd.f32 %v838, 1.0
    %v855 = vadd.f32 %v839, 1.0
    %v856 = vadd.f32 %v840, 1.0
    %v857 = vadd.f32 %v841, 1.0
    %v858 = vadd.f32 %v842, 1.0
    %v859 = vadd.f32 %v843, 1.0
    %v860 = vadd.f32 %v844, 1.0
    %v861 = vadd.f32 %v845, 1.0
    %v862 = vadd.f32 %v846, 1.0
    %v863 = vadd.f32 %v847, 1.0
    %v864 = vadd.f32 %v848, 1.0
    %v865 = vadd.f32 %v849, 1.0
    %v866 = vmul.f32 %v850, 0.5
    %v867 = vmul.f32 %v851, 0.5
    %v868 = vmul.f32 %v852, 0.5
    %v869 = vmul.f32 %v853, 0.5
    %v870 = vmul.f32 %v854, 0.5
    %v871 = vmul.f32 %v855, 0.5
    %v872 = vmul.f32 %v856, 0.5
    %v873 = vmul.f32 %v857, 0.5
    %v874 = vmul.f32 %v858, 0.5
    %v875 = vmul.f32 %v859, 0.5
    %v876 = vmul.f32 %v860, 0.5
    %v877 = vmul.f32 %v861, 0.5
    %v878 = vmul.f32 %v862, 0.5
    %v879 = vmul.f32 %v863, 0.5
    %v880 = vmul.f32 %v864, 0.5
    %v881 = vmul.f32 %v865, 0.5
    %v882 = vmul.f32 %v641, %v866
    %v883 = vmul.f32 %v643, %v867
    %v884 = vmul.f32 %v694, %v868
    %v885 = vmul.f32 %v696, %v869
    %v886 = vmul.f32 %v645, %v870
    %v887 = vmul.f32 %v647, %v871
    %v888 = vmul.f32 %v698, %v872
    %v889 = vmul.f32 %v700, %v873
    %v890 = vmul.f32 %v651, %v874
    %v891 = vmul.f32 %v653, %v875
    %v892 = vmul.f32 %v704, %v876
    %v893 = vmul.f32 %v706, %v877
    %v894 = vmul.f32 %v655, %v878
    %v895 = vmul.f32 %v657, %v879
    %v896 = vmul.f32 %v708, %v880
    %v897 = vmul.f32 %v710, %v881
    %v898 = vpack.c.bf16 %v886, %v882
    %v899 = vpack.c.bf16 %v887, %v883
    %v900 = vpack.c.bf16 %v888, %v884
    %v901 = vpack.c.bf16 %v889, %v885
    %v902 = vpack.c.bf16 %v894, %v890
    %v903 = vpack.c.bf16 %v895, %v891
    %v904 = vpack.c.bf16 %v896, %v892
    %v905 = vpack.c.bf16 %v897, %v893
    %v906 = vtanh.pop %v747
    %v907 = vtanh.pop %v749
    %v908 = vtanh.pop %v800
    %v909 = vtanh.pop %v802
    %v910 = vtanh.pop %v751
    %v911 = vtanh.pop %v753
    %v912 = vtanh.pop %v804
    %v913 = vtanh.pop %v806
    %v914 = vtanh.pop %v757
    %v915 = vtanh.pop %v759
    %v916 = vtanh.pop %v810
    %v917 = vtanh.pop %v812
    %v918 = vtanh.pop %v761
    %v919 = vtanh.pop %v763
    %v920 = vtanh.pop %v814
    %v921 = vtanh.pop %v816
    %v922 = vpack.c.bf16 %v910, %v906
    %v923 = vpack.c.bf16 %v911, %v907
    %v924 = vpack.c.bf16 %v912, %v908
    %v925 = vpack.c.bf16 %v913, %v909
    %v926 = vpack.c.bf16 %v918, %v914
    %v927 = vpack.c.bf16 %v919, %v915
    %v928 = vpack.c.bf16 %v920, %v916
    %v929 = vpack.c.bf16 %v921, %v917
    %v930 = vld [vmem:[#allocation5] sm:$0xf]
    %v931 = vld [vmem:[#allocation5 + $0x4] sm:$0xf]
    %v932 = vld [vmem:[#allocation5 + $0x8] sm:$0xf]
    %v933 = vld [vmem:[#allocation5 + $0xc] sm:$0xf]
    %v934 = vld [vmem:[#allocation5 + $0x10] sm:$0xf]
    %v935 = vld [vmem:[#allocation5 + $0x14] sm:$0xf]
    %v936 = vld [vmem:[#allocation5 + $0x18] sm:$0xf]
    %v937 = vld [vmem:[#allocation5 + $0x1c] sm:$0xf]
    %v938 = vld [vmem:[#allocation5 + $0x20] sm:$0xf]
    %v939 = vld [vmem:[#allocation5 + $0x24] sm:$0xf]
    %v940 = vld [vmem:[#allocation5 + $0x28] sm:$0xf]
    %v941 = vld [vmem:[#allocation5 + $0x2c] sm:$0xf]
    %v942 = vld [vmem:[#allocation5 + $0x30] sm:$0xf]
    %v943 = vld [vmem:[#allocation5 + $0x34] sm:$0xf]
    %v944 = vld [vmem:[#allocation5 + $0x38] sm:$0xf]
    %v945 = vld [vmem:[#allocation5 + $0x3c] sm:$0xf]
    %v946 = vld [vmem:[#allocation5 + $0x40] sm:$0xf]
    %v947 = vld [vmem:[#allocation5 + $0x44] sm:$0xf]
    %v948 = vld [vmem:[#allocation5 + $0x48] sm:$0xf]
    %v949 = vld [vmem:[#allocation5 + $0x4c] sm:$0xf]
    %v950 = vld [vmem:[#allocation5 + $0x50] sm:$0xf]
    %v951 = vld [vmem:[#allocation5 + $0x54] sm:$0xf]
    %v952 = vld [vmem:[#allocation5 + $0x58] sm:$0xf]
    %v953 = vld [vmem:[#allocation5 + $0x5c] sm:$0xf]
    %v954 = vld [vmem:[#allocation5 + $0x60] sm:$0xf]
    %v955 = vld [vmem:[#allocation5 + $0x64] sm:$0xf]
    %v956 = vld [vmem:[#allocation5 + $0x68] sm:$0xf]
    %v957 = vld [vmem:[#allocation5 + $0x6c] sm:$0xf]
    %v958 = vld [vmem:[#allocation5 + $0x70] sm:$0xf]
    %v959 = vld [vmem:[#allocation5 + $0x74] sm:$0xf]
    %v960 = vld [vmem:[#allocation5 + $0x78] sm:$0xf]
    %v961 = vld [vmem:[#allocation5 + $0x7c] sm:$0xf]
    %v962 = vld [vmem:[#allocation5 + $0x80] sm:$0xf]
    %v963 = vld [vmem:[#allocation5 + $0x84] sm:$0xf]
    %v964 = vld [vmem:[#allocation5 + $0x88] sm:$0xf]
    %v965 = vld [vmem:[#allocation5 + $0x8c] sm:$0xf]
    %v966 = vld [vmem:[#allocation5 + $0x90] sm:$0xf]
    %v967 = vld [vmem:[#allocation5 + $0x94] sm:$0xf]
    %v968 = vld [vmem:[#allocation5 + $0x98] sm:$0xf]
    %v969 = vld [vmem:[#allocation5 + $0x9c] sm:$0xf]
    %v970 = vld [vmem:[#allocation5 + $0xa0] sm:$0xf]
    %v971 = vld [vmem:[#allocation5 + $0xa4] sm:$0xf]
    %v972 = vld [vmem:[#allocation5 + $0xa8] sm:$0xf]
    %v973 = vld [vmem:[#allocation5 + $0xac] sm:$0xf]
    %v974 = vld [vmem:[#allocation5 + $0xb0] sm:$0xf]
    %v975 = vld [vmem:[#allocation5 + $0xb4] sm:$0xf]
    %v976 = vld [vmem:[#allocation5 + $0xb8] sm:$0xf]
    %v977 = vld [vmem:[#allocation5 + $0xbc] sm:$0xf]
    %v978 = vld [vmem:[#allocation5 + $0xc0] sm:$0xf]
    %v979 = vld [vmem:[#allocation5 + $0xc4] sm:$0xf]
    %v980 = vld [vmem:[#allocation5 + $0xc8] sm:$0xf]
    %v981 = vld [vmem:[#allocation5 + $0xcc] sm:$0xf]
    %v982 = vld [vmem:[#allocation5 + $0xd0] sm:$0xf]
    %v983 = vld [vmem:[#allocation5 + $0xd4] sm:$0xf]
    %v984 = vld [vmem:[#allocation5 + $0xd8] sm:$0xf]
    %v985 = vld [vmem:[#allocation5 + $0xdc] sm:$0xf]
    %v986 = vld [vmem:[#allocation5 + $0xe0] sm:$0xf]
    %v987 = vld [vmem:[#allocation5 + $0xe4] sm:$0xf]
    %v988 = vld [vmem:[#allocation5 + $0xe8] sm:$0xf]
    %v989 = vld [vmem:[#allocation5 + $0xec] sm:$0xf]
    %v990 = vld [vmem:[#allocation5 + $0xf0] sm:$0xf]
    %v991 = vld [vmem:[#allocation5 + $0xf4] sm:$0xf]
    %v992 = vld [vmem:[#allocation5 + $0xf8] sm:$0xf]
    %v993 = vld [vmem:[#allocation5 + $0xfc] sm:$0xf]
    %v994 = vld [vmem:[#allocation5 + $0x100] sm:$0xf]
    %v995 = vld [vmem:[#allocation5 + $0x104] sm:$0xf]
    %v996 = vld [vmem:[#allocation5 + $0x108] sm:$0xf]
    %v997 = vld [vmem:[#allocation5 + $0x10c] sm:$0xf]
    %v998 = vld [vmem:[#allocation5 + $0x110] sm:$0xf]
    %v999 = vld [vmem:[#allocation5 + $0x114] sm:$0xf]
    %v1000 = vld [vmem:[#allocation5 + $0x118] sm:$0xf]
    %v1001 = vld [vmem:[#allocation5 + $0x11c] sm:$0xf]
    %v1002 = vld [vmem:[#allocation5 + $0x120] sm:$0xf]
    %v1003 = vld [vmem:[#allocation5 + $0x124] sm:$0xf]
    %v1004 = vld [vmem:[#allocation5 + $0x128] sm:$0xf]
    %v1005 = vld [vmem:[#allocation5 + $0x12c] sm:$0xf]
    %v1006 = vld [vmem:[#allocation5 + $0x130] sm:$0xf]
    %v1007 = vld [vmem:[#allocation5 + $0x134] sm:$0xf]
    %v1008 = vld [vmem:[#allocation5 + $0x138] sm:$0xf]
    %v1009 = vld [vmem:[#allocation5 + $0x13c] sm:$0xf]
    %v1010 = vld [vmem:[#allocation5 + $0x140] sm:$0xf]
    %v1011 = vld [vmem:[#allocation5 + $0x144] sm:$0xf]
    %v1012 = vld [vmem:[#allocation5 + $0x148] sm:$0xf]
    %v1013 = vld [vmem:[#allocation5 + $0x14c] sm:$0xf]
    %v1014 = vld [vmem:[#allocation5 + $0x150] sm:$0xf]
    %v1015 = vld [vmem:[#allocation5 + $0x154] sm:$0xf]
    %v1016 = vld [vmem:[#allocation5 + $0x158] sm:$0xf]
    %v1017 = vld [vmem:[#allocation5 + $0x15c] sm:$0xf]
    %v1018 = vld [vmem:[#allocation5 + $0x160] sm:$0xf]
    %v1019 = vld [vmem:[#allocation5 + $0x164] sm:$0xf]
    %v1020 = vld [vmem:[#allocation5 + $0x168] sm:$0xf]
    %v1021 = vld [vmem:[#allocation5 + $0x16c] sm:$0xf]
    %v1022 = vld [vmem:[#allocation5 + $0x170] sm:$0xf]
    %v1023 = vld [vmem:[#allocation5 + $0x174] sm:$0xf]
    %v1024 = vld [vmem:[#allocation5 + $0x178] sm:$0xf]
    %v1025 = vld [vmem:[#allocation5 + $0x17c] sm:$0xf]
    %v1026 = vld [vmem:[#allocation5 + $0x180] sm:$0xf]
    %v1027 = vld [vmem:[#allocation5 + $0x184] sm:$0xf]
    %v1028 = vld [vmem:[#allocation5 + $0x188] sm:$0xf]
    %v1029 = vld [vmem:[#allocation5 + $0x18c] sm:$0xf]
    %v1030 = vld [vmem:[#allocation5 + $0x190] sm:$0xf]
    %v1031 = vld [vmem:[#allocation5 + $0x194] sm:$0xf]
    %v1032 = vld [vmem:[#allocation5 + $0x198] sm:$0xf]
    %v1033 = vld [vmem:[#allocation5 + $0x19c] sm:$0xf]
    %v1034 = vld [vmem:[#allocation5 + $0x1a0] sm:$0xf]
    %v1035 = vld [vmem:[#allocation5 + $0x1a4] sm:$0xf]
    %v1036 = vld [vmem:[#allocation5 + $0x1a8] sm:$0xf]
    %v1037 = vld [vmem:[#allocation5 + $0x1ac] sm:$0xf]
    %v1038 = vld [vmem:[#allocation5 + $0x1b0] sm:$0xf]
    %v1039 = vld [vmem:[#allocation5 + $0x1b4] sm:$0xf]
    %v1040 = vld [vmem:[#allocation5 + $0x1b8] sm:$0xf]
    %v1041 = vld [vmem:[#allocation5 + $0x1bc] sm:$0xf]
    %v1042 = vld [vmem:[#allocation5 + $0x1c0] sm:$0xf]
    %v1043 = vld [vmem:[#allocation5 + $0x1c4] sm:$0xf]
    %v1044 = vld [vmem:[#allocation5 + $0x1c8] sm:$0xf]
    %v1045 = vld [vmem:[#allocation5 + $0x1cc] sm:$0xf]
    %v1046 = vld [vmem:[#allocation5 + $0x1d0] sm:$0xf]
    %v1047 = vld [vmem:[#allocation5 + $0x1d4] sm:$0xf]
    %v1048 = vld [vmem:[#allocation5 + $0x1d8] sm:$0xf]
    %v1049 = vld [vmem:[#allocation5 + $0x1dc] sm:$0xf]
    %v1050 = vld [vmem:[#allocation5 + $0x1e0] sm:$0xf]
    %v1051 = vld [vmem:[#allocation5 + $0x1e4] sm:$0xf]
    %v1052 = vld [vmem:[#allocation5 + $0x1e8] sm:$0xf]
    %v1053 = vld [vmem:[#allocation5 + $0x1ec] sm:$0xf]
    %v1054 = vld [vmem:[#allocation5 + $0x1f0] sm:$0xf]
    %v1055 = vld [vmem:[#allocation5 + $0x1f4] sm:$0xf]
    %v1056 = vld [vmem:[#allocation5 + $0x1f8] sm:$0xf]
    %v1057 = vld [vmem:[#allocation5 + $0x1fc] sm:$0xf]
    %v1122 = vunpack.c.l.b16 %v994
    %v1123 = vunpack.c.l.b16 %v995
    %v1124 = vunpack.c.l.b16 %v996
    %v1125 = vunpack.c.l.b16 %v997
    %v1126 = vunpack.c.l.b16 %v998
    %v1127 = vunpack.c.l.b16 %v999
    %v1128 = vunpack.c.l.b16 %v1000
    %v1129 = vunpack.c.l.b16 %v1001
    %v1130 = vunpack.c.l.b16 %v1002
    %v1131 = vunpack.c.l.b16 %v1003
    %v1132 = vunpack.c.l.b16 %v1004
    %v1133 = vunpack.c.l.b16 %v1005
    %v1134 = vunpack.c.l.b16 %v1006
    %v1135 = vunpack.c.l.b16 %v1007
    %v1136 = vunpack.c.l.b16 %v1008
    %v1137 = vunpack.c.l.b16 %v1009
    %v1138 = vunpack.c.l.b16 %v1010
    %v1139 = vunpack.c.l.b16 %v1011
    %v1140 = vunpack.c.l.b16 %v1012
    %v1141 = vunpack.c.l.b16 %v1013
    %v1142 = vunpack.c.l.b16 %v1014
    %v1143 = vunpack.c.l.b16 %v1015
    %v1144 = vunpack.c.l.b16 %v1016
    %v1145 = vunpack.c.l.b16 %v1017
    %v1146 = vunpack.c.l.b16 %v1018
    %v1147 = vunpack.c.l.b16 %v1019
    %v1148 = vunpack.c.l.b16 %v1020
    %v1149 = vunpack.c.l.b16 %v1021
    %v1150 = vunpack.c.l.b16 %v1022
    %v1151 = vunpack.c.l.b16 %v1023
    %v1152 = vunpack.c.l.b16 %v1024
    %v1153 = vunpack.c.l.b16 %v1025
    %v1154 = vunpack.c.l.b16 %v1026
    %v1155 = vunpack.c.l.b16 %v1027
    %v1156 = vunpack.c.l.b16 %v1028
    %v1157 = vunpack.c.l.b16 %v1029
    %v1158 = vunpack.c.l.b16 %v1030
    %v1159 = vunpack.c.l.b16 %v1031
    %v1160 = vunpack.c.l.b16 %v1032
    %v1161 = vunpack.c.l.b16 %v1033
    %v1162 = vunpack.c.l.b16 %v1034
    %v1163 = vunpack.c.l.b16 %v1035
    %v1164 = vunpack.c.l.b16 %v1036
    %v1165 = vunpack.c.l.b16 %v1037
    %v1166 = vunpack.c.l.b16 %v1038
    %v1167 = vunpack.c.l.b16 %v1039
    %v1168 = vunpack.c.l.b16 %v1040
    %v1169 = vunpack.c.l.b16 %v1041
    %v1170 = vunpack.c.l.b16 %v1042
    %v1171 = vunpack.c.l.b16 %v1043
    %v1172 = vunpack.c.l.b16 %v1044
    %v1173 = vunpack.c.l.b16 %v1045
    %v1174 = vunpack.c.l.b16 %v1046
    %v1175 = vunpack.c.l.b16 %v1047
    %v1176 = vunpack.c.l.b16 %v1048
    %v1177 = vunpack.c.l.b16 %v1049
    %v1178 = vunpack.c.l.b16 %v1050
    %v1179 = vunpack.c.l.b16 %v1051
    %v1180 = vunpack.c.l.b16 %v1052
    %v1181 = vunpack.c.l.b16 %v1053
    %v1182 = vunpack.c.l.b16 %v1054
    %v1183 = vunpack.c.l.b16 %v1055
    %v1184 = vunpack.c.l.b16 %v1056
    %v1185 = vunpack.c.l.b16 %v1057
    %v1186 = vpack.c.b16 %v1123, %v1122
    %v1187 = vpack.c.b16 %v1125, %v1124
    %v1188 = vpack.c.b16 %v1127, %v1126
    %v1189 = vpack.c.b16 %v1129, %v1128
    %v1190 = vpack.c.b16 %v1131, %v1130
    %v1191 = vpack.c.b16 %v1133, %v1132
    %v1192 = vpack.c.b16 %v1135, %v1134
    %v1193 = vpack.c.b16 %v1137, %v1136
    %v1194 = vpack.c.b16 %v1139, %v1138
    %v1195 = vpack.c.b16 %v1141, %v1140
    %v1196 = vpack.c.b16 %v1143, %v1142
    %v1197 = vpack.c.b16 %v1145, %v1144
    %v1198 = vpack.c.b16 %v1147, %v1146
    %v1199 = vpack.c.b16 %v1149, %v1148
    %v1200 = vpack.c.b16 %v1151, %v1150
    %v1201 = vpack.c.b16 %v1153, %v1152
    %v1202 = vpack.c.b16 %v1155, %v1154
    %v1203 = vpack.c.b16 %v1157, %v1156
    %v1204 = vpack.c.b16 %v1159, %v1158
    %v1205 = vpack.c.b16 %v1161, %v1160
    %v1206 = vpack.c.b16 %v1163, %v1162
    %v1207 = vpack.c.b16 %v1165, %v1164
    %v1208 = vpack.c.b16 %v1167, %v1166
    %v1209 = vpack.c.b16 %v1169, %v1168
    %v1210 = vpack.c.b16 %v1171, %v1170
    %v1211 = vpack.c.b16 %v1173, %v1172
    %v1212 = vpack.c.b16 %v1175, %v1174
    %v1213 = vpack.c.b16 %v1177, %v1176
    %v1214 = vpack.c.b16 %v1179, %v1178
    %v1215 = vpack.c.b16 %v1181, %v1180
    %v1216 = vpack.c.b16 %v1183, %v1182
    %v1217 = vpack.c.b16 %v1185, %v1184
    %1250 = vmatprep.subr.bf16.mxu0 0
    %1251 = vmatpush1.bf16.msra.mxu0 %v1193
    %1252 = vmatprep.subr.bf16.mxu0 0
    %1253 = vmatpush1.bf16.msra.mxu0 %v1192
    %1254 = vmatprep.subr.bf16.mxu0 0
    %1255 = vmatpush1.bf16.msra.mxu0 %v1191
    %1256 = vmatprep.subr.bf16.mxu0 0
    %1257 = vmatpush1.bf16.msra.mxu0 %v1190
    %1258 = vmatprep.subr.bf16.mxu0 0
    %1259 = vmatpush1.bf16.msra.mxu0 %v1189
    %1260 = vmatprep.subr.bf16.mxu0 0
    %1261 = vmatpush1.bf16.msra.mxu0 %v1188
    %1262 = vmatprep.subr.bf16.mxu0 0
    %1263 = vmatpush1.bf16.msra.mxu0 %v1187
    %1264 = vmatprep.subr.bf16.mxu0 0
    %1265 = vmatpush1.bf16.msra.mxu0 %v1186
    %1266 = vmatprep.subr.bf16.mxu0 0
    %1267 = vmatpush2.bf16.msra.mxu0 %v1201
    %1268 = vmatprep.subr.bf16.mxu0 0
    %1269 = vmatpush2.bf16.msra.mxu0 %v1200
    %1270 = vmatprep.subr.bf16.mxu0 0
    %1271 = vmatpush2.bf16.msra.mxu0 %v1199
    %1272 = vmatprep.subr.bf16.mxu0 0
    %1273 = vmatpush2.bf16.msra.mxu0 %v1198
    %1274 = vmatprep.subr.bf16.mxu0 0
    %1275 = vmatpush2.bf16.msra.mxu0 %v1197
    %1276 = vmatprep.subr.bf16.mxu0 0
    %1277 = vmatpush2.bf16.msra.mxu0 %v1196
    %1278 = vmatprep.subr.bf16.mxu0 0
    %1279 = vmatpush2.bf16.msra.mxu0 %v1195
    %1280 = vmatprep.subr.bf16.mxu0 0
    %1281 = vmatpush2.bf16.msra.mxu0 %v1194
    %1282 = vmatprep.mubr.bf16.mxu0 %v923
    %1283 = vmatmul.mubr.bf16.gmra.mxu0 %v922
    %v1284 = vpop.f32.mrf.mxu0
    %v1285 = vadd.f32 0.0, %v1284
    %v1286 = vpop.f32.mrf.mxu0
    %v1287 = vpop.f32.mrf.mxu0
    %v1288 = vadd.f32 0.0, %v1287
    %v1289 = vpop.f32.mrf.mxu0
    %1290 = vmatprep.mubr.bf16.mxu0 %v927
    %1291 = vmatmul.mubr.bf16.gmra.mxu0 %v926
    %v1292 = vpop.f32.mrf.mxu0
    %v1293 = vadd.f32 0.0, %v1292
    %v1294 = vpop.f32.mrf.mxu0
    %v1295 = vpop.f32.mrf.mxu0
    %v1296 = vadd.f32 0.0, %v1295
    %v1297 = vpop.f32.mrf.mxu0
    %1298 = vdwg.mxu0
    %1299 = vmatprep.subr.bf16.mxu0 0
    %1300 = vmatpush1.bf16.msra.mxu0 %v1209
    %1301 = vmatprep.subr.bf16.mxu0 0
    %1302 = vmatpush1.bf16.msra.mxu0 %v1208
    %1303 = vmatprep.subr.bf16.mxu0 0
    %1304 = vmatpush1.bf16.msra.mxu0 %v1207
    %1305 = vmatprep.subr.bf16.mxu0 0
    %1306 = vmatpush1.bf16.msra.mxu0 %v1206
    %1307 = vmatprep.subr.bf16.mxu0 0
    %1308 = vmatpush1.bf16.msra.mxu0 %v1205
    %1309 = vmatprep.subr.bf16.mxu0 0
    %1310 = vmatpush1.bf16.msra.mxu0 %v1204
    %1311 = vmatprep.subr.bf16.mxu0 0
    %1312 = vmatpush1.bf16.msra.mxu0 %v1203
    %1313 = vmatprep.subr.bf16.mxu0 0
    %1314 = vmatpush1.bf16.msra.mxu0 %v1202
    %1315 = vmatprep.subr.bf16.mxu0 0
    %1316 = vmatpush2.bf16.msra.mxu0 %v1217
    %1317 = vmatprep.subr.bf16.mxu0 0
    %1318 = vmatpush2.bf16.msra.mxu0 %v1216
    %1319 = vmatprep.subr.bf16.mxu0 0
    %1320 = vmatpush2.bf16.msra.mxu0 %v1215
    %1321 = vmatprep.subr.bf16.mxu0 0
    %1322 = vmatpush2.bf16.msra.mxu0 %v1214
    %1323 = vmatprep.subr.bf16.mxu0 0
    %1324 = vmatpush2.bf16.msra.mxu0 %v1213
    %1325 = vmatprep.subr.bf16.mxu0 0
    %1326 = vmatpush2.bf16.msra.mxu0 %v1212
    %1327 = vmatprep.subr.bf16.mxu0 0
    %1328 = vmatpush2.bf16.msra.mxu0 %v1211
    %1329 = vmatprep.subr.bf16.mxu0 0
    %1330 = vmatpush2.bf16.msra.mxu0 %v1210
    %1331 = vmatprep.mubr.bf16.mxu0 %v925
    %1332 = vmatmul.mubr.bf16.gmra.mxu0 %v924
    %v1333 = vpop.f32.mrf.mxu0
    %v1334 = vadd.f32 %v1285, %v1333
    %v1335 = vpop.f32.mrf.mxu0
    %v1336 = vpop.f32.mrf.mxu0
    %v1337 = vadd.f32 %v1288, %v1336
    %v1338 = vpop.f32.mrf.mxu0
    %1339 = vmatprep.mubr.bf16.mxu0 %v929
    %1340 = vmatmul.mubr.bf16.gmra.mxu0 %v928
    %v1341 = vpop.f32.mrf.mxu0
    %v1342 = vadd.f32 %v1293, %v1341
    %v1343 = vpop.f32.mrf.mxu0
    %v1344 = vpop.f32.mrf.mxu0
    %v1345 = vadd.f32 %v1296, %v1344
    %v1346 = vpop.f32.mrf.mxu0
    %1347 = vdwg.mxu0
    %v1412 = vunpack.c.l.b16 %v930
    %v1413 = vunpack.c.l.b16 %v931
    %v1414 = vunpack.c.l.b16 %v932
    %v1415 = vunpack.c.l.b16 %v933
    %v1416 = vunpack.c.l.b16 %v934
    %v1417 = vunpack.c.l.b16 %v935
    %v1418 = vunpack.c.l.b16 %v936
    %v1419 = vunpack.c.l.b16 %v937
    %v1420 = vunpack.c.l.b16 %v938
    %v1421 = vunpack.c.l.b16 %v939
    %v1422 = vunpack.c.l.b16 %v940
    %v1423 = vunpack.c.l.b16 %v941
    %v1424 = vunpack.c.l.b16 %v942
    %v1425 = vunpack.c.l.b16 %v943
    %v1426 = vunpack.c.l.b16 %v944
    %v1427 = vunpack.c.l.b16 %v945
    %v1428 = vunpack.c.l.b16 %v946
    %v1429 = vunpack.c.l.b16 %v947
    %v1430 = vunpack.c.l.b16 %v948
    %v1431 = vunpack.c.l.b16 %v949
    %v1432 = vunpack.c.l.b16 %v950
    %v1433 = vunpack.c.l.b16 %v951
    %v1434 = vunpack.c.l.b16 %v952
    %v1435 = vunpack.c.l.b16 %v953
    %v1436 = vunpack.c.l.b16 %v954
    %v1437 = vunpack.c.l.b16 %v955
    %v1438 = vunpack.c.l.b16 %v956
    %v1439 = vunpack.c.l.b16 %v957
    %v1440 = vunpack.c.l.b16 %v958
    %v1441 = vunpack.c.l.b16 %v959
    %v1442 = vunpack.c.l.b16 %v960
    %v1443 = vunpack.c.l.b16 %v961
    %v1444 = vunpack.c.l.b16 %v962
    %v1445 = vunpack.c.l.b16 %v963
    %v1446 = vunpack.c.l.b16 %v964
    %v1447 = vunpack.c.l.b16 %v965
    %v1448 = vunpack.c.l.b16 %v966
    %v1449 = vunpack.c.l.b16 %v967
    %v1450 = vunpack.c.l.b16 %v968
    %v1451 = vunpack.c.l.b16 %v969
    %v1452 = vunpack.c.l.b16 %v970
    %v1453 = vunpack.c.l.b16 %v971
    %v1454 = vunpack.c.l.b16 %v972
    %v1455 = vunpack.c.l.b16 %v973
    %v1456 = vunpack.c.l.b16 %v974
    %v1457 = vunpack.c.l.b16 %v975
    %v1458 = vunpack.c.l.b16 %v976
    %v1459 = vunpack.c.l.b16 %v977
    %v1460 = vunpack.c.l.b16 %v978
    %v1461 = vunpack.c.l.b16 %v979
    %v1462 = vunpack.c.l.b16 %v980
    %v1463 = vunpack.c.l.b16 %v981
    %v1464 = vunpack.c.l.b16 %v982
    %v1465 = vunpack.c.l.b16 %v983
    %v1466 = vunpack.c.l.b16 %v984
    %v1467 = vunpack.c.l.b16 %v985
    %v1468 = vunpack.c.l.b16 %v986
    %v1469 = vunpack.c.l.b16 %v987
    %v1470 = vunpack.c.l.b16 %v988
    %v1471 = vunpack.c.l.b16 %v989
    %v1472 = vunpack.c.l.b16 %v990
    %v1473 = vunpack.c.l.b16 %v991
    %v1474 = vunpack.c.l.b16 %v992
    %v1475 = vunpack.c.l.b16 %v993
    %v1476 = vpack.c.b16 %v1413, %v1412
    %v1477 = vpack.c.b16 %v1415, %v1414
    %v1478 = vpack.c.b16 %v1417, %v1416
    %v1479 = vpack.c.b16 %v1419, %v1418
    %v1480 = vpack.c.b16 %v1421, %v1420
    %v1481 = vpack.c.b16 %v1423, %v1422
    %v1482 = vpack.c.b16 %v1425, %v1424
    %v1483 = vpack.c.b16 %v1427, %v1426
    %v1484 = vpack.c.b16 %v1429, %v1428
    %v1485 = vpack.c.b16 %v1431, %v1430
    %v1486 = vpack.c.b16 %v1433, %v1432
    %v1487 = vpack.c.b16 %v1435, %v1434
    %v1488 = vpack.c.b16 %v1437, %v1436
    %v1489 = vpack.c.b16 %v1439, %v1438
    %v1490 = vpack.c.b16 %v1441, %v1440
    %v1491 = vpack.c.b16 %v1443, %v1442
    %v1492 = vpack.c.b16 %v1445, %v1444
    %v1493 = vpack.c.b16 %v1447, %v1446
    %v1494 = vpack.c.b16 %v1449, %v1448
    %v1495 = vpack.c.b16 %v1451, %v1450
    %v1496 = vpack.c.b16 %v1453, %v1452
    %v1497 = vpack.c.b16 %v1455, %v1454
    %v1498 = vpack.c.b16 %v1457, %v1456
    %v1499 = vpack.c.b16 %v1459, %v1458
    %v1500 = vpack.c.b16 %v1461, %v1460
    %v1501 = vpack.c.b16 %v1463, %v1462
    %v1502 = vpack.c.b16 %v1465, %v1464
    %v1503 = vpack.c.b16 %v1467, %v1466
    %v1504 = vpack.c.b16 %v1469, %v1468
    %v1505 = vpack.c.b16 %v1471, %v1470
    %v1506 = vpack.c.b16 %v1473, %v1472
    %v1507 = vpack.c.b16 %v1475, %v1474
    %1540 = vmatprep.subr.bf16.mxu0 0
    %1541 = vmatpush1.bf16.msra.mxu0 %v1483
    %1542 = vmatprep.subr.bf16.mxu0 0
    %1543 = vmatpush1.bf16.msra.mxu0 %v1482
    %1544 = vmatprep.subr.bf16.mxu0 0
    %1545 = vmatpush1.bf16.msra.mxu0 %v1481
    %1546 = vmatprep.subr.bf16.mxu0 0
    %1547 = vmatpush1.bf16.msra.mxu0 %v1480
    %1548 = vmatprep.subr.bf16.mxu0 0
    %1549 = vmatpush1.bf16.msra.mxu0 %v1479
    %1550 = vmatprep.subr.bf16.mxu0 0
    %1551 = vmatpush1.bf16.msra.mxu0 %v1478
    %1552 = vmatprep.subr.bf16.mxu0 0
    %1553 = vmatpush1.bf16.msra.mxu0 %v1477
    %1554 = vmatprep.subr.bf16.mxu0 0
    %1555 = vmatpush1.bf16.msra.mxu0 %v1476
    %1556 = vmatprep.subr.bf16.mxu0 0
    %1557 = vmatpush2.bf16.msra.mxu0 %v1491
    %1558 = vmatprep.subr.bf16.mxu0 0
    %1559 = vmatpush2.bf16.msra.mxu0 %v1490
    %1560 = vmatprep.subr.bf16.mxu0 0
    %1561 = vmatpush2.bf16.msra.mxu0 %v1489
    %1562 = vmatprep.subr.bf16.mxu0 0
    %1563 = vmatpush2.bf16.msra.mxu0 %v1488
    %1564 = vmatprep.subr.bf16.mxu0 0
    %1565 = vmatpush2.bf16.msra.mxu0 %v1487
    %1566 = vmatprep.subr.bf16.mxu0 0
    %1567 = vmatpush2.bf16.msra.mxu0 %v1486
    %1568 = vmatprep.subr.bf16.mxu0 0
    %1569 = vmatpush2.bf16.msra.mxu0 %v1485
    %1570 = vmatprep.subr.bf16.mxu0 0
    %1571 = vmatpush2.bf16.msra.mxu0 %v1484
    %1572 = vmatprep.mubr.bf16.mxu0 %v899
    %1573 = vmatmul.mubr.bf16.gmra.mxu0 %v898
    %v1574 = vpop.f32.mrf.mxu0
    %v1575 = vadd.f32 %v1334, %v1574
    %v1576 = vpop.f32.mrf.mxu0
    %v1577 = vpop.f32.mrf.mxu0
    %v1578 = vadd.f32 %v1337, %v1577
    %v1579 = vpop.f32.mrf.mxu0
    %1580 = vmatprep.mubr.bf16.mxu0 %v903
    %1581 = vmatmul.mubr.bf16.gmra.mxu0 %v902
    %v1582 = vpop.f32.mrf.mxu0
    %v1583 = vadd.f32 %v1342, %v1582
    %v1584 = vpop.f32.mrf.mxu0
    %v1585 = vpop.f32.mrf.mxu0
    %v1586 = vadd.f32 %v1345, %v1585
    %v1587 = vpop.f32.mrf.mxu0
    %1588 = vdwg.mxu0
    %1589 = vmatprep.subr.bf16.mxu0 0
    %1590 = vmatpush1.bf16.msra.mxu0 %v1499
    %1591 = vmatprep.subr.bf16.mxu0 0
    %1592 = vmatpush1.bf16.msra.mxu0 %v1498
    %1593 = vmatprep.subr.bf16.mxu0 0
    %1594 = vmatpush1.bf16.msra.mxu0 %v1497
    %1595 = vmatprep.subr.bf16.mxu0 0
    %1596 = vmatpush1.bf16.msra.mxu0 %v1496
    %1597 = vmatprep.subr.bf16.mxu0 0
    %1598 = vmatpush1.bf16.msra.mxu0 %v1495
    %1599 = vmatprep.subr.bf16.mxu0 0
    %1600 = vmatpush1.bf16.msra.mxu0 %v1494
    %1601 = vmatprep.subr.bf16.mxu0 0
    %1602 = vmatpush1.bf16.msra.mxu0 %v1493
    %1603 = vmatprep.subr.bf16.mxu0 0
    %1604 = vmatpush1.bf16.msra.mxu0 %v1492
    %1605 = vmatprep.subr.bf16.mxu0 0
    %1606 = vmatpush2.bf16.msra.mxu0 %v1507
    %1607 = vmatprep.subr.bf16.mxu0 0
    %1608 = vmatpush2.bf16.msra.mxu0 %v1506
    %1609 = vmatprep.subr.bf16.mxu0 0
    %1610 = vmatpush2.bf16.msra.mxu0 %v1505
    %1611 = vmatprep.subr.bf16.mxu0 0
    %1612 = vmatpush2.bf16.msra.mxu0 %v1504
    %1613 = vmatprep.subr.bf16.mxu0 0
    %1614 = vmatpush2.bf16.msra.mxu0 %v1503
    %1615 = vmatprep.subr.bf16.mxu0 0
    %1616 = vmatpush2.bf16.msra.mxu0 %v1502
    %1617 = vmatprep.subr.bf16.mxu0 0
    %1618 = vmatpush2.bf16.msra.mxu0 %v1501
    %1619 = vmatprep.subr.bf16.mxu0 0
    %1620 = vmatpush2.bf16.msra.mxu0 %v1500
    %1621 = vmatprep.mubr.bf16.mxu0 %v901
    %1622 = vmatmul.mubr.bf16.gmra.mxu0 %v900
    %v1623 = vpop.f32.mrf.mxu0
    %v1624 = vadd.f32 %v1575, %v1623
    %v1625 = vpop.f32.mrf.mxu0
    %v1626 = vpop.f32.mrf.mxu0
    %v1627 = vadd.f32 %v1578, %v1626
    %v1628 = vpop.f32.mrf.mxu0
    %1629 = vmatprep.mubr.bf16.mxu0 %v905
    %1630 = vmatmul.mubr.bf16.gmra.mxu0 %v904
    %v1631 = vpop.f32.mrf.mxu0
    %v1632 = vadd.f32 %v1583, %v1631
    %v1633 = vpop.f32.mrf.mxu0
    %v1634 = vpop.f32.mrf.mxu0
    %v1635 = vadd.f32 %v1586, %v1634
    %v1636 = vpop.f32.mrf.mxu0
    %1637 = vdwg.mxu0
    %v1638 = vpack.c.bf16 %v1627, %v1624
    %v1639 = vpack.c.bf16 %v1635, %v1632
    %1640 = vmatprep.subr.bf16.mxu0 %v535
    %1641 = vmatpush1.bf16.msra.mxu0 %v534
    %1642 = vmatprep.subr.bf16.mxu0 %v527
    %1643 = vmatpush1.bf16.msra.mxu0 %v526
    %1644 = vmatprep.subr.bf16.mxu0 %v519
    %1645 = vmatpush1.bf16.msra.mxu0 %v518
    %1646 = vmatprep.subr.bf16.mxu0 %v511
    %1647 = vmatpush1.bf16.msra.mxu0 %v510
    %1648 = vmatprep.subr.bf16.mxu0 %v503
    %1649 = vmatpush1.bf16.msra.mxu0 %v502
    %1650 = vmatprep.subr.bf16.mxu0 %v495
    %1651 = vmatpush1.bf16.msra.mxu0 %v494
    %1652 = vmatprep.subr.bf16.mxu0 %v487
    %1653 = vmatpush1.bf16.msra.mxu0 %v486
    %1654 = vmatprep.subr.bf16.mxu0 %v479
    %1655 = vmatpush1.bf16.msra.mxu0 %v478
    %1656 = vmatprep.subr.bf16.mxu0 0
    %1657 = vmatpush2.bf16.msra.mxu0 0
    %1658 = vmatprep.subr.bf16.mxu0 0
    %1659 = vmatpush2.bf16.msra.mxu0 0
    %1660 = vmatprep.subr.bf16.mxu0 0
    %1661 = vmatpush2.bf16.msra.mxu0 0
    %1662 = vmatprep.subr.bf16.mxu0 0
    %1663 = vmatpush2.bf16.msra.mxu0 0
    %1664 = vmatprep.subr.bf16.mxu0 0
    %1665 = vmatpush2.bf16.msra.mxu0 0
    %1666 = vmatprep.subr.bf16.mxu0 0
    %1667 = vmatpush2.bf16.msra.mxu0 0
    %1668 = vmatprep.subr.bf16.mxu0 0
    %1669 = vmatpush2.bf16.msra.mxu0 0
    %1670 = vmatprep.subr.bf16.mxu0 0
    %1671 = vmatpush2.bf16.msra.mxu0 0
    %1672 = vmatprep.mubr.bf16.mxu0 0
    %1673 = vmatmul.mubr.bf16.gmra.mxu0 %v1638
    %v1674 = vpop.f32.mrf.mxu0
    %v1675 = vadd.f32 0.0, %v1674
    %v1676 = vpop.f32.mrf.mxu0
    %v1677 = vadd.f32 0.0, %v1676
    %v1678 = vpop.f32.mrf.mxu0
    %v1679 = vadd.f32 0.0, %v1678
    %v1680 = vpop.f32.mrf.mxu0
    %v1681 = vadd.f32 0.0, %v1680
    %1682 = vmatprep.mubr.bf16.mxu0 0
    %1683 = vmatmul.mubr.bf16.gmra.mxu0 %v1639
    %v1684 = vpop.f32.mrf.mxu0
    %v1685 = vadd.f32 0.0, %v1684
    %v1686 = vpop.f32.mrf.mxu0
    %v1687 = vadd.f32 0.0, %v1686
    %v1688 = vpop.f32.mrf.mxu0
    %v1689 = vadd.f32 0.0, %v1688
    %v1690 = vpop.f32.mrf.mxu0
    %v1691 = vadd.f32 0.0, %v1690
    %1692 = vdwg.mxu0
    %1693 = vmatprep.subr.bf16.mxu0 %v537
    %1694 = vmatpush1.bf16.msra.mxu0 %v536
    %1695 = vmatprep.subr.bf16.mxu0 %v529
    %1696 = vmatpush1.bf16.msra.mxu0 %v528
    %1697 = vmatprep.subr.bf16.mxu0 %v521
    %1698 = vmatpush1.bf16.msra.mxu0 %v520
    %1699 = vmatprep.subr.bf16.mxu0 %v513
    %1700 = vmatpush1.bf16.msra.mxu0 %v512
    %1701 = vmatprep.subr.bf16.mxu0 %v505
    %1702 = vmatpush1.bf16.msra.mxu0 %v504
    %1703 = vmatprep.subr.bf16.mxu0 %v497
    %1704 = vmatpush1.bf16.msra.mxu0 %v496
    %1705 = vmatprep.subr.bf16.mxu0 %v489
    %1706 = vmatpush1.bf16.msra.mxu0 %v488
    %1707 = vmatprep.subr.bf16.mxu0 %v481
    %1708 = vmatpush1.bf16.msra.mxu0 %v480
    %1709 = vmatprep.subr.bf16.mxu0 0
    %1710 = vmatpush2.bf16.msra.mxu0 0
    %1711 = vmatprep.subr.bf16.mxu0 0
    %1712 = vmatpush2.bf16.msra.mxu0 0
    %1713 = vmatprep.subr.bf16.mxu0 0
    %1714 = vmatpush2.bf16.msra.mxu0 0
    %1715 = vmatprep.subr.bf16.mxu0 0
    %1716 = vmatpush2.bf16.msra.mxu0 0
    %1717 = vmatprep.subr.bf16.mxu0 0
    %1718 = vmatpush2.bf16.msra.mxu0 0
    %1719 = vmatprep.subr.bf16.mxu0 0
    %1720 = vmatpush2.bf16.msra.mxu0 0
    %1721 = vmatprep.subr.bf16.mxu0 0
    %1722 = vmatpush2.bf16.msra.mxu0 0
    %1723 = vmatprep.subr.bf16.mxu0 0
    %1724 = vmatpush2.bf16.msra.mxu0 0
    %1725 = vmatprep.mubr.bf16.mxu0 0
    %1726 = vmatmul.mubr.bf16.gmra.mxu0 %v1638
    %v1727 = vpop.f32.mrf.mxu0
    %v1728 = vadd.f32 0.0, %v1727
    %v1729 = vpop.f32.mrf.mxu0
    %v1730 = vadd.f32 0.0, %v1729
    %v1731 = vpop.f32.mrf.mxu0
    %v1732 = vadd.f32 0.0, %v1731
    %v1733 = vpop.f32.mrf.mxu0
    %v1734 = vadd.f32 0.0, %v1733
    %1735 = vmatprep.mubr.bf16.mxu0 0
    %1736 = vmatmul.mubr.bf16.gmra.mxu0 %v1639
    %v1737 = vpop.f32.mrf.mxu0
    %v1738 = vadd.f32 0.0, %v1737
    %v1739 = vpop.f32.mrf.mxu0
    %v1740 = vadd.f32 0.0, %v1739
    %v1741 = vpop.f32.mrf.mxu0
    %v1742 = vadd.f32 0.0, %v1741
    %v1743 = vpop.f32.mrf.mxu0
    %v1744 = vadd.f32 0.0, %v1743
    %1745 = vdwg.mxu0
    %1746 = vmatprep.subr.bf16.mxu0 %v539
    %1747 = vmatpush1.bf16.msra.mxu0 %v538
    %1748 = vmatprep.subr.bf16.mxu0 %v531
    %1749 = vmatpush1.bf16.msra.mxu0 %v530
    %1750 = vmatprep.subr.bf16.mxu0 %v523
    %1751 = vmatpush1.bf16.msra.mxu0 %v522
    %1752 = vmatprep.subr.bf16.mxu0 %v515
    %1753 = vmatpush1.bf16.msra.mxu0 %v514
    %1754 = vmatprep.subr.bf16.mxu0 %v507
    %1755 = vmatpush1.bf16.msra.mxu0 %v506
    %1756 = vmatprep.subr.bf16.mxu0 %v499
    %1757 = vmatpush1.bf16.msra.mxu0 %v498
    %1758 = vmatprep.subr.bf16.mxu0 %v491
    %1759 = vmatpush1.bf16.msra.mxu0 %v490
    %1760 = vmatprep.subr.bf16.mxu0 %v483
    %1761 = vmatpush1.bf16.msra.mxu0 %v482
    %1762 = vmatprep.subr.bf16.mxu0 0
    %1763 = vmatpush2.bf16.msra.mxu0 0
    %1764 = vmatprep.subr.bf16.mxu0 0
    %1765 = vmatpush2.bf16.msra.mxu0 0
    %1766 = vmatprep.subr.bf16.mxu0 0
    %1767 = vmatpush2.bf16.msra.mxu0 0
    %1768 = vmatprep.subr.bf16.mxu0 0
    %1769 = vmatpush2.bf16.msra.mxu0 0
    %1770 = vmatprep.subr.bf16.mxu0 0
    %1771 = vmatpush2.bf16.msra.mxu0 0
    %1772 = vmatprep.subr.bf16.mxu0 0
    %1773 = vmatpush2.bf16.msra.mxu0 0
    %1774 = vmatprep.subr.bf16.mxu0 0
    %1775 = vmatpush2.bf16.msra.mxu0 0
    %1776 = vmatprep.subr.bf16.mxu0 0
    %1777 = vmatpush2.bf16.msra.mxu0 0
    %1778 = vmatprep.mubr.bf16.mxu0 0
    %1779 = vmatmul.mubr.bf16.gmra.mxu0 %v1638
    %v1780 = vpop.f32.mrf.mxu0
    %v1781 = vadd.f32 0.0, %v1780
    %v1782 = vpop.f32.mrf.mxu0
    %v1783 = vadd.f32 0.0, %v1782
    %v1784 = vpop.f32.mrf.mxu0
    %v1785 = vadd.f32 0.0, %v1784
    %v1786 = vpop.f32.mrf.mxu0
    %v1787 = vadd.f32 0.0, %v1786
    %1788 = vmatprep.mubr.bf16.mxu0 0
    %1789 = vmatmul.mubr.bf16.gmra.mxu0 %v1639
    %v1790 = vpop.f32.mrf.mxu0
    %v1791 = vadd.f32 0.0, %v1790
    %v1792 = vpop.f32.mrf.mxu0
    %v1793 = vadd.f32 0.0, %v1792
    %v1794 = vpop.f32.mrf.mxu0
    %v1795 = vadd.f32 0.0, %v1794
    %v1796 = vpop.f32.mrf.mxu0
    %v1797 = vadd.f32 0.0, %v1796
    %1798 = vdwg.mxu0
    %1799 = vmatprep.subr.bf16.mxu0 %v541
    %1800 = vmatpush1.bf16.msra.mxu0 %v540
    %1801 = vmatprep.subr.bf16.mxu0 %v533
    %1802 = vmatpush1.bf16.msra.mxu0 %v532
    %1803 = vmatprep.subr.bf16.mxu0 %v525
    %1804 = vmatpush1.bf16.msra.mxu0 %v524
    %1805 = vmatprep.subr.bf16.mxu0 %v517
    %1806 = vmatpush1.bf16.msra.mxu0 %v516
    %1807 = vmatprep.subr.bf16.mxu0 %v509
    %1808 = vmatpush1.bf16.msra.mxu0 %v508
    %1809 = vmatprep.subr.bf16.mxu0 %v501
    %1810 = vmatpush1.bf16.msra.mxu0 %v500
    %1811 = vmatprep.subr.bf16.mxu0 %v493
    %1812 = vmatpush1.bf16.msra.mxu0 %v492
    %1813 = vmatprep.subr.bf16.mxu0 %v485
    %1814 = vmatpush1.bf16.msra.mxu0 %v484
    %1815 = vmatprep.subr.bf16.mxu0 0
    %1816 = vmatpush2.bf16.msra.mxu0 0
    %1817 = vmatprep.subr.bf16.mxu0 0
    %1818 = vmatpush2.bf16.msra.mxu0 0
    %1819 = vmatprep.subr.bf16.mxu0 0
    %1820 = vmatpush2.bf16.msra.mxu0 0
    %1821 = vmatprep.subr.bf16.mxu0 0
    %1822 = vmatpush2.bf16.msra.mxu0 0
    %1823 = vmatprep.subr.bf16.mxu0 0
    %1824 = vmatpush2.bf16.msra.mxu0 0
    %1825 = vmatprep.subr.bf16.mxu0 0
    %1826 = vmatpush2.bf16.msra.mxu0 0
    %1827 = vmatprep.subr.bf16.mxu0 0
    %1828 = vmatpush2.bf16.msra.mxu0 0
    %1829 = vmatprep.subr.bf16.mxu0 0
    %1830 = vmatpush2.bf16.msra.mxu0 0
    %1831 = vmatprep.mubr.bf16.mxu0 0
    %1832 = vmatmul.mubr.bf16.gmra.mxu0 %v1638
    %v1833 = vpop.f32.mrf.mxu0
    %v1834 = vadd.f32 0.0, %v1833
    %v1835 = vpop.f32.mrf.mxu0
    %v1836 = vadd.f32 0.0, %v1835
    %v1837 = vpop.f32.mrf.mxu0
    %v1838 = vadd.f32 0.0, %v1837
    %v1839 = vpop.f32.mrf.mxu0
    %v1840 = vadd.f32 0.0, %v1839
    %1841 = vmatprep.mubr.bf16.mxu0 0
    %1842 = vmatmul.mubr.bf16.gmra.mxu0 %v1639
    %v1843 = vpop.f32.mrf.mxu0
    %v1844 = vadd.f32 0.0, %v1843
    %v1845 = vpop.f32.mrf.mxu0
    %v1846 = vadd.f32 0.0, %v1845
    %v1847 = vpop.f32.mrf.mxu0
    %v1848 = vadd.f32 0.0, %v1847
    %v1849 = vpop.f32.mrf.mxu0
    %v1850 = vadd.f32 0.0, %v1849
    %1851 = vdwg.mxu0
    %v1852 = vmul.f32 %v1675, 0.5
    %v1853 = vmul.f32 %v1677, 0.5
    %v1854 = vmul.f32 %v1728, 0.5
    %v1855 = vmul.f32 %v1730, 0.5
    %v1856 = vmul.f32 %v1679, 0.5
    %v1857 = vmul.f32 %v1681, 0.5
    %v1858 = vmul.f32 %v1732, 0.5
    %v1859 = vmul.f32 %v1734, 0.5
    %v1860 = vmul.f32 %v1685, 0.5
    %v1861 = vmul.f32 %v1687, 0.5
    %v1862 = vmul.f32 %v1738, 0.5
    %v1863 = vmul.f32 %v1740, 0.5
    %v1864 = vmul.f32 %v1689, 0.5
    %v1865 = vmul.f32 %v1691, 0.5
    %v1866 = vmul.f32 %v1742, 0.5
    %v1867 = vmul.f32 %v1744, 0.5
    %v1868 = vtanh.pop %v1852
    %v1869 = vtanh.pop %v1853
    %v1870 = vtanh.pop %v1854
    %v1871 = vtanh.pop %v1855
    %v1872 = vtanh.pop %v1856
    %v1873 = vtanh.pop %v1857
    %v1874 = vtanh.pop %v1858
    %v1875 = vtanh.pop %v1859
    %v1876 = vtanh.pop %v1860
    %v1877 = vtanh.pop %v1861
    %v1878 = vtanh.pop %v1862
    %v1879 = vtanh.pop %v1863
    %v1880 = vtanh.pop %v1864
    %v1881 = vtanh.pop %v1865
    %v1882 = vtanh.pop %v1866
    %v1883 = vtanh.pop %v1867
    %v1884 = vadd.f32 %v1868, 1.0
    %v1885 = vadd.f32 %v1869, 1.0
    %v1886 = vadd.f32 %v1870, 1.0
    %v1887 = vadd.f32 %v1871, 1.0
    %v1888 = vadd.f32 %v1872, 1.0
    %v1889 = vadd.f32 %v1873, 1.0
    %v1890 = vadd.f32 %v1874, 1.0
    %v1891 = vadd.f32 %v1875, 1.0
    %v1892 = vadd.f32 %v1876, 1.0
    %v1893 = vadd.f32 %v1877, 1.0
    %v1894 = vadd.f32 %v1878, 1.0
    %v1895 = vadd.f32 %v1879, 1.0
    %v1896 = vadd.f32 %v1880, 1.0
    %v1897 = vadd.f32 %v1881, 1.0
    %v1898 = vadd.f32 %v1882, 1.0
    %v1899 = vadd.f32 %v1883, 1.0
    %v1900 = vmul.f32 %v1884, 0.5
    %v1901 = vmul.f32 %v1885, 0.5
    %v1902 = vmul.f32 %v1886, 0.5
    %v1903 = vmul.f32 %v1887, 0.5
    %v1904 = vmul.f32 %v1888, 0.5
    %v1905 = vmul.f32 %v1889, 0.5
    %v1906 = vmul.f32 %v1890, 0.5
    %v1907 = vmul.f32 %v1891, 0.5
    %v1908 = vmul.f32 %v1892, 0.5
    %v1909 = vmul.f32 %v1893, 0.5
    %v1910 = vmul.f32 %v1894, 0.5
    %v1911 = vmul.f32 %v1895, 0.5
    %v1912 = vmul.f32 %v1896, 0.5
    %v1913 = vmul.f32 %v1897, 0.5
    %v1914 = vmul.f32 %v1898, 0.5
    %v1915 = vmul.f32 %v1899, 0.5
    %v1916 = vmul.f32 %v1675, %v1900
    %v1917 = vmul.f32 %v1677, %v1901
    %v1918 = vmul.f32 %v1728, %v1902
    %v1919 = vmul.f32 %v1730, %v1903
    %v1920 = vmul.f32 %v1679, %v1904
    %v1921 = vmul.f32 %v1681, %v1905
    %v1922 = vmul.f32 %v1732, %v1906
    %v1923 = vmul.f32 %v1734, %v1907
    %v1924 = vmul.f32 %v1685, %v1908
    %v1925 = vmul.f32 %v1687, %v1909
    %v1926 = vmul.f32 %v1738, %v1910
    %v1927 = vmul.f32 %v1740, %v1911
    %v1928 = vmul.f32 %v1689, %v1912
    %v1929 = vmul.f32 %v1691, %v1913
    %v1930 = vmul.f32 %v1742, %v1914
    %v1931 = vmul.f32 %v1744, %v1915
    %v1932 = vpack.c.bf16 %v1920, %v1916
    %v1933 = vpack.c.bf16 %v1921, %v1917
    %v1934 = vpack.c.bf16 %v1922, %v1918
    %v1935 = vpack.c.bf16 %v1923, %v1919
    %v1936 = vpack.c.bf16 %v1928, %v1924
    %v1937 = vpack.c.bf16 %v1929, %v1925
    %v1938 = vpack.c.bf16 %v1930, %v1926
    %v1939 = vpack.c.bf16 %v1931, %v1927
    %v1940 = vtanh.pop %v1781
    %v1941 = vtanh.pop %v1783
    %v1942 = vtanh.pop %v1834
    %v1943 = vtanh.pop %v1836
    %v1944 = vtanh.pop %v1785
    %v1945 = vtanh.pop %v1787
    %v1946 = vtanh.pop %v1838
    %v1947 = vtanh.pop %v1840
    %v1948 = vtanh.pop %v1791
    %v1949 = vtanh.pop %v1793
    %v1950 = vtanh.pop %v1844
    %v1951 = vtanh.pop %v1846
    %v1952 = vtanh.pop %v1795
    %v1953 = vtanh.pop %v1797
    %v1954 = vtanh.pop %v1848
    %v1955 = vtanh.pop %v1850
    %v1956 = vpack.c.bf16 %v1944, %v1940
    %v1957 = vpack.c.bf16 %v1945, %v1941
    %v1958 = vpack.c.bf16 %v1946, %v1942
    %v1959 = vpack.c.bf16 %v1947, %v1943
    %v1960 = vpack.c.bf16 %v1952, %v1948
    %v1961 = vpack.c.bf16 %v1953, %v1949
    %v1962 = vpack.c.bf16 %v1954, %v1950
    %v1963 = vpack.c.bf16 %v1955, %v1951
    %v1964 = vld [vmem:[#allocation7] sm:$0xf]
    %v1965 = vld [vmem:[#allocation7 + $0x4] sm:$0xf]
    %v1966 = vld [vmem:[#allocation7 + $0x8] sm:$0xf]
    %v1967 = vld [vmem:[#allocation7 + $0xc] sm:$0xf]
    %v1968 = vld [vmem:[#allocation7 + $0x10] sm:$0xf]
    %v1969 = vld [vmem:[#allocation7 + $0x14] sm:$0xf]
    %v1970 = vld [vmem:[#allocation7 + $0x18] sm:$0xf]
    %v1971 = vld [vmem:[#allocation7 + $0x1c] sm:$0xf]
    %v1972 = vld [vmem:[#allocation7 + $0x20] sm:$0xf]
    %v1973 = vld [vmem:[#allocation7 + $0x24] sm:$0xf]
    %v1974 = vld [vmem:[#allocation7 + $0x28] sm:$0xf]
    %v1975 = vld [vmem:[#allocation7 + $0x2c] sm:$0xf]
    %v1976 = vld [vmem:[#allocation7 + $0x30] sm:$0xf]
    %v1977 = vld [vmem:[#allocation7 + $0x34] sm:$0xf]
    %v1978 = vld [vmem:[#allocation7 + $0x38] sm:$0xf]
    %v1979 = vld [vmem:[#allocation7 + $0x3c] sm:$0xf]
    %v1980 = vld [vmem:[#allocation7 + $0x40] sm:$0xf]
    %v1981 = vld [vmem:[#allocation7 + $0x44] sm:$0xf]
    %v1982 = vld [vmem:[#allocation7 + $0x48] sm:$0xf]
    %v1983 = vld [vmem:[#allocation7 + $0x4c] sm:$0xf]
    %v1984 = vld [vmem:[#allocation7 + $0x50] sm:$0xf]
    %v1985 = vld [vmem:[#allocation7 + $0x54] sm:$0xf]
    %v1986 = vld [vmem:[#allocation7 + $0x58] sm:$0xf]
    %v1987 = vld [vmem:[#allocation7 + $0x5c] sm:$0xf]
    %v1988 = vld [vmem:[#allocation7 + $0x60] sm:$0xf]
    %v1989 = vld [vmem:[#allocation7 + $0x64] sm:$0xf]
    %v1990 = vld [vmem:[#allocation7 + $0x68] sm:$0xf]
    %v1991 = vld [vmem:[#allocation7 + $0x6c] sm:$0xf]
    %v1992 = vld [vmem:[#allocation7 + $0x70] sm:$0xf]
    %v1993 = vld [vmem:[#allocation7 + $0x74] sm:$0xf]
    %v1994 = vld [vmem:[#allocation7 + $0x78] sm:$0xf]
    %v1995 = vld [vmem:[#allocation7 + $0x7c] sm:$0xf]
    %v1996 = vld [vmem:[#allocation7 + $0x80] sm:$0xf]
    %v1997 = vld [vmem:[#allocation7 + $0x84] sm:$0xf]
    %v1998 = vld [vmem:[#allocation7 + $0x88] sm:$0xf]
    %v1999 = vld [vmem:[#allocation7 + $0x8c] sm:$0xf]
    %v2000 = vld [vmem:[#allocation7 + $0x90] sm:$0xf]
    %v2001 = vld [vmem:[#allocation7 + $0x94] sm:$0xf]
    %v2002 = vld [vmem:[#allocation7 + $0x98] sm:$0xf]
    %v2003 = vld [vmem:[#allocation7 + $0x9c] sm:$0xf]
    %v2004 = vld [vmem:[#allocation7 + $0xa0] sm:$0xf]
    %v2005 = vld [vmem:[#allocation7 + $0xa4] sm:$0xf]
    %v2006 = vld [vmem:[#allocation7 + $0xa8] sm:$0xf]
    %v2007 = vld [vmem:[#allocation7 + $0xac] sm:$0xf]
    %v2008 = vld [vmem:[#allocation7 + $0xb0] sm:$0xf]
    %v2009 = vld [vmem:[#allocation7 + $0xb4] sm:$0xf]
    %v2010 = vld [vmem:[#allocation7 + $0xb8] sm:$0xf]
    %v2011 = vld [vmem:[#allocation7 + $0xbc] sm:$0xf]
    %v2012 = vld [vmem:[#allocation7 + $0xc0] sm:$0xf]
    %v2013 = vld [vmem:[#allocation7 + $0xc4] sm:$0xf]
    %v2014 = vld [vmem:[#allocation7 + $0xc8] sm:$0xf]
    %v2015 = vld [vmem:[#allocation7 + $0xcc] sm:$0xf]
    %v2016 = vld [vmem:[#allocation7 + $0xd0] sm:$0xf]
    %v2017 = vld [vmem:[#allocation7 + $0xd4] sm:$0xf]
    %v2018 = vld [vmem:[#allocation7 + $0xd8] sm:$0xf]
    %v2019 = vld [vmem:[#allocation7 + $0xdc] sm:$0xf]
    %v2020 = vld [vmem:[#allocation7 + $0xe0] sm:$0xf]
    %v2021 = vld [vmem:[#allocation7 + $0xe4] sm:$0xf]
    %v2022 = vld [vmem:[#allocation7 + $0xe8] sm:$0xf]
    %v2023 = vld [vmem:[#allocation7 + $0xec] sm:$0xf]
    %v2024 = vld [vmem:[#allocation7 + $0xf0] sm:$0xf]
    %v2025 = vld [vmem:[#allocation7 + $0xf4] sm:$0xf]
    %v2026 = vld [vmem:[#allocation7 + $0xf8] sm:$0xf]
    %v2027 = vld [vmem:[#allocation7 + $0xfc] sm:$0xf]
    %v2028 = vld [vmem:[#allocation7 + $0x100] sm:$0xf]
    %v2029 = vld [vmem:[#allocation7 + $0x104] sm:$0xf]
    %v2030 = vld [vmem:[#allocation7 + $0x108] sm:$0xf]
    %v2031 = vld [vmem:[#allocation7 + $0x10c] sm:$0xf]
    %v2032 = vld [vmem:[#allocation7 + $0x110] sm:$0xf]
    %v2033 = vld [vmem:[#allocation7 + $0x114] sm:$0xf]
    %v2034 = vld [vmem:[#allocation7 + $0x118] sm:$0xf]
    %v2035 = vld [vmem:[#allocation7 + $0x11c] sm:$0xf]
    %v2036 = vld [vmem:[#allocation7 + $0x120] sm:$0xf]
    %v2037 = vld [vmem:[#allocation7 + $0x124] sm:$0xf]
    %v2038 = vld [vmem:[#allocation7 + $0x128] sm:$0xf]
    %v2039 = vld [vmem:[#allocation7 + $0x12c] sm:$0xf]
    %v2040 = vld [vmem:[#allocation7 + $0x130] sm:$0xf]
    %v2041 = vld [vmem:[#allocation7 + $0x134] sm:$0xf]
    %v2042 = vld [vmem:[#allocation7 + $0x138] sm:$0xf]
    %v2043 = vld [vmem:[#allocation7 + $0x13c] sm:$0xf]
    %v2044 = vld [vmem:[#allocation7 + $0x140] sm:$0xf]
    %v2045 = vld [vmem:[#allocation7 + $0x144] sm:$0xf]
    %v2046 = vld [vmem:[#allocation7 + $0x148] sm:$0xf]
    %v2047 = vld [vmem:[#allocation7 + $0x14c] sm:$0xf]
    %v2048 = vld [vmem:[#allocation7 + $0x150] sm:$0xf]
    %v2049 = vld [vmem:[#allocation7 + $0x154] sm:$0xf]
    %v2050 = vld [vmem:[#allocation7 + $0x158] sm:$0xf]
    %v2051 = vld [vmem:[#allocation7 + $0x15c] sm:$0xf]
    %v2052 = vld [vmem:[#allocation7 + $0x160] sm:$0xf]
    %v2053 = vld [vmem:[#allocation7 + $0x164] sm:$0xf]
    %v2054 = vld [vmem:[#allocation7 + $0x168] sm:$0xf]
    %v2055 = vld [vmem:[#allocation7 + $0x16c] sm:$0xf]
    %v2056 = vld [vmem:[#allocation7 + $0x170] sm:$0xf]
    %v2057 = vld [vmem:[#allocation7 + $0x174] sm:$0xf]
    %v2058 = vld [vmem:[#allocation7 + $0x178] sm:$0xf]
    %v2059 = vld [vmem:[#allocation7 + $0x17c] sm:$0xf]
    %v2060 = vld [vmem:[#allocation7 + $0x180] sm:$0xf]
    %v2061 = vld [vmem:[#allocation7 + $0x184] sm:$0xf]
    %v2062 = vld [vmem:[#allocation7 + $0x188] sm:$0xf]
    %v2063 = vld [vmem:[#allocation7 + $0x18c] sm:$0xf]
    %v2064 = vld [vmem:[#allocation7 + $0x190] sm:$0xf]
    %v2065 = vld [vmem:[#allocation7 + $0x194] sm:$0xf]
    %v2066 = vld [vmem:[#allocation7 + $0x198] sm:$0xf]
    %v2067 = vld [vmem:[#allocation7 + $0x19c] sm:$0xf]
    %v2068 = vld [vmem:[#allocation7 + $0x1a0] sm:$0xf]
    %v2069 = vld [vmem:[#allocation7 + $0x1a4] sm:$0xf]
    %v2070 = vld [vmem:[#allocation7 + $0x1a8] sm:$0xf]
    %v2071 = vld [vmem:[#allocation7 + $0x1ac] sm:$0xf]
    %v2072 = vld [vmem:[#allocation7 + $0x1b0] sm:$0xf]
    %v2073 = vld [vmem:[#allocation7 + $0x1b4] sm:$0xf]
    %v2074 = vld [vmem:[#allocation7 + $0x1b8] sm:$0xf]
    %v2075 = vld [vmem:[#allocation7 + $0x1bc] sm:$0xf]
    %v2076 = vld [vmem:[#allocation7 + $0x1c0] sm:$0xf]
    %v2077 = vld [vmem:[#allocation7 + $0x1c4] sm:$0xf]
    %v2078 = vld [vmem:[#allocation7 + $0x1c8] sm:$0xf]
    %v2079 = vld [vmem:[#allocation7 + $0x1cc] sm:$0xf]
    %v2080 = vld [vmem:[#allocation7 + $0x1d0] sm:$0xf]
    %v2081 = vld [vmem:[#allocation7 + $0x1d4] sm:$0xf]
    %v2082 = vld [vmem:[#allocation7 + $0x1d8] sm:$0xf]
    %v2083 = vld [vmem:[#allocation7 + $0x1dc] sm:$0xf]
    %v2084 = vld [vmem:[#allocation7 + $0x1e0] sm:$0xf]
    %v2085 = vld [vmem:[#allocation7 + $0x1e4] sm:$0xf]
    %v2086 = vld [vmem:[#allocation7 + $0x1e8] sm:$0xf]
    %v2087 = vld [vmem:[#allocation7 + $0x1ec] sm:$0xf]
    %v2088 = vld [vmem:[#allocation7 + $0x1f0] sm:$0xf]
    %v2089 = vld [vmem:[#allocation7 + $0x1f4] sm:$0xf]
    %v2090 = vld [vmem:[#allocation7 + $0x1f8] sm:$0xf]
    %v2091 = vld [vmem:[#allocation7 + $0x1fc] sm:$0xf]
    %v2156 = vunpack.c.l.b16 %v2028
    %v2157 = vunpack.c.l.b16 %v2029
    %v2158 = vunpack.c.l.b16 %v2030
    %v2159 = vunpack.c.l.b16 %v2031
    %v2160 = vunpack.c.l.b16 %v2032
    %v2161 = vunpack.c.l.b16 %v2033
    %v2162 = vunpack.c.l.b16 %v2034
    %v2163 = vunpack.c.l.b16 %v2035
    %v2164 = vunpack.c.l.b16 %v2036
    %v2165 = vunpack.c.l.b16 %v2037
    %v2166 = vunpack.c.l.b16 %v2038
    %v2167 = vunpack.c.l.b16 %v2039
    %v2168 = vunpack.c.l.b16 %v2040
    %v2169 = vunpack.c.l.b16 %v2041
    %v2170 = vunpack.c.l.b16 %v2042
    %v2171 = vunpack.c.l.b16 %v2043
    %v2172 = vunpack.c.l.b16 %v2044
    %v2173 = vunpack.c.l.b16 %v2045
    %v2174 = vunpack.c.l.b16 %v2046
    %v2175 = vunpack.c.l.b16 %v2047
    %v2176 = vunpack.c.l.b16 %v2048
    %v2177 = vunpack.c.l.b16 %v2049
    %v2178 = vunpack.c.l.b16 %v2050
    %v2179 = vunpack.c.l.b16 %v2051
    %v2180 = vunpack.c.l.b16 %v2052
    %v2181 = vunpack.c.l.b16 %v2053
    %v2182 = vunpack.c.l.b16 %v2054
    %v2183 = vunpack.c.l.b16 %v2055
    %v2184 = vunpack.c.l.b16 %v2056
    %v2185 = vunpack.c.l.b16 %v2057
    %v2186 = vunpack.c.l.b16 %v2058
    %v2187 = vunpack.c.l.b16 %v2059
    %v2188 = vunpack.c.l.b16 %v2060
    %v2189 = vunpack.c.l.b16 %v2061
    %v2190 = vunpack.c.l.b16 %v2062
    %v2191 = vunpack.c.l.b16 %v2063
    %v2192 = vunpack.c.l.b16 %v2064
    %v2193 = vunpack.c.l.b16 %v2065
    %v2194 = vunpack.c.l.b16 %v2066
    %v2195 = vunpack.c.l.b16 %v2067
    %v2196 = vunpack.c.l.b16 %v2068
    %v2197 = vunpack.c.l.b16 %v2069
    %v2198 = vunpack.c.l.b16 %v2070
    %v2199 = vunpack.c.l.b16 %v2071
    %v2200 = vunpack.c.l.b16 %v2072
    %v2201 = vunpack.c.l.b16 %v2073
    %v2202 = vunpack.c.l.b16 %v2074
    %v2203 = vunpack.c.l.b16 %v2075
    %v2204 = vunpack.c.l.b16 %v2076
    %v2205 = vunpack.c.l.b16 %v2077
    %v2206 = vunpack.c.l.b16 %v2078
    %v2207 = vunpack.c.l.b16 %v2079
    %v2208 = vunpack.c.l.b16 %v2080
    %v2209 = vunpack.c.l.b16 %v2081
    %v2210 = vunpack.c.l.b16 %v2082
    %v2211 = vunpack.c.l.b16 %v2083
    %v2212 = vunpack.c.l.b16 %v2084
    %v2213 = vunpack.c.l.b16 %v2085
    %v2214 = vunpack.c.l.b16 %v2086
    %v2215 = vunpack.c.l.b16 %v2087
    %v2216 = vunpack.c.l.b16 %v2088
    %v2217 = vunpack.c.l.b16 %v2089
    %v2218 = vunpack.c.l.b16 %v2090
    %v2219 = vunpack.c.l.b16 %v2091
    %v2220 = vpack.c.b16 %v2157, %v2156
    %v2221 = vpack.c.b16 %v2159, %v2158
    %v2222 = vpack.c.b16 %v2161, %v2160
    %v2223 = vpack.c.b16 %v2163, %v2162
    %v2224 = vpack.c.b16 %v2165, %v2164
    %v2225 = vpack.c.b16 %v2167, %v2166
    %v2226 = vpack.c.b16 %v2169, %v2168
    %v2227 = vpack.c.b16 %v2171, %v2170
    %v2228 = vpack.c.b16 %v2173, %v2172
    %v2229 = vpack.c.b16 %v2175, %v2174
    %v2230 = vpack.c.b16 %v2177, %v2176
    %v2231 = vpack.c.b16 %v2179, %v2178
    %v2232 = vpack.c.b16 %v2181, %v2180
    %v2233 = vpack.c.b16 %v2183, %v2182
    %v2234 = vpack.c.b16 %v2185, %v2184
    %v2235 = vpack.c.b16 %v2187, %v2186
    %v2236 = vpack.c.b16 %v2189, %v2188
    %v2237 = vpack.c.b16 %v2191, %v2190
    %v2238 = vpack.c.b16 %v2193, %v2192
    %v2239 = vpack.c.b16 %v2195, %v2194
    %v2240 = vpack.c.b16 %v2197, %v2196
    %v2241 = vpack.c.b16 %v2199, %v2198
    %v2242 = vpack.c.b16 %v2201, %v2200
    %v2243 = vpack.c.b16 %v2203, %v2202
    %v2244 = vpack.c.b16 %v2205, %v2204
    %v2245 = vpack.c.b16 %v2207, %v2206
    %v2246 = vpack.c.b16 %v2209, %v2208
    %v2247 = vpack.c.b16 %v2211, %v2210
    %v2248 = vpack.c.b16 %v2213, %v2212
    %v2249 = vpack.c.b16 %v2215, %v2214
    %v2250 = vpack.c.b16 %v2217, %v2216
    %v2251 = vpack.c.b16 %v2219, %v2218
    %2284 = vmatprep.subr.bf16.mxu0 0
    %2285 = vmatpush1.bf16.msra.mxu0 %v2227
    %2286 = vmatprep.subr.bf16.mxu0 0
    %2287 = vmatpush1.bf16.msra.mxu0 %v2226
    %2288 = vmatprep.subr.bf16.mxu0 0
    %2289 = vmatpush1.bf16.msra.mxu0 %v2225
    %2290 = vmatprep.subr.bf16.mxu0 0
    %2291 = vmatpush1.bf16.msra.mxu0 %v2224
    %2292 = vmatprep.subr.bf16.mxu0 0
    %2293 = vmatpush1.bf16.msra.mxu0 %v2223
    %2294 = vmatprep.subr.bf16.mxu0 0
    %2295 = vmatpush1.bf16.msra.mxu0 %v2222
    %2296 = vmatprep.subr.bf16.mxu0 0
    %2297 = vmatpush1.bf16.msra.mxu0 %v2221
    %2298 = vmatprep.subr.bf16.mxu0 0
    %2299 = vmatpush1.bf16.msra.mxu0 %v2220
    %2300 = vmatprep.subr.bf16.mxu0 0
    %2301 = vmatpush2.bf16.msra.mxu0 %v2235
    %2302 = vmatprep.subr.bf16.mxu0 0
    %2303 = vmatpush2.bf16.msra.mxu0 %v2234
    %2304 = vmatprep.subr.bf16.mxu0 0
    %2305 = vmatpush2.bf16.msra.mxu0 %v2233
    %2306 = vmatprep.subr.bf16.mxu0 0
    %2307 = vmatpush2.bf16.msra.mxu0 %v2232
    %2308 = vmatprep.subr.bf16.mxu0 0
    %2309 = vmatpush2.bf16.msra.mxu0 %v2231
    %2310 = vmatprep.subr.bf16.mxu0 0
    %2311 = vmatpush2.bf16.msra.mxu0 %v2230
    %2312 = vmatprep.subr.bf16.mxu0 0
    %2313 = vmatpush2.bf16.msra.mxu0 %v2229
    %2314 = vmatprep.subr.bf16.mxu0 0
    %2315 = vmatpush2.bf16.msra.mxu0 %v2228
    %2316 = vmatprep.mubr.bf16.mxu0 %v1957
    %2317 = vmatmul.mubr.bf16.gmra.mxu0 %v1956
    %v2318 = vpop.f32.mrf.mxu0
    %v2319 = vadd.f32 0.0, %v2318
    %v2320 = vpop.f32.mrf.mxu0
    %v2321 = vpop.f32.mrf.mxu0
    %v2322 = vadd.f32 0.0, %v2321
    %v2323 = vpop.f32.mrf.mxu0
    %2324 = vmatprep.mubr.bf16.mxu0 %v1961
    %2325 = vmatmul.mubr.bf16.gmra.mxu0 %v1960
    %v2326 = vpop.f32.mrf.mxu0
    %v2327 = vadd.f32 0.0, %v2326
    %v2328 = vpop.f32.mrf.mxu0
    %v2329 = vpop.f32.mrf.mxu0
    %v2330 = vadd.f32 0.0, %v2329
    %v2331 = vpop.f32.mrf.mxu0
    %2332 = vdwg.mxu0
    %2333 = vmatprep.subr.bf16.mxu0 0
    %2334 = vmatpush1.bf16.msra.mxu0 %v2243
    %2335 = vmatprep.subr.bf16.mxu0 0
    %2336 = vmatpush1.bf16.msra.mxu0 %v2242
    %2337 = vmatprep.subr.bf16.mxu0 0
    %2338 = vmatpush1.bf16.msra.mxu0 %v2241
    %2339 = vmatprep.subr.bf16.mxu0 0
    %2340 = vmatpush1.bf16.msra.mxu0 %v2240
    %2341 = vmatprep.subr.bf16.mxu0 0
    %2342 = vmatpush1.bf16.msra.mxu0 %v2239
    %2343 = vmatprep.subr.bf16.mxu0 0
    %2344 = vmatpush1.bf16.msra.mxu0 %v2238
    %2345 = vmatprep.subr.bf16.mxu0 0
    %2346 = vmatpush1.bf16.msra.mxu0 %v2237
    %2347 = vmatprep.subr.bf16.mxu0 0
    %2348 = vmatpush1.bf16.msra.mxu0 %v2236
    %2349 = vmatprep.subr.bf16.mxu0 0
    %2350 = vmatpush2.bf16.msra.mxu0 %v2251
    %2351 = vmatprep.subr.bf16.mxu0 0
    %2352 = vmatpush2.bf16.msra.mxu0 %v2250
    %2353 = vmatprep.subr.bf16.mxu0 0
    %2354 = vmatpush2.bf16.msra.mxu0 %v2249
    %2355 = vmatprep.subr.bf16.mxu0 0
    %2356 = vmatpush2.bf16.msra.mxu0 %v2248
    %2357 = vmatprep.subr.bf16.mxu0 0
    %2358 = vmatpush2.bf16.msra.mxu0 %v2247
    %2359 = vmatprep.subr.bf16.mxu0 0
    %2360 = vmatpush2.bf16.msra.mxu0 %v2246
    %2361 = vmatprep.subr.bf16.mxu0 0
    %2362 = vmatpush2.bf16.msra.mxu0 %v2245
    %2363 = vmatprep.subr.bf16.mxu0 0
    %2364 = vmatpush2.bf16.msra.mxu0 %v2244
    %2365 = vmatprep.mubr.bf16.mxu0 %v1959
    %2366 = vmatmul.mubr.bf16.gmra.mxu0 %v1958
    %v2367 = vpop.f32.mrf.mxu0
    %v2368 = vadd.f32 %v2319, %v2367
    %v2369 = vpop.f32.mrf.mxu0
    %v2370 = vpop.f32.mrf.mxu0
    %v2371 = vadd.f32 %v2322, %v2370
    %v2372 = vpop.f32.mrf.mxu0
    %2373 = vmatprep.mubr.bf16.mxu0 %v1963
    %2374 = vmatmul.mubr.bf16.gmra.mxu0 %v1962
    %v2375 = vpop.f32.mrf.mxu0
    %v2376 = vadd.f32 %v2327, %v2375
    %v2377 = vpop.f32.mrf.mxu0
    %v2378 = vpop.f32.mrf.mxu0
    %v2379 = vadd.f32 %v2330, %v2378
    %v2380 = vpop.f32.mrf.mxu0
    %2381 = vdwg.mxu0
    %v2446 = vunpack.c.l.b16 %v1964
    %v2447 = vunpack.c.l.b16 %v1965
    %v2448 = vunpack.c.l.b16 %v1966
    %v2449 = vunpack.c.l.b16 %v1967
    %v2450 = vunpack.c.l.b16 %v1968
    %v2451 = vunpack.c.l.b16 %v1969
    %v2452 = vunpack.c.l.b16 %v1970
    %v2453 = vunpack.c.l.b16 %v1971
    %v2454 = vunpack.c.l.b16 %v1972
    %v2455 = vunpack.c.l.b16 %v1973
    %v2456 = vunpack.c.l.b16 %v1974
    %v2457 = vunpack.c.l.b16 %v1975
    %v2458 = vunpack.c.l.b16 %v1976
    %v2459 = vunpack.c.l.b16 %v1977
    %v2460 = vunpack.c.l.b16 %v1978
    %v2461 = vunpack.c.l.b16 %v1979
    %v2462 = vunpack.c.l.b16 %v1980
    %v2463 = vunpack.c.l.b16 %v1981
    %v2464 = vunpack.c.l.b16 %v1982
    %v2465 = vunpack.c.l.b16 %v1983
    %v2466 = vunpack.c.l.b16 %v1984
    %v2467 = vunpack.c.l.b16 %v1985
    %v2468 = vunpack.c.l.b16 %v1986
    %v2469 = vunpack.c.l.b16 %v1987
    %v2470 = vunpack.c.l.b16 %v1988
    %v2471 = vunpack.c.l.b16 %v1989
    %v2472 = vunpack.c.l.b16 %v1990
    %v2473 = vunpack.c.l.b16 %v1991
    %v2474 = vunpack.c.l.b16 %v1992
    %v2475 = vunpack.c.l.b16 %v1993
    %v2476 = vunpack.c.l.b16 %v1994
    %v2477 = vunpack.c.l.b16 %v1995
    %v2478 = vunpack.c.l.b16 %v1996
    %v2479 = vunpack.c.l.b16 %v1997
    %v2480 = vunpack.c.l.b16 %v1998
    %v2481 = vunpack.c.l.b16 %v1999
    %v2482 = vunpack.c.l.b16 %v2000
    %v2483 = vunpack.c.l.b16 %v2001
    %v2484 = vunpack.c.l.b16 %v2002
    %v2485 = vunpack.c.l.b16 %v2003
    %v2486 = vunpack.c.l.b16 %v2004
    %v2487 = vunpack.c.l.b16 %v2005
    %v2488 = vunpack.c.l.b16 %v2006
    %v2489 = vunpack.c.l.b16 %v2007
    %v2490 = vunpack.c.l.b16 %v2008
    %v2491 = vunpack.c.l.b16 %v2009
    %v2492 = vunpack.c.l.b16 %v2010
    %v2493 = vunpack.c.l.b16 %v2011
    %v2494 = vunpack.c.l.b16 %v2012
    %v2495 = vunpack.c.l.b16 %v2013
    %v2496 = vunpack.c.l.b16 %v2014
    %v2497 = vunpack.c.l.b16 %v2015
    %v2498 = vunpack.c.l.b16 %v2016
    %v2499 = vunpack.c.l.b16 %v2017
    %v2500 = vunpack.c.l.b16 %v2018
    %v2501 = vunpack.c.l.b16 %v2019
    %v2502 = vunpack.c.l.b16 %v2020
    %v2503 = vunpack.c.l.b16 %v2021
    %v2504 = vunpack.c.l.b16 %v2022
    %v2505 = vunpack.c.l.b16 %v2023
    %v2506 = vunpack.c.l.b16 %v2024
    %v2507 = vunpack.c.l.b16 %v2025
    %v2508 = vunpack.c.l.b16 %v2026
    %v2509 = vunpack.c.l.b16 %v2027
    %v2510 = vpack.c.b16 %v2447, %v2446
    %v2511 = vpack.c.b16 %v2449, %v2448
    %v2512 = vpack.c.b16 %v2451, %v2450
    %v2513 = vpack.c.b16 %v2453, %v2452
    %v2514 = vpack.c.b16 %v2455, %v2454
    %v2515 = vpack.c.b16 %v2457, %v2456
    %v2516 = vpack.c.b16 %v2459, %v2458
    %v2517 = vpack.c.b16 %v2461, %v2460
    %v2518 = vpack.c.b16 %v2463, %v2462
    %v2519 = vpack.c.b16 %v2465, %v2464
    %v2520 = vpack.c.b16 %v2467, %v2466
    %v2521 = vpack.c.b16 %v2469, %v2468
    %v2522 = vpack.c.b16 %v2471, %v2470
    %v2523 = vpack.c.b16 %v2473, %v2472
    %v2524 = vpack.c.b16 %v2475, %v2474
    %v2525 = vpack.c.b16 %v2477, %v2476
    %v2526 = vpack.c.b16 %v2479, %v2478
    %v2527 = vpack.c.b16 %v2481, %v2480
    %v2528 = vpack.c.b16 %v2483, %v2482
    %v2529 = vpack.c.b16 %v2485, %v2484
    %v2530 = vpack.c.b16 %v2487, %v2486
    %v2531 = vpack.c.b16 %v2489, %v2488
    %v2532 = vpack.c.b16 %v2491, %v2490
    %v2533 = vpack.c.b16 %v2493, %v2492
    %v2534 = vpack.c.b16 %v2495, %v2494
    %v2535 = vpack.c.b16 %v2497, %v2496
    %v2536 = vpack.c.b16 %v2499, %v2498
    %v2537 = vpack.c.b16 %v2501, %v2500
    %v2538 = vpack.c.b16 %v2503, %v2502
    %v2539 = vpack.c.b16 %v2505, %v2504
    %v2540 = vpack.c.b16 %v2507, %v2506
    %v2541 = vpack.c.b16 %v2509, %v2508
    %2574 = vmatprep.subr.bf16.mxu0 0
    %2575 = vmatpush1.bf16.msra.mxu0 %v2517
    %2576 = vmatprep.subr.bf16.mxu0 0
    %2577 = vmatpush1.bf16.msra.mxu0 %v2516
    %2578 = vmatprep.subr.bf16.mxu0 0
    %2579 = vmatpush1.bf16.msra.mxu0 %v2515
    %2580 = vmatprep.subr.bf16.mxu0 0
    %2581 = vmatpush1.bf16.msra.mxu0 %v2514
    %2582 = vmatprep.subr.bf16.mxu0 0
    %2583 = vmatpush1.bf16.msra.mxu0 %v2513
    %2584 = vmatprep.subr.bf16.mxu0 0
    %2585 = vmatpush1.bf16.msra.mxu0 %v2512
    %2586 = vmatprep.subr.bf16.mxu0 0
    %2587 = vmatpush1.bf16.msra.mxu0 %v2511
    %2588 = vmatprep.subr.bf16.mxu0 0
    %2589 = vmatpush1.bf16.msra.mxu0 %v2510
    %2590 = vmatprep.subr.bf16.mxu0 0
    %2591 = vmatpush2.bf16.msra.mxu0 %v2525
    %2592 = vmatprep.subr.bf16.mxu0 0
    %2593 = vmatpush2.bf16.msra.mxu0 %v2524
    %2594 = vmatprep.subr.bf16.mxu0 0
    %2595 = vmatpush2.bf16.msra.mxu0 %v2523
    %2596 = vmatprep.subr.bf16.mxu0 0
    %2597 = vmatpush2.bf16.msra.mxu0 %v2522
    %2598 = vmatprep.subr.bf16.mxu0 0
    %2599 = vmatpush2.bf16.msra.mxu0 %v2521
    %2600 = vmatprep.subr.bf16.mxu0 0
    %2601 = vmatpush2.bf16.msra.mxu0 %v2520
    %2602 = vmatprep.subr.bf16.mxu0 0
    %2603 = vmatpush2.bf16.msra.mxu0 %v2519
    %2604 = vmatprep.subr.bf16.mxu0 0
    %2605 = vmatpush2.bf16.msra.mxu0 %v2518
    %2606 = vmatprep.mubr.bf16.mxu0 %v1933
    %2607 = vmatmul.mubr.bf16.gmra.mxu0 %v1932
    %v2608 = vpop.f32.mrf.mxu0
    %v2609 = vadd.f32 %v2368, %v2608
    %v2610 = vpop.f32.mrf.mxu0
    %v2611 = vpop.f32.mrf.mxu0
    %v2612 = vadd.f32 %v2371, %v2611
    %v2613 = vpop.f32.mrf.mxu0
    %2614 = vmatprep.mubr.bf16.mxu0 %v1937
    %2615 = vmatmul.mubr.bf16.gmra.mxu0 %v1936
    %v2616 = vpop.f32.mrf.mxu0
    %v2617 = vadd.f32 %v2376, %v2616
    %v2618 = vpop.f32.mrf.mxu0
    %v2619 = vpop.f32.mrf.mxu0
    %v2620 = vadd.f32 %v2379, %v2619
    %v2621 = vpop.f32.mrf.mxu0
    %2622 = vdwg.mxu0
    %2623 = vmatprep.subr.bf16.mxu0 0
    %2624 = vmatpush1.bf16.msra.mxu0 %v2533
    %2625 = vmatprep.subr.bf16.mxu0 0
    %2626 = vmatpush1.bf16.msra.mxu0 %v2532
    %2627 = vmatprep.subr.bf16.mxu0 0
    %2628 = vmatpush1.bf16.msra.mxu0 %v2531
    %2629 = vmatprep.subr.bf16.mxu0 0
    %2630 = vmatpush1.bf16.msra.mxu0 %v2530
    %2631 = vmatprep.subr.bf16.mxu0 0
    %2632 = vmatpush1.bf16.msra.mxu0 %v2529
    %2633 = vmatprep.subr.bf16.mxu0 0
    %2634 = vmatpush1.bf16.msra.mxu0 %v2528
    %2635 = vmatprep.subr.bf16.mxu0 0
    %2636 = vmatpush1.bf16.msra.mxu0 %v2527
    %2637 = vmatprep.subr.bf16.mxu0 0
    %2638 = vmatpush1.bf16.msra.mxu0 %v2526
    %2639 = vmatprep.subr.bf16.mxu0 0
    %2640 = vmatpush2.bf16.msra.mxu0 %v2541
    %2641 = vmatprep.subr.bf16.mxu0 0
    %2642 = vmatpush2.bf16.msra.mxu0 %v2540
    %2643 = vmatprep.subr.bf16.mxu0 0
    %2644 = vmatpush2.bf16.msra.mxu0 %v2539
    %2645 = vmatprep.subr.bf16.mxu0 0
    %2646 = vmatpush2.bf16.msra.mxu0 %v2538
    %2647 = vmatprep.subr.bf16.mxu0 0
    %2648 = vmatpush2.bf16.msra.mxu0 %v2537
    %2649 = vmatprep.subr.bf16.mxu0 0
    %2650 = vmatpush2.bf16.msra.mxu0 %v2536
    %2651 = vmatprep.subr.bf16.mxu0 0
    %2652 = vmatpush2.bf16.msra.mxu0 %v2535
    %2653 = vmatprep.subr.bf16.mxu0 0
    %2654 = vmatpush2.bf16.msra.mxu0 %v2534
    %2655 = vmatprep.mubr.bf16.mxu0 %v1935
    %2656 = vmatmul.mubr.bf16.gmra.mxu0 %v1934
    %v2657 = vpop.f32.mrf.mxu0
    %v2658 = vadd.f32 %v2609, %v2657
    %v2659 = vpop.f32.mrf.mxu0
    %v2660 = vpop.f32.mrf.mxu0
    %v2661 = vadd.f32 %v2612, %v2660
    %v2662 = vpop.f32.mrf.mxu0
    %2663 = vmatprep.mubr.bf16.mxu0 %v1939
    %2664 = vmatmul.mubr.bf16.gmra.mxu0 %v1938
    %v2665 = vpop.f32.mrf.mxu0
    %v2666 = vadd.f32 %v2617, %v2665
    %v2667 = vpop.f32.mrf.mxu0
    %v2668 = vpop.f32.mrf.mxu0
    %v2669 = vadd.f32 %v2620, %v2668
    %v2670 = vpop.f32.mrf.mxu0
    %2671 = vdwg.mxu0
    %v2672 = vpack.c.bf16 %v2661, %v2658
    %v2673 = vpack.c.bf16 %v2669, %v2666
    %2674 = vmatprep.subr.bf16.mxu0 %v535
    %2675 = vmatpush1.bf16.msra.mxu0 %v534
    %2676 = vmatprep.subr.bf16.mxu0 %v527
    %2677 = vmatpush1.bf16.msra.mxu0 %v526
    %2678 = vmatprep.subr.bf16.mxu0 %v519
    %2679 = vmatpush1.bf16.msra.mxu0 %v518
    %2680 = vmatprep.subr.bf16.mxu0 %v511
    %2681 = vmatpush1.bf16.msra.mxu0 %v510
    %2682 = vmatprep.subr.bf16.mxu0 %v503
    %2683 = vmatpush1.bf16.msra.mxu0 %v502
    %2684 = vmatprep.subr.bf16.mxu0 %v495
    %2685 = vmatpush1.bf16.msra.mxu0 %v494
    %2686 = vmatprep.subr.bf16.mxu0 %v487
    %2687 = vmatpush1.bf16.msra.mxu0 %v486
    %2688 = vmatprep.subr.bf16.mxu0 %v479
    %2689 = vmatpush1.bf16.msra.mxu0 %v478
    %2690 = vmatprep.subr.bf16.mxu0 0
    %2691 = vmatpush2.bf16.msra.mxu0 0
    %2692 = vmatprep.subr.bf16.mxu0 0
    %2693 = vmatpush2.bf16.msra.mxu0 0
    %2694 = vmatprep.subr.bf16.mxu0 0
    %2695 = vmatpush2.bf16.msra.mxu0 0
    %2696 = vmatprep.subr.bf16.mxu0 0
    %2697 = vmatpush2.bf16.msra.mxu0 0
    %2698 = vmatprep.subr.bf16.mxu0 0
    %2699 = vmatpush2.bf16.msra.mxu0 0
    %2700 = vmatprep.subr.bf16.mxu0 0
    %2701 = vmatpush2.bf16.msra.mxu0 0
    %2702 = vmatprep.subr.bf16.mxu0 0
    %2703 = vmatpush2.bf16.msra.mxu0 0
    %2704 = vmatprep.subr.bf16.mxu0 0
    %2705 = vmatpush2.bf16.msra.mxu0 0
    %2706 = vmatprep.mubr.bf16.mxu0 0
    %2707 = vmatmul.mubr.bf16.gmra.mxu0 %v2672
    %v2708 = vpop.f32.mrf.mxu0
    %v2709 = vadd.f32 0.0, %v2708
    %v2710 = vpop.f32.mrf.mxu0
    %v2711 = vadd.f32 0.0, %v2710
    %v2712 = vpop.f32.mrf.mxu0
    %v2713 = vadd.f32 0.0, %v2712
    %v2714 = vpop.f32.mrf.mxu0
    %v2715 = vadd.f32 0.0, %v2714
    %2716 = vmatprep.mubr.bf16.mxu0 0
    %2717 = vmatmul.mubr.bf16.gmra.mxu0 %v2673
    %v2718 = vpop.f32.mrf.mxu0
    %v2719 = vadd.f32 0.0, %v2718
    %v2720 = vpop.f32.mrf.mxu0
    %v2721 = vadd.f32 0.0, %v2720
    %v2722 = vpop.f32.mrf.mxu0
    %v2723 = vadd.f32 0.0, %v2722
    %v2724 = vpop.f32.mrf.mxu0
    %v2725 = vadd.f32 0.0, %v2724
    %2726 = vdwg.mxu0
    %2727 = vmatprep.subr.bf16.mxu0 %v537
    %2728 = vmatpush1.bf16.msra.mxu0 %v536
    %2729 = vmatprep.subr.bf16.mxu0 %v529
    %2730 = vmatpush1.bf16.msra.mxu0 %v528
    %2731 = vmatprep.subr.bf16.mxu0 %v521
    %2732 = vmatpush1.bf16.msra.mxu0 %v520
    %2733 = vmatprep.subr.bf16.mxu0 %v513
    %2734 = vmatpush1.bf16.msra.mxu0 %v512
    %2735 = vmatprep.subr.bf16.mxu0 %v505
    %2736 = vmatpush1.bf16.msra.mxu0 %v504
    %2737 = vmatprep.subr.bf16.mxu0 %v497
    %2738 = vmatpush1.bf16.msra.mxu0 %v496
    %2739 = vmatprep.subr.bf16.mxu0 %v489
    %2740 = vmatpush1.bf16.msra.mxu0 %v488
    %2741 = vmatprep.subr.bf16.mxu0 %v481
    %2742 = vmatpush1.bf16.msra.mxu0 %v480
    %2743 = vmatprep.subr.bf16.mxu0 0
    %2744 = vmatpush2.bf16.msra.mxu0 0
    %2745 = vmatprep.subr.bf16.mxu0 0
    %2746 = vmatpush2.bf16.msra.mxu0 0
    %2747 = vmatprep.subr.bf16.mxu0 0
    %2748 = vmatpush2.bf16.msra.mxu0 0
    %2749 = vmatprep.subr.bf16.mxu0 0
    %2750 = vmatpush2.bf16.msra.mxu0 0
    %2751 = vmatprep.subr.bf16.mxu0 0
    %2752 = vmatpush2.bf16.msra.mxu0 0
    %2753 = vmatprep.subr.bf16.mxu0 0
    %2754 = vmatpush2.bf16.msra.mxu0 0
    %2755 = vmatprep.subr.bf16.mxu0 0
    %2756 = vmatpush2.bf16.msra.mxu0 0
    %2757 = vmatprep.subr.bf16.mxu0 0
    %2758 = vmatpush2.bf16.msra.mxu0 0
    %2759 = vmatprep.mubr.bf16.mxu0 0
    %2760 = vmatmul.mubr.bf16.gmra.mxu0 %v2672
    %v2761 = vpop.f32.mrf.mxu0
    %v2762 = vadd.f32 0.0, %v2761
    %v2763 = vpop.f32.mrf.mxu0
    %v2764 = vadd.f32 0.0, %v2763
    %v2765 = vpop.f32.mrf.mxu0
    %v2766 = vadd.f32 0.0, %v2765
    %v2767 = vpop.f32.mrf.mxu0
    %v2768 = vadd.f32 0.0, %v2767
    %2769 = vmatprep.mubr.bf16.mxu0 0
    %2770 = vmatmul.mubr.bf16.gmra.mxu0 %v2673
    %v2771 = vpop.f32.mrf.mxu0
    %v2772 = vadd.f32 0.0, %v2771
    %v2773 = vpop.f32.mrf.mxu0
    %v2774 = vadd.f32 0.0, %v2773
    %v2775 = vpop.f32.mrf.mxu0
    %v2776 = vadd.f32 0.0, %v2775
    %v2777 = vpop.f32.mrf.mxu0
    %v2778 = vadd.f32 0.0, %v2777
    %2779 = vdwg.mxu0
    %2780 = vmatprep.subr.bf16.mxu0 %v539
    %2781 = vmatpush1.bf16.msra.mxu0 %v538
    %2782 = vmatprep.subr.bf16.mxu0 %v531
    %2783 = vmatpush1.bf16.msra.mxu0 %v530
    %2784 = vmatprep.subr.bf16.mxu0 %v523
    %2785 = vmatpush1.bf16.msra.mxu0 %v522
    %2786 = vmatprep.subr.bf16.mxu0 %v515
    %2787 = vmatpush1.bf16.msra.mxu0 %v514
    %2788 = vmatprep.subr.bf16.mxu0 %v507
    %2789 = vmatpush1.bf16.msra.mxu0 %v506
    %2790 = vmatprep.subr.bf16.mxu0 %v499
    %2791 = vmatpush1.bf16.msra.mxu0 %v498
    %2792 = vmatprep.subr.bf16.mxu0 %v491
    %2793 = vmatpush1.bf16.msra.mxu0 %v490
    %2794 = vmatprep.subr.bf16.mxu0 %v483
    %2795 = vmatpush1.bf16.msra.mxu0 %v482
    %2796 = vmatprep.subr.bf16.mxu0 0
    %2797 = vmatpush2.bf16.msra.mxu0 0
    %2798 = vmatprep.subr.bf16.mxu0 0
    %2799 = vmatpush2.bf16.msra.mxu0 0
    %2800 = vmatprep.subr.bf16.mxu0 0
    %2801 = vmatpush2.bf16.msra.mxu0 0
    %2802 = vmatprep.subr.bf16.mxu0 0
    %2803 = vmatpush2.bf16.msra.mxu0 0
    %2804 = vmatprep.subr.bf16.mxu0 0
    %2805 = vmatpush2.bf16.msra.mxu0 0
    %2806 = vmatprep.subr.bf16.mxu0 0
    %2807 = vmatpush2.bf16.msra.mxu0 0
    %2808 = vmatprep.subr.bf16.mxu0 0
    %2809 = vmatpush2.bf16.msra.mxu0 0
    %2810 = vmatprep.subr.bf16.mxu0 0
    %2811 = vmatpush2.bf16.msra.mxu0 0
    %2812 = vmatprep.mubr.bf16.mxu0 0
    %2813 = vmatmul.mubr.bf16.gmra.mxu0 %v2672
    %v2814 = vpop.f32.mrf.mxu0
    %v2815 = vadd.f32 0.0, %v2814
    %v2816 = vpop.f32.mrf.mxu0
    %v2817 = vadd.f32 0.0, %v2816
    %v2818 = vpop.f32.mrf.mxu0
    %v2819 = vadd.f32 0.0, %v2818
    %v2820 = vpop.f32.mrf.mxu0
    %v2821 = vadd.f32 0.0, %v2820
    %2822 = vmatprep.mubr.bf16.mxu0 0
    %2823 = vmatmul.mubr.bf16.gmra.mxu0 %v2673
    %v2824 = vpop.f32.mrf.mxu0
    %v2825 = vadd.f32 0.0, %v2824
    %v2826 = vpop.f32.mrf.mxu0
    %v2827 = vadd.f32 0.0, %v2826
    %v2828 = vpop.f32.mrf.mxu0
    %v2829 = vadd.f32 0.0, %v2828
    %v2830 = vpop.f32.mrf.mxu0
    %v2831 = vadd.f32 0.0, %v2830
    %2832 = vdwg.mxu0
    %2833 = vmatprep.subr.bf16.mxu0 %v541
    %2834 = vmatpush1.bf16.msra.mxu0 %v540
    %2835 = vmatprep.subr.bf16.mxu0 %v533
    %2836 = vmatpush1.bf16.msra.mxu0 %v532
    %2837 = vmatprep.subr.bf16.mxu0 %v525
    %2838 = vmatpush1.bf16.msra.mxu0 %v524
    %2839 = vmatprep.subr.bf16.mxu0 %v517
    %2840 = vmatpush1.bf16.msra.mxu0 %v516
    %2841 = vmatprep.subr.bf16.mxu0 %v509
    %2842 = vmatpush1.bf16.msra.mxu0 %v508
    %2843 = vmatprep.subr.bf16.mxu0 %v501
    %2844 = vmatpush1.bf16.msra.mxu0 %v500
    %2845 = vmatprep.subr.bf16.mxu0 %v493
    %2846 = vmatpush1.bf16.msra.mxu0 %v492
    %2847 = vmatprep.subr.bf16.mxu0 %v485
    %2848 = vmatpush1.bf16.msra.mxu0 %v484
    %2849 = vmatprep.subr.bf16.mxu0 0
    %2850 = vmatpush2.bf16.msra.mxu0 0
    %2851 = vmatprep.subr.bf16.mxu0 0
    %2852 = vmatpush2.bf16.msra.mxu0 0
    %2853 = vmatprep.subr.bf16.mxu0 0
    %2854 = vmatpush2.bf16.msra.mxu0 0
    %2855 = vmatprep.subr.bf16.mxu0 0
    %2856 = vmatpush2.bf16.msra.mxu0 0
    %2857 = vmatprep.subr.bf16.mxu0 0
    %2858 = vmatpush2.bf16.msra.mxu0 0
    %2859 = vmatprep.subr.bf16.mxu0 0
    %2860 = vmatpush2.bf16.msra.mxu0 0
    %2861 = vmatprep.subr.bf16.mxu0 0
    %2862 = vmatpush2.bf16.msra.mxu0 0
    %2863 = vmatprep.subr.bf16.mxu0 0
    %2864 = vmatpush2.bf16.msra.mxu0 0
    %2865 = vmatprep.mubr.bf16.mxu0 0
    %2866 = vmatmul.mubr.bf16.gmra.mxu0 %v2672
    %v2867 = vpop.f32.mrf.mxu0
    %v2868 = vadd.f32 0.0, %v2867
    %v2869 = vpop.f32.mrf.mxu0
    %v2870 = vadd.f32 0.0, %v2869
    %v2871 = vpop.f32.mrf.mxu0
    %v2872 = vadd.f32 0.0, %v2871
    %v2873 = vpop.f32.mrf.mxu0
    %v2874 = vadd.f32 0.0, %v2873
    %2875 = vmatprep.mubr.bf16.mxu0 0
    %2876 = vmatmul.mubr.bf16.gmra.mxu0 %v2673
    %v2877 = vpop.f32.mrf.mxu0
    %v2878 = vadd.f32 0.0, %v2877
    %v2879 = vpop.f32.mrf.mxu0
    %v2880 = vadd.f32 0.0, %v2879
    %v2881 = vpop.f32.mrf.mxu0
    %v2882 = vadd.f32 0.0, %v2881
    %v2883 = vpop.f32.mrf.mxu0
    %v2884 = vadd.f32 0.0, %v2883
    %2885 = vdwg.mxu0
    %v2886 = vmul.f32 %v2709, 0.5
    %v2887 = vmul.f32 %v2711, 0.5
    %v2888 = vmul.f32 %v2762, 0.5
    %v2889 = vmul.f32 %v2764, 0.5
    %v2890 = vmul.f32 %v2713, 0.5
    %v2891 = vmul.f32 %v2715, 0.5
    %v2892 = vmul.f32 %v2766, 0.5
    %v2893 = vmul.f32 %v2768, 0.5
    %v2894 = vmul.f32 %v2719, 0.5
    %v2895 = vmul.f32 %v2721, 0.5
    %v2896 = vmul.f32 %v2772, 0.5
    %v2897 = vmul.f32 %v2774, 0.5
    %v2898 = vmul.f32 %v2723, 0.5
    %v2899 = vmul.f32 %v2725, 0.5
    %v2900 = vmul.f32 %v2776, 0.5
    %v2901 = vmul.f32 %v2778, 0.5
    %v2902 = vtanh.pop %v2886
    %v2903 = vtanh.pop %v2887
    %v2904 = vtanh.pop %v2888
    %v2905 = vtanh.pop %v2889
    %v2906 = vtanh.pop %v2890
    %v2907 = vtanh.pop %v2891
    %v2908 = vtanh.pop %v2892
    %v2909 = vtanh.pop %v2893
    %v2910 = vtanh.pop %v2894
    %v2911 = vtanh.pop %v2895
    %v2912 = vtanh.pop %v2896
    %v2913 = vtanh.pop %v2897
    %v2914 = vtanh.pop %v2898
    %v2915 = vtanh.pop %v2899
    %v2916 = vtanh.pop %v2900
    %v2917 = vtanh.pop %v2901
    %v2918 = vadd.f32 %v2902, 1.0
    %v2919 = vadd.f32 %v2903, 1.0
    %v2920 = vadd.f32 %v2904, 1.0
    %v2921 = vadd.f32 %v2905, 1.0
    %v2922 = vadd.f32 %v2906, 1.0
    %v2923 = vadd.f32 %v2907, 1.0
    %v2924 = vadd.f32 %v2908, 1.0
    %v2925 = vadd.f32 %v2909, 1.0
    %v2926 = vadd.f32 %v2910, 1.0
    %v2927 = vadd.f32 %v2911, 1.0
    %v2928 = vadd.f32 %v2912, 1.0
    %v2929 = vadd.f32 %v2913, 1.0
    %v2930 = vadd.f32 %v2914, 1.0
    %v2931 = vadd.f32 %v2915, 1.0
    %v2932 = vadd.f32 %v2916, 1.0
    %v2933 = vadd.f32 %v2917, 1.0
    %v2934 = vmul.f32 %v2918, 0.5
    %v2935 = vmul.f32 %v2919, 0.5
    %v2936 = vmul.f32 %v2920, 0.5
    %v2937 = vmul.f32 %v2921, 0.5
    %v2938 = vmul.f32 %v2922, 0.5
    %v2939 = vmul.f32 %v2923, 0.5
    %v2940 = vmul.f32 %v2924, 0.5
    %v2941 = vmul.f32 %v2925, 0.5
    %v2942 = vmul.f32 %v2926, 0.5
    %v2943 = vmul.f32 %v2927, 0.5
    %v2944 = vmul.f32 %v2928, 0.5
    %v2945 = vmul.f32 %v2929, 0.5
    %v2946 = vmul.f32 %v2930, 0.5
    %v2947 = vmul.f32 %v2931, 0.5
    %v2948 = vmul.f32 %v2932, 0.5
    %v2949 = vmul.f32 %v2933, 0.5
    %v2950 = vmul.f32 %v2709, %v2934
    %v2951 = vmul.f32 %v2711, %v2935
    %v2952 = vmul.f32 %v2762, %v2936
    %v2953 = vmul.f32 %v2764, %v2937
    %v2954 = vmul.f32 %v2713, %v2938
    %v2955 = vmul.f32 %v2715, %v2939
    %v2956 = vmul.f32 %v2766, %v2940
    %v2957 = vmul.f32 %v2768, %v2941
    %v2958 = vmul.f32 %v2719, %v2942
    %v2959 = vmul.f32 %v2721, %v2943
    %v2960 = vmul.f32 %v2772, %v2944
    %v2961 = vmul.f32 %v2774, %v2945
    %v2962 = vmul.f32 %v2723, %v2946
    %v2963 = vmul.f32 %v2725, %v2947
    %v2964 = vmul.f32 %v2776, %v2948
    %v2965 = vmul.f32 %v2778, %v2949
    %v2966 = vpack.c.bf16 %v2954, %v2950
    %v2967 = vpack.c.bf16 %v2955, %v2951
    %v2968 = vpack.c.bf16 %v2956, %v2952
    %v2969 = vpack.c.bf16 %v2957, %v2953
    %v2970 = vpack.c.bf16 %v2962, %v2958
    %v2971 = vpack.c.bf16 %v2963, %v2959
    %v2972 = vpack.c.bf16 %v2964, %v2960
    %v2973 = vpack.c.bf16 %v2965, %v2961
    %v2974 = vtanh.pop %v2815
    %v2975 = vtanh.pop %v2817
    %v2976 = vtanh.pop %v2868
    %v2977 = vtanh.pop %v2870
    %v2978 = vtanh.pop %v2819
    %v2979 = vtanh.pop %v2821
    %v2980 = vtanh.pop %v2872
    %v2981 = vtanh.pop %v2874
    %v2982 = vtanh.pop %v2825
    %v2983 = vtanh.pop %v2827
    %v2984 = vtanh.pop %v2878
    %v2985 = vtanh.pop %v2880
    %v2986 = vtanh.pop %v2829
    %v2987 = vtanh.pop %v2831
    %v2988 = vtanh.pop %v2882
    %v2989 = vtanh.pop %v2884
    %v2990 = vpack.c.bf16 %v2978, %v2974
    %v2991 = vpack.c.bf16 %v2979, %v2975
    %v2992 = vpack.c.bf16 %v2980, %v2976
    %v2993 = vpack.c.bf16 %v2981, %v2977
    %v2994 = vpack.c.bf16 %v2986, %v2982
    %v2995 = vpack.c.bf16 %v2987, %v2983
    %v2996 = vpack.c.bf16 %v2988, %v2984
    %v2997 = vpack.c.bf16 %v2989, %v2985
    %v2998 = vld [vmem:[#allocation8] sm:$0xf]
    %v2999 = vld [vmem:[#allocation8 + $0x4] sm:$0xf]
    %v3000 = vld [vmem:[#allocation8 + $0x8] sm:$0xf]
    %v3001 = vld [vmem:[#allocation8 + $0xc] sm:$0xf]
    %v3002 = vld [vmem:[#allocation8 + $0x10] sm:$0xf]
    %v3003 = vld [vmem:[#allocation8 + $0x14] sm:$0xf]
    %v3004 = vld [vmem:[#allocation8 + $0x18] sm:$0xf]
    %v3005 = vld [vmem:[#allocation8 + $0x1c] sm:$0xf]
    %v3006 = vld [vmem:[#allocation8 + $0x20] sm:$0xf]
    %v3007 = vld [vmem:[#allocation8 + $0x24] sm:$0xf]
    %v3008 = vld [vmem:[#allocation8 + $0x28] sm:$0xf]
    %v3009 = vld [vmem:[#allocation8 + $0x2c] sm:$0xf]
    %v3010 = vld [vmem:[#allocation8 + $0x30] sm:$0xf]
    %v3011 = vld [vmem:[#allocation8 + $0x34] sm:$0xf]
    %v3012 = vld [vmem:[#allocation8 + $0x38] sm:$0xf]
    %v3013 = vld [vmem:[#allocation8 + $0x3c] sm:$0xf]
    %v3014 = vld [vmem:[#allocation8 + $0x40] sm:$0xf]
    %v3015 = vld [vmem:[#allocation8 + $0x44] sm:$0xf]
    %v3016 = vld [vmem:[#allocation8 + $0x48] sm:$0xf]
    %v3017 = vld [vmem:[#allocation8 + $0x4c] sm:$0xf]
    %v3018 = vld [vmem:[#allocation8 + $0x50] sm:$0xf]
    %v3019 = vld [vmem:[#allocation8 + $0x54] sm:$0xf]
    %v3020 = vld [vmem:[#allocation8 + $0x58] sm:$0xf]
    %v3021 = vld [vmem:[#allocation8 + $0x5c] sm:$0xf]
    %v3022 = vld [vmem:[#allocation8 + $0x60] sm:$0xf]
    %v3023 = vld [vmem:[#allocation8 + $0x64] sm:$0xf]
    %v3024 = vld [vmem:[#allocation8 + $0x68] sm:$0xf]
    %v3025 = vld [vmem:[#allocation8 + $0x6c] sm:$0xf]
    %v3026 = vld [vmem:[#allocation8 + $0x70] sm:$0xf]
    %v3027 = vld [vmem:[#allocation8 + $0x74] sm:$0xf]
    %v3028 = vld [vmem:[#allocation8 + $0x78] sm:$0xf]
    %v3029 = vld [vmem:[#allocation8 + $0x7c] sm:$0xf]
    %v3030 = vld [vmem:[#allocation8 + $0x80] sm:$0xf]
    %v3031 = vld [vmem:[#allocation8 + $0x84] sm:$0xf]
    %v3032 = vld [vmem:[#allocation8 + $0x88] sm:$0xf]
    %v3033 = vld [vmem:[#allocation8 + $0x8c] sm:$0xf]
    %v3034 = vld [vmem:[#allocation8 + $0x90] sm:$0xf]
    %v3035 = vld [vmem:[#allocation8 + $0x94] sm:$0xf]
    %v3036 = vld [vmem:[#allocation8 + $0x98] sm:$0xf]
    %v3037 = vld [vmem:[#allocation8 + $0x9c] sm:$0xf]
    %v3038 = vld [vmem:[#allocation8 + $0xa0] sm:$0xf]
    %v3039 = vld [vmem:[#allocation8 + $0xa4] sm:$0xf]
    %v3040 = vld [vmem:[#allocation8 + $0xa8] sm:$0xf]
    %v3041 = vld [vmem:[#allocation8 + $0xac] sm:$0xf]
    %v3042 = vld [vmem:[#allocation8 + $0xb0] sm:$0xf]
    %v3043 = vld [vmem:[#allocation8 + $0xb4] sm:$0xf]
    %v3044 = vld [vmem:[#allocation8 + $0xb8] sm:$0xf]
    %v3045 = vld [vmem:[#allocation8 + $0xbc] sm:$0xf]
    %v3046 = vld [vmem:[#allocation8 + $0xc0] sm:$0xf]
    %v3047 = vld [vmem:[#allocation8 + $0xc4] sm:$0xf]
    %v3048 = vld [vmem:[#allocation8 + $0xc8] sm:$0xf]
    %v3049 = vld [vmem:[#allocation8 + $0xcc] sm:$0xf]
    %v3050 = vld [vmem:[#allocation8 + $0xd0] sm:$0xf]
    %v3051 = vld [vmem:[#allocation8 + $0xd4] sm:$0xf]
    %v3052 = vld [vmem:[#allocation8 + $0xd8] sm:$0xf]
    %v3053 = vld [vmem:[#allocation8 + $0xdc] sm:$0xf]
    %v3054 = vld [vmem:[#allocation8 + $0xe0] sm:$0xf]
    %v3055 = vld [vmem:[#allocation8 + $0xe4] sm:$0xf]
    %v3056 = vld [vmem:[#allocation8 + $0xe8] sm:$0xf]
    %v3057 = vld [vmem:[#allocation8 + $0xec] sm:$0xf]
    %v3058 = vld [vmem:[#allocation8 + $0xf0] sm:$0xf]
    %v3059 = vld [vmem:[#allocation8 + $0xf4] sm:$0xf]
    %v3060 = vld [vmem:[#allocation8 + $0xf8] sm:$0xf]
    %v3061 = vld [vmem:[#allocation8 + $0xfc] sm:$0xf]
    %v3062 = vld [vmem:[#allocation8 + $0x100] sm:$0xf]
    %v3063 = vld [vmem:[#allocation8 + $0x104] sm:$0xf]
    %v3064 = vld [vmem:[#allocation8 + $0x108] sm:$0xf]
    %v3065 = vld [vmem:[#allocation8 + $0x10c] sm:$0xf]
    %v3066 = vld [vmem:[#allocation8 + $0x110] sm:$0xf]
    %v3067 = vld [vmem:[#allocation8 + $0x114] sm:$0xf]
    %v3068 = vld [vmem:[#allocation8 + $0x118] sm:$0xf]
    %v3069 = vld [vmem:[#allocation8 + $0x11c] sm:$0xf]
    %v3070 = vld [vmem:[#allocation8 + $0x120] sm:$0xf]
    %v3071 = vld [vmem:[#allocation8 + $0x124] sm:$0xf]
    %v3072 = vld [vmem:[#allocation8 + $0x128] sm:$0xf]
    %v3073 = vld [vmem:[#allocation8 + $0x12c] sm:$0xf]
    %v3074 = vld [vmem:[#allocation8 + $0x130] sm:$0xf]
    %v3075 = vld [vmem:[#allocation8 + $0x134] sm:$0xf]
    %v3076 = vld [vmem:[#allocation8 + $0x138] sm:$0xf]
    %v3077 = vld [vmem:[#allocation8 + $0x13c] sm:$0xf]
    %v3078 = vld [vmem:[#allocation8 + $0x140] sm:$0xf]
    %v3079 = vld [vmem:[#allocation8 + $0x144] sm:$0xf]
    %v3080 = vld [vmem:[#allocation8 + $0x148] sm:$0xf]
    %v3081 = vld [vmem:[#allocation8 + $0x14c] sm:$0xf]
    %v3082 = vld [vmem:[#allocation8 + $0x150] sm:$0xf]
    %v3083 = vld [vmem:[#allocation8 + $0x154] sm:$0xf]
    %v3084 = vld [vmem:[#allocation8 + $0x158] sm:$0xf]
    %v3085 = vld [vmem:[#allocation8 + $0x15c] sm:$0xf]
    %v3086 = vld [vmem:[#allocation8 + $0x160] sm:$0xf]
    %v3087 = vld [vmem:[#allocation8 + $0x164] sm:$0xf]
    %v3088 = vld [vmem:[#allocation8 + $0x168] sm:$0xf]
    %v3089 = vld [vmem:[#allocation8 + $0x16c] sm:$0xf]
    %v3090 = vld [vmem:[#allocation8 + $0x170] sm:$0xf]
    %v3091 = vld [vmem:[#allocation8 + $0x174] sm:$0xf]
    %v3092 = vld [vmem:[#allocation8 + $0x178] sm:$0xf]
    %v3093 = vld [vmem:[#allocation8 + $0x17c] sm:$0xf]
    %v3094 = vld [vmem:[#allocation8 + $0x180] sm:$0xf]
    %v3095 = vld [vmem:[#allocation8 + $0x184] sm:$0xf]
    %v3096 = vld [vmem:[#allocation8 + $0x188] sm:$0xf]
    %v3097 = vld [vmem:[#allocation8 + $0x18c] sm:$0xf]
    %v3098 = vld [vmem:[#allocation8 + $0x190] sm:$0xf]
    %v3099 = vld [vmem:[#allocation8 + $0x194] sm:$0xf]
    %v3100 = vld [vmem:[#allocation8 + $0x198] sm:$0xf]
    %v3101 = vld [vmem:[#allocation8 + $0x19c] sm:$0xf]
    %v3102 = vld [vmem:[#allocation8 + $0x1a0] sm:$0xf]
    %v3103 = vld [vmem:[#allocation8 + $0x1a4] sm:$0xf]
    %v3104 = vld [vmem:[#allocation8 + $0x1a8] sm:$0xf]
    %v3105 = vld [vmem:[#allocation8 + $0x1ac] sm:$0xf]
    %v3106 = vld [vmem:[#allocation8 + $0x1b0] sm:$0xf]
    %v3107 = vld [vmem:[#allocation8 + $0x1b4] sm:$0xf]
    %v3108 = vld [vmem:[#allocation8 + $0x1b8] sm:$0xf]
    %v3109 = vld [vmem:[#allocation8 + $0x1bc] sm:$0xf]
    %v3110 = vld [vmem:[#allocation8 + $0x1c0] sm:$0xf]
    %v3111 = vld [vmem:[#allocation8 + $0x1c4] sm:$0xf]
    %v3112 = vld [vmem:[#allocation8 + $0x1c8] sm:$0xf]
    %v3113 = vld [vmem:[#allocation8 + $0x1cc] sm:$0xf]
    %v3114 = vld [vmem:[#allocation8 + $0x1d0] sm:$0xf]
    %v3115 = vld [vmem:[#allocation8 + $0x1d4] sm:$0xf]
    %v3116 = vld [vmem:[#allocation8 + $0x1d8] sm:$0xf]
    %v3117 = vld [vmem:[#allocation8 + $0x1dc] sm:$0xf]
    %v3118 = vld [vmem:[#allocation8 + $0x1e0] sm:$0xf]
    %v3119 = vld [vmem:[#allocation8 + $0x1e4] sm:$0xf]
    %v3120 = vld [vmem:[#allocation8 + $0x1e8] sm:$0xf]
    %v3121 = vld [vmem:[#allocation8 + $0x1ec] sm:$0xf]
    %v3122 = vld [vmem:[#allocation8 + $0x1f0] sm:$0xf]
    %v3123 = vld [vmem:[#allocation8 + $0x1f4] sm:$0xf]
    %v3124 = vld [vmem:[#allocation8 + $0x1f8] sm:$0xf]
    %v3125 = vld [vmem:[#allocation8 + $0x1fc] sm:$0xf]
    %v3190 = vunpack.c.l.b16 %v3062
    %v3191 = vunpack.c.l.b16 %v3063
    %v3192 = vunpack.c.l.b16 %v3064
    %v3193 = vunpack.c.l.b16 %v3065
    %v3194 = vunpack.c.l.b16 %v3066
    %v3195 = vunpack.c.l.b16 %v3067
    %v3196 = vunpack.c.l.b16 %v3068
    %v3197 = vunpack.c.l.b16 %v3069
    %v3198 = vunpack.c.l.b16 %v3070
    %v3199 = vunpack.c.l.b16 %v3071
    %v3200 = vunpack.c.l.b16 %v3072
    %v3201 = vunpack.c.l.b16 %v3073
    %v3202 = vunpack.c.l.b16 %v3074
    %v3203 = vunpack.c.l.b16 %v3075
    %v3204 = vunpack.c.l.b16 %v3076
    %v3205 = vunpack.c.l.b16 %v3077
    %v3206 = vunpack.c.l.b16 %v3078
    %v3207 = vunpack.c.l.b16 %v3079
    %v3208 = vunpack.c.l.b16 %v3080
    %v3209 = vunpack.c.l.b16 %v3081
    %v3210 = vunpack.c.l.b16 %v3082
    %v3211 = vunpack.c.l.b16 %v3083
    %v3212 = vunpack.c.l.b16 %v3084
    %v3213 = vunpack.c.l.b16 %v3085
    %v3214 = vunpack.c.l.b16 %v3086
    %v3215 = vunpack.c.l.b16 %v3087
    %v3216 = vunpack.c.l.b16 %v3088
    %v3217 = vunpack.c.l.b16 %v3089
    %v3218 = vunpack.c.l.b16 %v3090
    %v3219 = vunpack.c.l.b16 %v3091
    %v3220 = vunpack.c.l.b16 %v3092
    %v3221 = vunpack.c.l.b16 %v3093
    %v3222 = vunpack.c.l.b16 %v3094
    %v3223 = vunpack.c.l.b16 %v3095
    %v3224 = vunpack.c.l.b16 %v3096
    %v3225 = vunpack.c.l.b16 %v3097
    %v3226 = vunpack.c.l.b16 %v3098
    %v3227 = vunpack.c.l.b16 %v3099
    %v3228 = vunpack.c.l.b16 %v3100
    %v3229 = vunpack.c.l.b16 %v3101
    %v3230 = vunpack.c.l.b16 %v3102
    %v3231 = vunpack.c.l.b16 %v3103
    %v3232 = vunpack.c.l.b16 %v3104
    %v3233 = vunpack.c.l.b16 %v3105
    %v3234 = vunpack.c.l.b16 %v3106
    %v3235 = vunpack.c.l.b16 %v3107
    %v3236 = vunpack.c.l.b16 %v3108
    %v3237 = vunpack.c.l.b16 %v3109
    %v3238 = vunpack.c.l.b16 %v3110
    %v3239 = vunpack.c.l.b16 %v3111
    %v3240 = vunpack.c.l.b16 %v3112
    %v3241 = vunpack.c.l.b16 %v3113
    %v3242 = vunpack.c.l.b16 %v3114
    %v3243 = vunpack.c.l.b16 %v3115
    %v3244 = vunpack.c.l.b16 %v3116
    %v3245 = vunpack.c.l.b16 %v3117
    %v3246 = vunpack.c.l.b16 %v3118
    %v3247 = vunpack.c.l.b16 %v3119
    %v3248 = vunpack.c.l.b16 %v3120
    %v3249 = vunpack.c.l.b16 %v3121
    %v3250 = vunpack.c.l.b16 %v3122
    %v3251 = vunpack.c.l.b16 %v3123
    %v3252 = vunpack.c.l.b16 %v3124
    %v3253 = vunpack.c.l.b16 %v3125
    %v3254 = vpack.c.b16 %v3191, %v3190
    %v3255 = vpack.c.b16 %v3193, %v3192
    %v3256 = vpack.c.b16 %v3195, %v3194
    %v3257 = vpack.c.b16 %v3197, %v3196
    %v3258 = vpack.c.b16 %v3199, %v3198
    %v3259 = vpack.c.b16 %v3201, %v3200
    %v3260 = vpack.c.b16 %v3203, %v3202
    %v3261 = vpack.c.b16 %v3205, %v3204
    %v3262 = vpack.c.b16 %v3207, %v3206
    %v3263 = vpack.c.b16 %v3209, %v3208
    %v3264 = vpack.c.b16 %v3211, %v3210
    %v3265 = vpack.c.b16 %v3213, %v3212
    %v3266 = vpack.c.b16 %v3215, %v3214
    %v3267 = vpack.c.b16 %v3217, %v3216
    %v3268 = vpack.c.b16 %v3219, %v3218
    %v3269 = vpack.c.b16 %v3221, %v3220
    %v3270 = vpack.c.b16 %v3223, %v3222
    %v3271 = vpack.c.b16 %v3225, %v3224
    %v3272 = vpack.c.b16 %v3227, %v3226
    %v3273 = vpack.c.b16 %v3229, %v3228
    %v3274 = vpack.c.b16 %v3231, %v3230
    %v3275 = vpack.c.b16 %v3233, %v3232
    %v3276 = vpack.c.b16 %v3235, %v3234
    %v3277 = vpack.c.b16 %v3237, %v3236
    %v3278 = vpack.c.b16 %v3239, %v3238
    %v3279 = vpack.c.b16 %v3241, %v3240
    %v3280 = vpack.c.b16 %v3243, %v3242
    %v3281 = vpack.c.b16 %v3245, %v3244
    %v3282 = vpack.c.b16 %v3247, %v3246
    %v3283 = vpack.c.b16 %v3249, %v3248
    %v3284 = vpack.c.b16 %v3251, %v3250
    %v3285 = vpack.c.b16 %v3253, %v3252
    %3318 = vmatprep.subr.bf16.mxu0 0
    %3319 = vmatpush1.bf16.msra.mxu0 %v3261
    %3320 = vmatprep.subr.bf16.mxu0 0
    %3321 = vmatpush1.bf16.msra.mxu0 %v3260
    %3322 = vmatprep.subr.bf16.mxu0 0
    %3323 = vmatpush1.bf16.msra.mxu0 %v3259
    %3324 = vmatprep.subr.bf16.mxu0 0
    %3325 = vmatpush1.bf16.msra.mxu0 %v3258
    %3326 = vmatprep.subr.bf16.mxu0 0
    %3327 = vmatpush1.bf16.msra.mxu0 %v3257
    %3328 = vmatprep.subr.bf16.mxu0 0
    %3329 = vmatpush1.bf16.msra.mxu0 %v3256
    %3330 = vmatprep.subr.bf16.mxu0 0
    %3331 = vmatpush1.bf16.msra.mxu0 %v3255
    %3332 = vmatprep.subr.bf16.mxu0 0
    %3333 = vmatpush1.bf16.msra.mxu0 %v3254
    %3334 = vmatprep.subr.bf16.mxu0 0
    %3335 = vmatpush2.bf16.msra.mxu0 %v3269
    %3336 = vmatprep.subr.bf16.mxu0 0
    %3337 = vmatpush2.bf16.msra.mxu0 %v3268
    %3338 = vmatprep.subr.bf16.mxu0 0
    %3339 = vmatpush2.bf16.msra.mxu0 %v3267
    %3340 = vmatprep.subr.bf16.mxu0 0
    %3341 = vmatpush2.bf16.msra.mxu0 %v3266
    %3342 = vmatprep.subr.bf16.mxu0 0
    %3343 = vmatpush2.bf16.msra.mxu0 %v3265
    %3344 = vmatprep.subr.bf16.mxu0 0
    %3345 = vmatpush2.bf16.msra.mxu0 %v3264
    %3346 = vmatprep.subr.bf16.mxu0 0
    %3347 = vmatpush2.bf16.msra.mxu0 %v3263
    %3348 = vmatprep.subr.bf16.mxu0 0
    %3349 = vmatpush2.bf16.msra.mxu0 %v3262
    %3350 = vmatprep.mubr.bf16.mxu0 %v2991
    %3351 = vmatmul.mubr.bf16.gmra.mxu0 %v2990
    %v3352 = vpop.f32.mrf.mxu0
    %v3353 = vadd.f32 0.0, %v3352
    %v3354 = vpop.f32.mrf.mxu0
    %v3355 = vpop.f32.mrf.mxu0
    %v3356 = vadd.f32 0.0, %v3355
    %v3357 = vpop.f32.mrf.mxu0
    %3358 = vmatprep.mubr.bf16.mxu0 %v2995
    %3359 = vmatmul.mubr.bf16.gmra.mxu0 %v2994
    %v3360 = vpop.f32.mrf.mxu0
    %v3361 = vadd.f32 0.0, %v3360
    %v3362 = vpop.f32.mrf.mxu0
    %v3363 = vpop.f32.mrf.mxu0
    %v3364 = vadd.f32 0.0, %v3363
    %v3365 = vpop.f32.mrf.mxu0
    %3366 = vdwg.mxu0
    %3367 = vmatprep.subr.bf16.mxu0 0
    %3368 = vmatpush1.bf16.msra.mxu0 %v3277
    %3369 = vmatprep.subr.bf16.mxu0 0
    %3370 = vmatpush1.bf16.msra.mxu0 %v3276
    %3371 = vmatprep.subr.bf16.mxu0 0
    %3372 = vmatpush1.bf16.msra.mxu0 %v3275
    %3373 = vmatprep.subr.bf16.mxu0 0
    %3374 = vmatpush1.bf16.msra.mxu0 %v3274
    %3375 = vmatprep.subr.bf16.mxu0 0
    %3376 = vmatpush1.bf16.msra.mxu0 %v3273
    %3377 = vmatprep.subr.bf16.mxu0 0
    %3378 = vmatpush1.bf16.msra.mxu0 %v3272
    %3379 = vmatprep.subr.bf16.mxu0 0
    %3380 = vmatpush1.bf16.msra.mxu0 %v3271
    %3381 = vmatprep.subr.bf16.mxu0 0
    %3382 = vmatpush1.bf16.msra.mxu0 %v3270
    %3383 = vmatprep.subr.bf16.mxu0 0
    %3384 = vmatpush2.bf16.msra.mxu0 %v3285
    %3385 = vmatprep.subr.bf16.mxu0 0
    %3386 = vmatpush2.bf16.msra.mxu0 %v3284
    %3387 = vmatprep.subr.bf16.mxu0 0
    %3388 = vmatpush2.bf16.msra.mxu0 %v3283
    %3389 = vmatprep.subr.bf16.mxu0 0
    %3390 = vmatpush2.bf16.msra.mxu0 %v3282
    %3391 = vmatprep.subr.bf16.mxu0 0
    %3392 = vmatpush2.bf16.msra.mxu0 %v3281
    %3393 = vmatprep.subr.bf16.mxu0 0
    %3394 = vmatpush2.bf16.msra.mxu0 %v3280
    %3395 = vmatprep.subr.bf16.mxu0 0
    %3396 = vmatpush2.bf16.msra.mxu0 %v3279
    %3397 = vmatprep.subr.bf16.mxu0 0
    %3398 = vmatpush2.bf16.msra.mxu0 %v3278
    %3399 = vmatprep.mubr.bf16.mxu0 %v2993
    %3400 = vmatmul.mubr.bf16.gmra.mxu0 %v2992
    %v3401 = vpop.f32.mrf.mxu0
    %v3402 = vadd.f32 %v3353, %v3401
    %v3403 = vpop.f32.mrf.mxu0
    %v3404 = vpop.f32.mrf.mxu0
    %v3405 = vadd.f32 %v3356, %v3404
    %v3406 = vpop.f32.mrf.mxu0
    %3407 = vmatprep.mubr.bf16.mxu0 %v2997
    %3408 = vmatmul.mubr.bf16.gmra.mxu0 %v2996
    %v3409 = vpop.f32.mrf.mxu0
    %v3410 = vadd.f32 %v3361, %v3409
    %v3411 = vpop.f32.mrf.mxu0
    %v3412 = vpop.f32.mrf.mxu0
    %v3413 = vadd.f32 %v3364, %v3412
    %v3414 = vpop.f32.mrf.mxu0
    %3415 = vdwg.mxu0
    %v3480 = vunpack.c.l.b16 %v2998
    %v3481 = vunpack.c.l.b16 %v2999
    %v3482 = vunpack.c.l.b16 %v3000
    %v3483 = vunpack.c.l.b16 %v3001
    %v3484 = vunpack.c.l.b16 %v3002
    %v3485 = vunpack.c.l.b16 %v3003
    %v3486 = vunpack.c.l.b16 %v3004
    %v3487 = vunpack.c.l.b16 %v3005
    %v3488 = vunpack.c.l.b16 %v3006
    %v3489 = vunpack.c.l.b16 %v3007
    %v3490 = vunpack.c.l.b16 %v3008
    %v3491 = vunpack.c.l.b16 %v3009
    %v3492 = vunpack.c.l.b16 %v3010
    %v3493 = vunpack.c.l.b16 %v3011
    %v3494 = vunpack.c.l.b16 %v3012
    %v3495 = vunpack.c.l.b16 %v3013
    %v3496 = vunpack.c.l.b16 %v3014
    %v3497 = vunpack.c.l.b16 %v3015
    %v3498 = vunpack.c.l.b16 %v3016
    %v3499 = vunpack.c.l.b16 %v3017
    %v3500 = vunpack.c.l.b16 %v3018
    %v3501 = vunpack.c.l.b16 %v3019
    %v3502 = vunpack.c.l.b16 %v3020
    %v3503 = vunpack.c.l.b16 %v3021
    %v3504 = vunpack.c.l.b16 %v3022
    %v3505 = vunpack.c.l.b16 %v3023
    %v3506 = vunpack.c.l.b16 %v3024
    %v3507 = vunpack.c.l.b16 %v3025
    %v3508 = vunpack.c.l.b16 %v3026
    %v3509 = vunpack.c.l.b16 %v3027
    %v3510 = vunpack.c.l.b16 %v3028
    %v3511 = vunpack.c.l.b16 %v3029
    %v3512 = vunpack.c.l.b16 %v3030
    %v3513 = vunpack.c.l.b16 %v3031
    %v3514 = vunpack.c.l.b16 %v3032
    %v3515 = vunpack.c.l.b16 %v3033
    %v3516 = vunpack.c.l.b16 %v3034
    %v3517 = vunpack.c.l.b16 %v3035
    %v3518 = vunpack.c.l.b16 %v3036
    %v3519 = vunpack.c.l.b16 %v3037
    %v3520 = vunpack.c.l.b16 %v3038
    %v3521 = vunpack.c.l.b16 %v3039
    %v3522 = vunpack.c.l.b16 %v3040
    %v3523 = vunpack.c.l.b16 %v3041
    %v3524 = vunpack.c.l.b16 %v3042
    %v3525 = vunpack.c.l.b16 %v3043
    %v3526 = vunpack.c.l.b16 %v3044
    %v3527 = vunpack.c.l.b16 %v3045
    %v3528 = vunpack.c.l.b16 %v3046
    %v3529 = vunpack.c.l.b16 %v3047
    %v3530 = vunpack.c.l.b16 %v3048
    %v3531 = vunpack.c.l.b16 %v3049
    %v3532 = vunpack.c.l.b16 %v3050
    %v3533 = vunpack.c.l.b16 %v3051
    %v3534 = vunpack.c.l.b16 %v3052
    %v3535 = vunpack.c.l.b16 %v3053
    %v3536 = vunpack.c.l.b16 %v3054
    %v3537 = vunpack.c.l.b16 %v3055
    %v3538 = vunpack.c.l.b16 %v3056
    %v3539 = vunpack.c.l.b16 %v3057
    %v3540 = vunpack.c.l.b16 %v3058
    %v3541 = vunpack.c.l.b16 %v3059
    %v3542 = vunpack.c.l.b16 %v3060
    %v3543 = vunpack.c.l.b16 %v3061
    %v3544 = vpack.c.b16 %v3481, %v3480
    %v3545 = vpack.c.b16 %v3483, %v3482
    %v3546 = vpack.c.b16 %v3485, %v3484
    %v3547 = vpack.c.b16 %v3487, %v3486
    %v3548 = vpack.c.b16 %v3489, %v3488
    %v3549 = vpack.c.b16 %v3491, %v3490
    %v3550 = vpack.c.b16 %v3493, %v3492
    %v3551 = vpack.c.b16 %v3495, %v3494
    %v3552 = vpack.c.b16 %v3497, %v3496
    %v3553 = vpack.c.b16 %v3499, %v3498
    %v3554 = vpack.c.b16 %v3501, %v3500
    %v3555 = vpack.c.b16 %v3503, %v3502
    %v3556 = vpack.c.b16 %v3505, %v3504
    %v3557 = vpack.c.b16 %v3507, %v3506
    %v3558 = vpack.c.b16 %v3509, %v3508
    %v3559 = vpack.c.b16 %v3511, %v3510
    %v3560 = vpack.c.b16 %v3513, %v3512
    %v3561 = vpack.c.b16 %v3515, %v3514
    %v3562 = vpack.c.b16 %v3517, %v3516
    %v3563 = vpack.c.b16 %v3519, %v3518
    %v3564 = vpack.c.b16 %v3521, %v3520
    %v3565 = vpack.c.b16 %v3523, %v3522
    %v3566 = vpack.c.b16 %v3525, %v3524
    %v3567 = vpack.c.b16 %v3527, %v3526
    %v3568 = vpack.c.b16 %v3529, %v3528
    %v3569 = vpack.c.b16 %v3531, %v3530
    %v3570 = vpack.c.b16 %v3533, %v3532
    %v3571 = vpack.c.b16 %v3535, %v3534
    %v3572 = vpack.c.b16 %v3537, %v3536
    %v3573 = vpack.c.b16 %v3539, %v3538
    %v3574 = vpack.c.b16 %v3541, %v3540
    %v3575 = vpack.c.b16 %v3543, %v3542
    %3608 = vmatprep.subr.bf16.mxu0 0
    %3609 = vmatpush1.bf16.msra.mxu0 %v3551
    %3610 = vmatprep.subr.bf16.mxu0 0
    %3611 = vmatpush1.bf16.msra.mxu0 %v3550
    %3612 = vmatprep.subr.bf16.mxu0 0
    %3613 = vmatpush1.bf16.msra.mxu0 %v3549
    %3614 = vmatprep.subr.bf16.mxu0 0
    %3615 = vmatpush1.bf16.msra.mxu0 %v3548
    %3616 = vmatprep.subr.bf16.mxu0 0
    %3617 = vmatpush1.bf16.msra.mxu0 %v3547
    %3618 = vmatprep.subr.bf16.mxu0 0
    %3619 = vmatpush1.bf16.msra.mxu0 %v3546
    %3620 = vmatprep.subr.bf16.mxu0 0
    %3621 = vmatpush1.bf16.msra.mxu0 %v3545
    %3622 = vmatprep.subr.bf16.mxu0 0
    %3623 = vmatpush1.bf16.msra.mxu0 %v3544
    %3624 = vmatprep.subr.bf16.mxu0 0
    %3625 = vmatpush2.bf16.msra.mxu0 %v3559
    %3626 = vmatprep.subr.bf16.mxu0 0
    %3627 = vmatpush2.bf16.msra.mxu0 %v3558
    %3628 = vmatprep.subr.bf16.mxu0 0
    %3629 = vmatpush2.bf16.msra.mxu0 %v3557
    %3630 = vmatprep.subr.bf16.mxu0 0
    %3631 = vmatpush2.bf16.msra.mxu0 %v3556
    %3632 = vmatprep.subr.bf16.mxu0 0
    %3633 = vmatpush2.bf16.msra.mxu0 %v3555
    %3634 = vmatprep.subr.bf16.mxu0 0
    %3635 = vmatpush2.bf16.msra.mxu0 %v3554
    %3636 = vmatprep.subr.bf16.mxu0 0
    %3637 = vmatpush2.bf16.msra.mxu0 %v3553
    %3638 = vmatprep.subr.bf16.mxu0 0
    %3639 = vmatpush2.bf16.msra.mxu0 %v3552
    %3640 = vmatprep.mubr.bf16.mxu0 %v2967
    %3641 = vmatmul.mubr.bf16.gmra.mxu0 %v2966
    %v3642 = vpop.f32.mrf.mxu0
    %v3643 = vadd.f32 %v3402, %v3642
    %v3644 = vpop.f32.mrf.mxu0
    %v3645 = vpop.f32.mrf.mxu0
    %v3646 = vadd.f32 %v3405, %v3645
    %v3647 = vpop.f32.mrf.mxu0
    %3648 = vmatprep.mubr.bf16.mxu0 %v2971
    %3649 = vmatmul.mubr.bf16.gmra.mxu0 %v2970
    %v3650 = vpop.f32.mrf.mxu0
    %v3651 = vadd.f32 %v3410, %v3650
    %v3652 = vpop.f32.mrf.mxu0
    %v3653 = vpop.f32.mrf.mxu0
    %v3654 = vadd.f32 %v3413, %v3653
    %v3655 = vpop.f32.mrf.mxu0
    %3656 = vdwg.mxu0
    %3657 = vmatprep.subr.bf16.mxu0 0
    %3658 = vmatpush1.bf16.msra.mxu0 %v3567
    %3659 = vmatprep.subr.bf16.mxu0 0
    %3660 = vmatpush1.bf16.msra.mxu0 %v3566
    %3661 = vmatprep.subr.bf16.mxu0 0
    %3662 = vmatpush1.bf16.msra.mxu0 %v3565
    %3663 = vmatprep.subr.bf16.mxu0 0
    %3664 = vmatpush1.bf16.msra.mxu0 %v3564
    %3665 = vmatprep.subr.bf16.mxu0 0
    %3666 = vmatpush1.bf16.msra.mxu0 %v3563
    %3667 = vmatprep.subr.bf16.mxu0 0
    %3668 = vmatpush1.bf16.msra.mxu0 %v3562
    %3669 = vmatprep.subr.bf16.mxu0 0
    %3670 = vmatpush1.bf16.msra.mxu0 %v3561
    %3671 = vmatprep.subr.bf16.mxu0 0
    %3672 = vmatpush1.bf16.msra.mxu0 %v3560
    %3673 = vmatprep.subr.bf16.mxu0 0
    %3674 = vmatpush2.bf16.msra.mxu0 %v3575
    %3675 = vmatprep.subr.bf16.mxu0 0
    %3676 = vmatpush2.bf16.msra.mxu0 %v3574
    %3677 = vmatprep.subr.bf16.mxu0 0
    %3678 = vmatpush2.bf16.msra.mxu0 %v3573
    %3679 = vmatprep.subr.bf16.mxu0 0
    %3680 = vmatpush2.bf16.msra.mxu0 %v3572
    %3681 = vmatprep.subr.bf16.mxu0 0
    %3682 = vmatpush2.bf16.msra.mxu0 %v3571
    %3683 = vmatprep.subr.bf16.mxu0 0
    %3684 = vmatpush2.bf16.msra.mxu0 %v3570
    %3685 = vmatprep.subr.bf16.mxu0 0
    %3686 = vmatpush2.bf16.msra.mxu0 %v3569
    %3687 = vmatprep.subr.bf16.mxu0 0
    %3688 = vmatpush2.bf16.msra.mxu0 %v3568
    %3689 = vmatprep.mubr.bf16.mxu0 %v2969
    %3690 = vmatmul.mubr.bf16.gmra.mxu0 %v2968
    %v3691 = vpop.f32.mrf.mxu0
    %v3692 = vadd.f32 %v3643, %v3691
    %v3693 = vpop.f32.mrf.mxu0
    %v3694 = vpop.f32.mrf.mxu0
    %v3695 = vadd.f32 %v3646, %v3694
    %v3696 = vpop.f32.mrf.mxu0
    %3697 = vmatprep.mubr.bf16.mxu0 %v2973
    %3698 = vmatmul.mubr.bf16.gmra.mxu0 %v2972
    %v3699 = vpop.f32.mrf.mxu0
    %v3700 = vadd.f32 %v3651, %v3699
    %v3701 = vpop.f32.mrf.mxu0
    %v3702 = vpop.f32.mrf.mxu0
    %v3703 = vadd.f32 %v3654, %v3702
    %v3704 = vpop.f32.mrf.mxu0
    %3705 = vdwg.mxu0
    %v3706 = vpack.c.bf16 %v3695, %v3692
    %v3707 = vpack.c.bf16 %v3703, %v3700
    %v3708 = vld [vmem:[#allocation10] sm:$0xff]
    %v3709 = vld [vmem:[#allocation10 + $0x8] sm:$0xff]
    %v3710 = vld [vmem:[#allocation10 + $0x10] sm:$0xff]
    %v3711 = vld [vmem:[#allocation10 + $0x18] sm:$0xff]
    %v3712 = vld [vmem:[#allocation10 + $0x20] sm:$0xff]
    %v3713 = vld [vmem:[#allocation10 + $0x28] sm:$0xff]
    %v3714 = vld [vmem:[#allocation10 + $0x30] sm:$0xff]
    %v3715 = vld [vmem:[#allocation10 + $0x38] sm:$0xff]
    %v3716 = vld [vmem:[#allocation10 + $0x40] sm:$0xff]
    %v3717 = vld [vmem:[#allocation10 + $0x48] sm:$0xff]
    %v3718 = vld [vmem:[#allocation10 + $0x50] sm:$0xff]
    %v3719 = vld [vmem:[#allocation10 + $0x58] sm:$0xff]
    %v3720 = vld [vmem:[#allocation10 + $0x60] sm:$0xff]
    %v3721 = vld [vmem:[#allocation10 + $0x68] sm:$0xff]
    %v3722 = vld [vmem:[#allocation10 + $0x70] sm:$0xff]
    %v3723 = vld [vmem:[#allocation10 + $0x78] sm:$0xff]
    %v3724 = vld [vmem:[#allocation10 + $0x80] sm:$0xff]
    %v3725 = vld [vmem:[#allocation10 + $0x88] sm:$0xff]
    %v3726 = vld [vmem:[#allocation10 + $0x90] sm:$0xff]
    %v3727 = vld [vmem:[#allocation10 + $0x98] sm:$0xff]
    %v3728 = vld [vmem:[#allocation10 + $0xa0] sm:$0xff]
    %v3729 = vld [vmem:[#allocation10 + $0xa8] sm:$0xff]
    %v3730 = vld [vmem:[#allocation10 + $0xb0] sm:$0xff]
    %v3731 = vld [vmem:[#allocation10 + $0xb8] sm:$0xff]
    %v3732 = vld [vmem:[#allocation10 + $0xc0] sm:$0xff]
    %v3733 = vld [vmem:[#allocation10 + $0xc8] sm:$0xff]
    %v3734 = vld [vmem:[#allocation10 + $0xd0] sm:$0xff]
    %v3735 = vld [vmem:[#allocation10 + $0xd8] sm:$0xff]
    %v3736 = vld [vmem:[#allocation10 + $0xe0] sm:$0xff]
    %v3737 = vld [vmem:[#allocation10 + $0xe8] sm:$0xff]
    %v3738 = vld [vmem:[#allocation10 + $0xf0] sm:$0xff]
    %v3739 = vld [vmem:[#allocation10 + $0xf8] sm:$0xff]
    %v3740 = vld [vmem:[#allocation10 + $0x100] sm:$0xff]
    %v3741 = vld [vmem:[#allocation10 + $0x108] sm:$0xff]
    %v3742 = vld [vmem:[#allocation10 + $0x110] sm:$0xff]
    %v3743 = vld [vmem:[#allocation10 + $0x118] sm:$0xff]
    %v3744 = vld [vmem:[#allocation10 + $0x120] sm:$0xff]
    %v3745 = vld [vmem:[#allocation10 + $0x128] sm:$0xff]
    %v3746 = vld [vmem:[#allocation10 + $0x130] sm:$0xff]
    %v3747 = vld [vmem:[#allocation10 + $0x138] sm:$0xff]
    %v3748 = vld [vmem:[#allocation10 + $0x140] sm:$0xff]
    %v3749 = vld [vmem:[#allocation10 + $0x148] sm:$0xff]
    %v3750 = vld [vmem:[#allocation10 + $0x150] sm:$0xff]
    %v3751 = vld [vmem:[#allocation10 + $0x158] sm:$0xff]
    %v3752 = vld [vmem:[#allocation10 + $0x160] sm:$0xff]
    %v3753 = vld [vmem:[#allocation10 + $0x168] sm:$0xff]
    %v3754 = vld [vmem:[#allocation10 + $0x170] sm:$0xff]
    %v3755 = vld [vmem:[#allocation10 + $0x178] sm:$0xff]
    %v3756 = vld [vmem:[#allocation10 + $0x180] sm:$0xff]
    %v3757 = vld [vmem:[#allocation10 + $0x188] sm:$0xff]
    %v3758 = vld [vmem:[#allocation10 + $0x190] sm:$0xff]
    %v3759 = vld [vmem:[#allocation10 + $0x198] sm:$0xff]
    %v3760 = vld [vmem:[#allocation10 + $0x1a0] sm:$0xff]
    %v3761 = vld [vmem:[#allocation10 + $0x1a8] sm:$0xff]
    %v3762 = vld [vmem:[#allocation10 + $0x1b0] sm:$0xff]
    %v3763 = vld [vmem:[#allocation10 + $0x1b8] sm:$0xff]
    %v3764 = vld [vmem:[#allocation10 + $0x1c0] sm:$0xff]
    %v3765 = vld [vmem:[#allocation10 + $0x1c8] sm:$0xff]
    %v3766 = vld [vmem:[#allocation10 + $0x1d0] sm:$0xff]
    %v3767 = vld [vmem:[#allocation10 + $0x1d8] sm:$0xff]
    %v3768 = vld [vmem:[#allocation10 + $0x1e0] sm:$0xff]
    %v3769 = vld [vmem:[#allocation10 + $0x1e8] sm:$0xff]
    %v3770 = vld [vmem:[#allocation10 + $0x1f0] sm:$0xff]
    %v3771 = vld [vmem:[#allocation10 + $0x1f8] sm:$0xff]
    %v3836 = vunpack.c.l.b16 %v3708
    %v3837 = vunpack.c.h.b16 %v3708
    %v3838 = vunpack.c.l.b16 %v3709
    %v3839 = vunpack.c.h.b16 %v3709
    %v3840 = vunpack.c.l.b16 %v3710
    %v3841 = vunpack.c.h.b16 %v3710
    %v3842 = vunpack.c.l.b16 %v3711
    %v3843 = vunpack.c.h.b16 %v3711
    %v3844 = vunpack.c.l.b16 %v3712
    %v3845 = vunpack.c.h.b16 %v3712
    %v3846 = vunpack.c.l.b16 %v3713
    %v3847 = vunpack.c.h.b16 %v3713
    %v3848 = vunpack.c.l.b16 %v3714
    %v3849 = vunpack.c.h.b16 %v3714
    %v3850 = vunpack.c.l.b16 %v3715
    %v3851 = vunpack.c.h.b16 %v3715
    %v3852 = vunpack.c.l.b16 %v3716
    %v3853 = vunpack.c.h.b16 %v3716
    %v3854 = vunpack.c.l.b16 %v3717
    %v3855 = vunpack.c.h.b16 %v3717
    %v3856 = vunpack.c.l.b16 %v3718
    %v3857 = vunpack.c.h.b16 %v3718
    %v3858 = vunpack.c.l.b16 %v3719
    %v3859 = vunpack.c.h.b16 %v3719
    %v3860 = vunpack.c.l.b16 %v3720
    %v3861 = vunpack.c.h.b16 %v3720
    %v3862 = vunpack.c.l.b16 %v3721
    %v3863 = vunpack.c.h.b16 %v3721
    %v3864 = vunpack.c.l.b16 %v3722
    %v3865 = vunpack.c.h.b16 %v3722
    %v3866 = vunpack.c.l.b16 %v3723
    %v3867 = vunpack.c.h.b16 %v3723
    %v3868 = vunpack.c.l.b16 %v3724
    %v3869 = vunpack.c.h.b16 %v3724
    %v3870 = vunpack.c.l.b16 %v3725
    %v3871 = vunpack.c.h.b16 %v3725
    %v3872 = vunpack.c.l.b16 %v3726
    %v3873 = vunpack.c.h.b16 %v3726
    %v3874 = vunpack.c.l.b16 %v3727
    %v3875 = vunpack.c.h.b16 %v3727
    %v3876 = vunpack.c.l.b16 %v3728
    %v3877 = vunpack.c.h.b16 %v3728
    %v3878 = vunpack.c.l.b16 %v3729
    %v3879 = vunpack.c.h.b16 %v3729
    %v3880 = vunpack.c.l.b16 %v3730
    %v3881 = vunpack.c.h.b16 %v3730
    %v3882 = vunpack.c.l.b16 %v3731
    %v3883 = vunpack.c.h.b16 %v3731
    %v3884 = vunpack.c.l.b16 %v3732
    %v3885 = vunpack.c.h.b16 %v3732
    %v3886 = vunpack.c.l.b16 %v3733
    %v3887 = vunpack.c.h.b16 %v3733
    %v3888 = vunpack.c.l.b16 %v3734
    %v3889 = vunpack.c.h.b16 %v3734
    %v3890 = vunpack.c.l.b16 %v3735
    %v3891 = vunpack.c.h.b16 %v3735
    %v3892 = vunpack.c.l.b16 %v3736
    %v3893 = vunpack.c.h.b16 %v3736
    %v3894 = vunpack.c.l.b16 %v3737
    %v3895 = vunpack.c.h.b16 %v3737
    %v3896 = vunpack.c.l.b16 %v3738
    %v3897 = vunpack.c.h.b16 %v3738
    %v3898 = vunpack.c.l.b16 %v3739
    %v3899 = vunpack.c.h.b16 %v3739
    %v3900 = vunpack.c.l.b16 %v3740
    %v3901 = vunpack.c.h.b16 %v3740
    %v3902 = vunpack.c.l.b16 %v3741
    %v3903 = vunpack.c.h.b16 %v3741
    %v3904 = vunpack.c.l.b16 %v3742
    %v3905 = vunpack.c.h.b16 %v3742
    %v3906 = vunpack.c.l.b16 %v3743
    %v3907 = vunpack.c.h.b16 %v3743
    %v3908 = vunpack.c.l.b16 %v3744
    %v3909 = vunpack.c.h.b16 %v3744
    %v3910 = vunpack.c.l.b16 %v3745
    %v3911 = vunpack.c.h.b16 %v3745
    %v3912 = vunpack.c.l.b16 %v3746
    %v3913 = vunpack.c.h.b16 %v3746
    %v3914 = vunpack.c.l.b16 %v3747
    %v3915 = vunpack.c.h.b16 %v3747
    %v3916 = vunpack.c.l.b16 %v3748
    %v3917 = vunpack.c.h.b16 %v3748
    %v3918 = vunpack.c.l.b16 %v3749
    %v3919 = vunpack.c.h.b16 %v3749
    %v3920 = vunpack.c.l.b16 %v3750
    %v3921 = vunpack.c.h.b16 %v3750
    %v3922 = vunpack.c.l.b16 %v3751
    %v3923 = vunpack.c.h.b16 %v3751
    %v3924 = vunpack.c.l.b16 %v3752
    %v3925 = vunpack.c.h.b16 %v3752
    %v3926 = vunpack.c.l.b16 %v3753
    %v3927 = vunpack.c.h.b16 %v3753
    %v3928 = vunpack.c.l.b16 %v3754
    %v3929 = vunpack.c.h.b16 %v3754
    %v3930 = vunpack.c.l.b16 %v3755
    %v3931 = vunpack.c.h.b16 %v3755
    %v3932 = vunpack.c.l.b16 %v3756
    %v3933 = vunpack.c.h.b16 %v3756
    %v3934 = vunpack.c.l.b16 %v3757
    %v3935 = vunpack.c.h.b16 %v3757
    %v3936 = vunpack.c.l.b16 %v3758
    %v3937 = vunpack.c.h.b16 %v3758
    %v3938 = vunpack.c.l.b16 %v3759
    %v3939 = vunpack.c.h.b16 %v3759
    %v3940 = vunpack.c.l.b16 %v3760
    %v3941 = vunpack.c.h.b16 %v3760
    %v3942 = vunpack.c.l.b16 %v3761
    %v3943 = vunpack.c.h.b16 %v3761
    %v3944 = vunpack.c.l.b16 %v3762
    %v3945 = vunpack.c.h.b16 %v3762
    %v3946 = vunpack.c.l.b16 %v3763
    %v3947 = vunpack.c.h.b16 %v3763
    %v3948 = vunpack.c.l.b16 %v3764
    %v3949 = vunpack.c.h.b16 %v3764
    %v3950 = vunpack.c.l.b16 %v3765
    %v3951 = vunpack.c.h.b16 %v3765
    %v3952 = vunpack.c.l.b16 %v3766
    %v3953 = vunpack.c.h.b16 %v3766
    %v3954 = vunpack.c.l.b16 %v3767
    %v3955 = vunpack.c.h.b16 %v3767
    %v3956 = vunpack.c.l.b16 %v3768
    %v3957 = vunpack.c.h.b16 %v3768
    %v3958 = vunpack.c.l.b16 %v3769
    %v3959 = vunpack.c.h.b16 %v3769
    %v3960 = vunpack.c.l.b16 %v3770
    %v3961 = vunpack.c.h.b16 %v3770
    %v3962 = vunpack.c.l.b16 %v3771
    %v3963 = vunpack.c.h.b16 %v3771
    %v3964 = vpack.c.b16 %v3844, %v3836
    %v3965 = vpack.c.b16 %v3845, %v3837
    %v3966 = vpack.c.b16 %v3846, %v3838
    %v3967 = vpack.c.b16 %v3847, %v3839
    %v3968 = vpack.c.b16 %v3848, %v3840
    %v3969 = vpack.c.b16 %v3849, %v3841
    %v3970 = vpack.c.b16 %v3850, %v3842
    %v3971 = vpack.c.b16 %v3851, %v3843
    %v3972 = vpack.c.b16 %v3860, %v3852
    %v3973 = vpack.c.b16 %v3861, %v3853
    %v3974 = vpack.c.b16 %v3862, %v3854
    %v3975 = vpack.c.b16 %v3863, %v3855
    %v3976 = vpack.c.b16 %v3864, %v3856
    %v3977 = vpack.c.b16 %v3865, %v3857
    %v3978 = vpack.c.b16 %v3866, %v3858
    %v3979 = vpack.c.b16 %v3867, %v3859
    %v3980 = vpack.c.b16 %v3876, %v3868
    %v3981 = vpack.c.b16 %v3877, %v3869
    %v3982 = vpack.c.b16 %v3878, %v3870
    %v3983 = vpack.c.b16 %v3879, %v3871
    %v3984 = vpack.c.b16 %v3880, %v3872
    %v3985 = vpack.c.b16 %v3881, %v3873
    %v3986 = vpack.c.b16 %v3882, %v3874
    %v3987 = vpack.c.b16 %v3883, %v3875
    %v3988 = vpack.c.b16 %v3892, %v3884
    %v3989 = vpack.c.b16 %v3893, %v3885
    %v3990 = vpack.c.b16 %v3894, %v3886
    %v3991 = vpack.c.b16 %v3895, %v3887
    %v3992 = vpack.c.b16 %v3896, %v3888
    %v3993 = vpack.c.b16 %v3897, %v3889
    %v3994 = vpack.c.b16 %v3898, %v3890
    %v3995 = vpack.c.b16 %v3899, %v3891
    %v3996 = vpack.c.b16 %v3908, %v3900
    %v3997 = vpack.c.b16 %v3909, %v3901
    %v3998 = vpack.c.b16 %v3910, %v3902
    %v3999 = vpack.c.b16 %v3911, %v3903
    %v4000 = vpack.c.b16 %v3912, %v3904
    %v4001 = vpack.c.b16 %v3913, %v3905
    %v4002 = vpack.c.b16 %v3914, %v3906
    %v4003 = vpack.c.b16 %v3915, %v3907
    %v4004 = vpack.c.b16 %v3924, %v3916
    %v4005 = vpack.c.b16 %v3925, %v3917
    %v4006 = vpack.c.b16 %v3926, %v3918
    %v4007 = vpack.c.b16 %v3927, %v3919
    %v4008 = vpack.c.b16 %v3928, %v3920
    %v4009 = vpack.c.b16 %v3929, %v3921
    %v4010 = vpack.c.b16 %v3930, %v3922
    %v4011 = vpack.c.b16 %v3931, %v3923
    %v4012 = vpack.c.b16 %v3940, %v3932
    %v4013 = vpack.c.b16 %v3941, %v3933
    %v4014 = vpack.c.b16 %v3942, %v3934
    %v4015 = vpack.c.b16 %v3943, %v3935
    %v4016 = vpack.c.b16 %v3944, %v3936
    %v4017 = vpack.c.b16 %v3945, %v3937
    %v4018 = vpack.c.b16 %v3946, %v3938
    %v4019 = vpack.c.b16 %v3947, %v3939
    %v4020 = vpack.c.b16 %v3956, %v3948
    %v4021 = vpack.c.b16 %v3957, %v3949
    %v4022 = vpack.c.b16 %v3958, %v3950
    %v4023 = vpack.c.b16 %v3959, %v3951
    %v4024 = vpack.c.b16 %v3960, %v3952
    %v4025 = vpack.c.b16 %v3961, %v3953
    %v4026 = vpack.c.b16 %v3962, %v3954
    %v4027 = vpack.c.b16 %v3963, %v3955
    %4092 = vmatprep.subr.bf16.mxu0 %v4021
    %4093 = vmatpush1.bf16.msra.mxu0 %v4020
    %4094 = vmatprep.subr.bf16.mxu0 %v4013
    %4095 = vmatpush1.bf16.msra.mxu0 %v4012
    %4096 = vmatprep.subr.bf16.mxu0 %v4005
    %4097 = vmatpush1.bf16.msra.mxu0 %v4004
    %4098 = vmatprep.subr.bf16.mxu0 %v3997
    %4099 = vmatpush1.bf16.msra.mxu0 %v3996
    %4100 = vmatprep.subr.bf16.mxu0 %v3989
    %4101 = vmatpush1.bf16.msra.mxu0 %v3988
    %4102 = vmatprep.subr.bf16.mxu0 %v3981
    %4103 = vmatpush1.bf16.msra.mxu0 %v3980
    %4104 = vmatprep.subr.bf16.mxu0 %v3973
    %4105 = vmatpush1.bf16.msra.mxu0 %v3972
    %4106 = vmatprep.subr.bf16.mxu0 %v3965
    %4107 = vmatpush1.bf16.msra.mxu0 %v3964
    %4108 = vmatprep.subr.bf16.mxu0 0
    %4109 = vmatpush2.bf16.msra.mxu0 0
    %4110 = vmatprep.subr.bf16.mxu0 0
    %4111 = vmatpush2.bf16.msra.mxu0 0
    %4112 = vmatprep.subr.bf16.mxu0 0
    %4113 = vmatpush2.bf16.msra.mxu0 0
    %4114 = vmatprep.subr.bf16.mxu0 0
    %4115 = vmatpush2.bf16.msra.mxu0 0
    %4116 = vmatprep.subr.bf16.mxu0 0
    %4117 = vmatpush2.bf16.msra.mxu0 0
    %4118 = vmatprep.subr.bf16.mxu0 0
    %4119 = vmatpush2.bf16.msra.mxu0 0
    %4120 = vmatprep.subr.bf16.mxu0 0
    %4121 = vmatpush2.bf16.msra.mxu0 0
    %4122 = vmatprep.subr.bf16.mxu0 0
    %4123 = vmatpush2.bf16.msra.mxu0 0
    %4124 = vmatprep.mubr.bf16.mxu0 0
    %4125 = vmatmul.mubr.bf16.gmra.mxu0 %v3706
    %v4126 = vpop.f32.mrf.mxu0
    %v4127 = vadd.f32 0.0, %v4126
    %v4128 = vpop.f32.mrf.mxu0
    %v4129 = vadd.f32 0.0, %v4128
    %v4130 = vpop.f32.mrf.mxu0
    %v4131 = vadd.f32 0.0, %v4130
    %v4132 = vpop.f32.mrf.mxu0
    %v4133 = vadd.f32 0.0, %v4132
    %4134 = vmatprep.mubr.bf16.mxu0 0
    %4135 = vmatmul.mubr.bf16.gmra.mxu0 %v3707
    %v4136 = vpop.f32.mrf.mxu0
    %v4137 = vadd.f32 0.0, %v4136
    %v4138 = vpop.f32.mrf.mxu0
    %v4139 = vadd.f32 0.0, %v4138
    %v4140 = vpop.f32.mrf.mxu0
    %v4141 = vadd.f32 0.0, %v4140
    %v4142 = vpop.f32.mrf.mxu0
    %v4143 = vadd.f32 0.0, %v4142
    %4144 = vdwg.mxu0
    %4145 = vmatprep.subr.bf16.mxu0 %v4023
    %4146 = vmatpush1.bf16.msra.mxu0 %v4022
    %4147 = vmatprep.subr.bf16.mxu0 %v4015
    %4148 = vmatpush1.bf16.msra.mxu0 %v4014
    %4149 = vmatprep.subr.bf16.mxu0 %v4007
    %4150 = vmatpush1.bf16.msra.mxu0 %v4006
    %4151 = vmatprep.subr.bf16.mxu0 %v3999
    %4152 = vmatpush1.bf16.msra.mxu0 %v3998
    %4153 = vmatprep.subr.bf16.mxu0 %v3991
    %4154 = vmatpush1.bf16.msra.mxu0 %v3990
    %4155 = vmatprep.subr.bf16.mxu0 %v3983
    %4156 = vmatpush1.bf16.msra.mxu0 %v3982
    %4157 = vmatprep.subr.bf16.mxu0 %v3975
    %4158 = vmatpush1.bf16.msra.mxu0 %v3974
    %4159 = vmatprep.subr.bf16.mxu0 %v3967
    %4160 = vmatpush1.bf16.msra.mxu0 %v3966
    %4161 = vmatprep.subr.bf16.mxu0 0
    %4162 = vmatpush2.bf16.msra.mxu0 0
    %4163 = vmatprep.subr.bf16.mxu0 0
    %4164 = vmatpush2.bf16.msra.mxu0 0
    %4165 = vmatprep.subr.bf16.mxu0 0
    %4166 = vmatpush2.bf16.msra.mxu0 0
    %4167 = vmatprep.subr.bf16.mxu0 0
    %4168 = vmatpush2.bf16.msra.mxu0 0
    %4169 = vmatprep.subr.bf16.mxu0 0
    %4170 = vmatpush2.bf16.msra.mxu0 0
    %4171 = vmatprep.subr.bf16.mxu0 0
    %4172 = vmatpush2.bf16.msra.mxu0 0
    %4173 = vmatprep.subr.bf16.mxu0 0
    %4174 = vmatpush2.bf16.msra.mxu0 0
    %4175 = vmatprep.subr.bf16.mxu0 0
    %4176 = vmatpush2.bf16.msra.mxu0 0
    %4177 = vmatprep.mubr.bf16.mxu0 0
    %4178 = vmatmul.mubr.bf16.gmra.mxu0 %v3706
    %v4179 = vpop.f32.mrf.mxu0
    %v4180 = vadd.f32 0.0, %v4179
    %v4181 = vpop.f32.mrf.mxu0
    %v4182 = vadd.f32 0.0, %v4181
    %v4183 = vpop.f32.mrf.mxu0
    %v4184 = vadd.f32 0.0, %v4183
    %v4185 = vpop.f32.mrf.mxu0
    %v4186 = vadd.f32 0.0, %v4185
    %4187 = vmatprep.mubr.bf16.mxu0 0
    %4188 = vmatmul.mubr.bf16.gmra.mxu0 %v3707
    %v4189 = vpop.f32.mrf.mxu0
    %v4190 = vadd.f32 0.0, %v4189
    %v4191 = vpop.f32.mrf.mxu0
    %v4192 = vadd.f32 0.0, %v4191
    %v4193 = vpop.f32.mrf.mxu0
    %v4194 = vadd.f32 0.0, %v4193
    %v4195 = vpop.f32.mrf.mxu0
    %v4196 = vadd.f32 0.0, %v4195
    %4197 = vdwg.mxu0
    %4198 = vmatprep.subr.bf16.mxu0 %v4025
    %4199 = vmatpush1.bf16.msra.mxu0 %v4024
    %4200 = vmatprep.subr.bf16.mxu0 %v4017
    %4201 = vmatpush1.bf16.msra.mxu0 %v4016
    %4202 = vmatprep.subr.bf16.mxu0 %v4009
    %4203 = vmatpush1.bf16.msra.mxu0 %v4008
    %4204 = vmatprep.subr.bf16.mxu0 %v4001
    %4205 = vmatpush1.bf16.msra.mxu0 %v4000
    %4206 = vmatprep.subr.bf16.mxu0 %v3993
    %4207 = vmatpush1.bf16.msra.mxu0 %v3992
    %4208 = vmatprep.subr.bf16.mxu0 %v3985
    %4209 = vmatpush1.bf16.msra.mxu0 %v3984
    %4210 = vmatprep.subr.bf16.mxu0 %v3977
    %4211 = vmatpush1.bf16.msra.mxu0 %v3976
    %4212 = vmatprep.subr.bf16.mxu0 %v3969
    %4213 = vmatpush1.bf16.msra.mxu0 %v3968
    %4214 = vmatprep.subr.bf16.mxu0 0
    %4215 = vmatpush2.bf16.msra.mxu0 0
    %4216 = vmatprep.subr.bf16.mxu0 0
    %4217 = vmatpush2.bf16.msra.mxu0 0
    %4218 = vmatprep.subr.bf16.mxu0 0
    %4219 = vmatpush2.bf16.msra.mxu0 0
    %4220 = vmatprep.subr.bf16.mxu0 0
    %4221 = vmatpush2.bf16.msra.mxu0 0
    %4222 = vmatprep.subr.bf16.mxu0 0
    %4223 = vmatpush2.bf16.msra.mxu0 0
    %4224 = vmatprep.subr.bf16.mxu0 0
    %4225 = vmatpush2.bf16.msra.mxu0 0
    %4226 = vmatprep.subr.bf16.mxu0 0
    %4227 = vmatpush2.bf16.msra.mxu0 0
    %4228 = vmatprep.subr.bf16.mxu0 0
    %4229 = vmatpush2.bf16.msra.mxu0 0
    %4230 = vmatprep.mubr.bf16.mxu0 0
    %4231 = vmatmul.mubr.bf16.gmra.mxu0 %v3706
    %v4232 = vpop.f32.mrf.mxu0
    %v4233 = vadd.f32 0.0, %v4232
    %v4234 = vpop.f32.mrf.mxu0
    %v4235 = vadd.f32 0.0, %v4234
    %v4236 = vpop.f32.mrf.mxu0
    %v4237 = vadd.f32 0.0, %v4236
    %v4238 = vpop.f32.mrf.mxu0
    %v4239 = vadd.f32 0.0, %v4238
    %4240 = vmatprep.mubr.bf16.mxu0 0
    %4241 = vmatmul.mubr.bf16.gmra.mxu0 %v3707
    %v4242 = vpop.f32.mrf.mxu0
    %v4243 = vadd.f32 0.0, %v4242
    %v4244 = vpop.f32.mrf.mxu0
    %v4245 = vadd.f32 0.0, %v4244
    %v4246 = vpop.f32.mrf.mxu0
    %v4247 = vadd.f32 0.0, %v4246
    %v4248 = vpop.f32.mrf.mxu0
    %v4249 = vadd.f32 0.0, %v4248
    %4250 = vdwg.mxu0
    %4251 = vmatprep.subr.bf16.mxu0 %v4027
    %4252 = vmatpush1.bf16.msra.mxu0 %v4026
    %4253 = vmatprep.subr.bf16.mxu0 %v4019
    %4254 = vmatpush1.bf16.msra.mxu0 %v4018
    %4255 = vmatprep.subr.bf16.mxu0 %v4011
    %4256 = vmatpush1.bf16.msra.mxu0 %v4010
    %4257 = vmatprep.subr.bf16.mxu0 %v4003
    %4258 = vmatpush1.bf16.msra.mxu0 %v4002
    %4259 = vmatprep.subr.bf16.mxu0 %v3995
    %4260 = vmatpush1.bf16.msra.mxu0 %v3994
    %4261 = vmatprep.subr.bf16.mxu0 %v3987
    %4262 = vmatpush1.bf16.msra.mxu0 %v3986
    %4263 = vmatprep.subr.bf16.mxu0 %v3979
    %4264 = vmatpush1.bf16.msra.mxu0 %v3978
    %4265 = vmatprep.subr.bf16.mxu0 %v3971
    %4266 = vmatpush1.bf16.msra.mxu0 %v3970
    %4267 = vmatprep.subr.bf16.mxu0 0
    %4268 = vmatpush2.bf16.msra.mxu0 0
    %4269 = vmatprep.subr.bf16.mxu0 0
    %4270 = vmatpush2.bf16.msra.mxu0 0
    %4271 = vmatprep.subr.bf16.mxu0 0
    %4272 = vmatpush2.bf16.msra.mxu0 0
    %4273 = vmatprep.subr.bf16.mxu0 0
    %4274 = vmatpush2.bf16.msra.mxu0 0
    %4275 = vmatprep.subr.bf16.mxu0 0
    %4276 = vmatpush2.bf16.msra.mxu0 0
    %4277 = vmatprep.subr.bf16.mxu0 0
    %4278 = vmatpush2.bf16.msra.mxu0 0
    %4279 = vmatprep.subr.bf16.mxu0 0
    %4280 = vmatpush2.bf16.msra.mxu0 0
    %4281 = vmatprep.subr.bf16.mxu0 0
    %4282 = vmatpush2.bf16.msra.mxu0 0
    %4283 = vmatprep.mubr.bf16.mxu0 0
    %4284 = vmatmul.mubr.bf16.gmra.mxu0 %v3706
    %v4285 = vpop.f32.mrf.mxu0
    %v4286 = vadd.f32 0.0, %v4285
    %v4287 = vpop.f32.mrf.mxu0
    %v4288 = vadd.f32 0.0, %v4287
    %v4289 = vpop.f32.mrf.mxu0
    %v4290 = vadd.f32 0.0, %v4289
    %v4291 = vpop.f32.mrf.mxu0
    %v4292 = vadd.f32 0.0, %v4291
    %4293 = vmatprep.mubr.bf16.mxu0 0
    %4294 = vmatmul.mubr.bf16.gmra.mxu0 %v3707
    %v4295 = vpop.f32.mrf.mxu0
    %v4296 = vadd.f32 0.0, %v4295
    %v4297 = vpop.f32.mrf.mxu0
    %v4298 = vadd.f32 0.0, %v4297
    %v4299 = vpop.f32.mrf.mxu0
    %v4300 = vadd.f32 0.0, %v4299
    %v4301 = vpop.f32.mrf.mxu0
    %v4302 = vadd.f32 0.0, %v4301
    %4303 = vdwg.mxu0
    %v4304 = vmul.f32 %v4127, %v3692
    %v4305 = vmul.f32 %v4131, %v3695
    %v4306 = vmul.f32 %v4137, %v3700
    %v4307 = vmul.f32 %v4141, %v3703
    %v4308 = vpack.c.bf16 %v4305, %v4304
    %v4309 = vpack.c.bf16 %v4307, %v4306
    %v4310 = vmul.f32 %v4129, %v3692
    %v4311 = vmul.f32 %v4133, %v3695
    %v4312 = vmul.f32 %v4139, %v3700
    %v4313 = vmul.f32 %v4143, %v3703
    %v4314 = vpack.c.bf16 %v4311, %v4310
    %v4315 = vpack.c.bf16 %v4313, %v4312
    %v4316 = vmul.f32 %v4180, %v3692
    %v4317 = vmul.f32 %v4184, %v3695
    %v4318 = vmul.f32 %v4190, %v3700
    %v4319 = vmul.f32 %v4194, %v3703
    %v4320 = vpack.c.bf16 %v4317, %v4316
    %v4321 = vpack.c.bf16 %v4319, %v4318
    %v4322 = vmul.f32 %v4182, %v3692
    %v4323 = vmul.f32 %v4186, %v3695
    %v4324 = vmul.f32 %v4192, %v3700
    %v4325 = vmul.f32 %v4196, %v3703
    %v4326 = vpack.c.bf16 %v4323, %v4322
    %v4327 = vpack.c.bf16 %v4325, %v4324
    %v4328 = vmul.f32 %v4233, %v3692
    %v4329 = vmul.f32 %v4237, %v3695
    %v4330 = vmul.f32 %v4243, %v3700
    %v4331 = vmul.f32 %v4247, %v3703
    %v4332 = vpack.c.bf16 %v4329, %v4328
    %v4333 = vpack.c.bf16 %v4331, %v4330
    %v4334 = vmul.f32 %v4235, %v3692
    %v4335 = vmul.f32 %v4239, %v3695
    %v4336 = vmul.f32 %v4245, %v3700
    %v4337 = vmul.f32 %v4249, %v3703
    %v4338 = vpack.c.bf16 %v4335, %v4334
    %v4339 = vpack.c.bf16 %v4337, %v4336
    %v4340 = vmul.f32 %v4286, %v3692
    %v4341 = vmul.f32 %v4290, %v3695
    %v4342 = vmul.f32 %v4296, %v3700
    %v4343 = vmul.f32 %v4300, %v3703
    %v4344 = vpack.c.bf16 %v4341, %v4340
    %v4345 = vpack.c.bf16 %v4343, %v4342
    %v4346 = vmul.f32 %v4288, %v3692
    %v4347 = vmul.f32 %v4292, %v3695
    %v4348 = vmul.f32 %v4298, %v3700
    %v4349 = vmul.f32 %v4302, %v3703
    %v4350 = vpack.c.bf16 %v4347, %v4346
    %v4351 = vpack.c.bf16 %v4349, %v4348
    %v4352 = vld [vmem:[#allocation11] sm:$0xf]
    %v4353 = vld [vmem:[#allocation11 + $0x4] sm:$0xf]
    %v4354 = vld [vmem:[#allocation11 + $0x8] sm:$0xf]
    %v4355 = vld [vmem:[#allocation11 + $0xc] sm:$0xf]
    %v4356 = vld [vmem:[#allocation11 + $0x10] sm:$0xf]
    %v4357 = vld [vmem:[#allocation11 + $0x14] sm:$0xf]
    %v4358 = vld [vmem:[#allocation11 + $0x18] sm:$0xf]
    %v4359 = vld [vmem:[#allocation11 + $0x1c] sm:$0xf]
    %v4360 = vld [vmem:[#allocation11 + $0x20] sm:$0xf]
    %v4361 = vld [vmem:[#allocation11 + $0x24] sm:$0xf]
    %v4362 = vld [vmem:[#allocation11 + $0x28] sm:$0xf]
    %v4363 = vld [vmem:[#allocation11 + $0x2c] sm:$0xf]
    %v4364 = vld [vmem:[#allocation11 + $0x30] sm:$0xf]
    %v4365 = vld [vmem:[#allocation11 + $0x34] sm:$0xf]
    %v4366 = vld [vmem:[#allocation11 + $0x38] sm:$0xf]
    %v4367 = vld [vmem:[#allocation11 + $0x3c] sm:$0xf]
    %v4368 = vld [vmem:[#allocation11 + $0x40] sm:$0xf]
    %v4369 = vld [vmem:[#allocation11 + $0x44] sm:$0xf]
    %v4370 = vld [vmem:[#allocation11 + $0x48] sm:$0xf]
    %v4371 = vld [vmem:[#allocation11 + $0x4c] sm:$0xf]
    %v4372 = vld [vmem:[#allocation11 + $0x50] sm:$0xf]
    %v4373 = vld [vmem:[#allocation11 + $0x54] sm:$0xf]
    %v4374 = vld [vmem:[#allocation11 + $0x58] sm:$0xf]
    %v4375 = vld [vmem:[#allocation11 + $0x5c] sm:$0xf]
    %v4376 = vld [vmem:[#allocation11 + $0x60] sm:$0xf]
    %v4377 = vld [vmem:[#allocation11 + $0x64] sm:$0xf]
    %v4378 = vld [vmem:[#allocation11 + $0x68] sm:$0xf]
    %v4379 = vld [vmem:[#allocation11 + $0x6c] sm:$0xf]
    %v4380 = vld [vmem:[#allocation11 + $0x70] sm:$0xf]
    %v4381 = vld [vmem:[#allocation11 + $0x74] sm:$0xf]
    %v4382 = vld [vmem:[#allocation11 + $0x78] sm:$0xf]
    %v4383 = vld [vmem:[#allocation11 + $0x7c] sm:$0xf]
    %v4384 = vld [vmem:[#allocation11 + $0x80] sm:$0xf]
    %v4385 = vld [vmem:[#allocation11 + $0x84] sm:$0xf]
    %v4386 = vld [vmem:[#allocation11 + $0x88] sm:$0xf]
    %v4387 = vld [vmem:[#allocation11 + $0x8c] sm:$0xf]
    %v4388 = vld [vmem:[#allocation11 + $0x90] sm:$0xf]
    %v4389 = vld [vmem:[#allocation11 + $0x94] sm:$0xf]
    %v4390 = vld [vmem:[#allocation11 + $0x98] sm:$0xf]
    %v4391 = vld [vmem:[#allocation11 + $0x9c] sm:$0xf]
    %v4392 = vld [vmem:[#allocation11 + $0xa0] sm:$0xf]
    %v4393 = vld [vmem:[#allocation11 + $0xa4] sm:$0xf]
    %v4394 = vld [vmem:[#allocation11 + $0xa8] sm:$0xf]
    %v4395 = vld [vmem:[#allocation11 + $0xac] sm:$0xf]
    %v4396 = vld [vmem:[#allocation11 + $0xb0] sm:$0xf]
    %v4397 = vld [vmem:[#allocation11 + $0xb4] sm:$0xf]
    %v4398 = vld [vmem:[#allocation11 + $0xb8] sm:$0xf]
    %v4399 = vld [vmem:[#allocation11 + $0xbc] sm:$0xf]
    %v4400 = vld [vmem:[#allocation11 + $0xc0] sm:$0xf]
    %v4401 = vld [vmem:[#allocation11 + $0xc4] sm:$0xf]
    %v4402 = vld [vmem:[#allocation11 + $0xc8] sm:$0xf]
    %v4403 = vld [vmem:[#allocation11 + $0xcc] sm:$0xf]
    %v4404 = vld [vmem:[#allocation11 + $0xd0] sm:$0xf]
    %v4405 = vld [vmem:[#allocation11 + $0xd4] sm:$0xf]
    %v4406 = vld [vmem:[#allocation11 + $0xd8] sm:$0xf]
    %v4407 = vld [vmem:[#allocation11 + $0xdc] sm:$0xf]
    %v4408 = vld [vmem:[#allocation11 + $0xe0] sm:$0xf]
    %v4409 = vld [vmem:[#allocation11 + $0xe4] sm:$0xf]
    %v4410 = vld [vmem:[#allocation11 + $0xe8] sm:$0xf]
    %v4411 = vld [vmem:[#allocation11 + $0xec] sm:$0xf]
    %v4412 = vld [vmem:[#allocation11 + $0xf0] sm:$0xf]
    %v4413 = vld [vmem:[#allocation11 + $0xf4] sm:$0xf]
    %v4414 = vld [vmem:[#allocation11 + $0xf8] sm:$0xf]
    %v4415 = vld [vmem:[#allocation11 + $0xfc] sm:$0xf]
    %v4416 = vld [vmem:[#allocation11 + $0x100] sm:$0xf]
    %v4417 = vld [vmem:[#allocation11 + $0x104] sm:$0xf]
    %v4418 = vld [vmem:[#allocation11 + $0x108] sm:$0xf]
    %v4419 = vld [vmem:[#allocation11 + $0x10c] sm:$0xf]
    %v4420 = vld [vmem:[#allocation11 + $0x110] sm:$0xf]
    %v4421 = vld [vmem:[#allocation11 + $0x114] sm:$0xf]
    %v4422 = vld [vmem:[#allocation11 + $0x118] sm:$0xf]
    %v4423 = vld [vmem:[#allocation11 + $0x11c] sm:$0xf]
    %v4424 = vld [vmem:[#allocation11 + $0x120] sm:$0xf]
    %v4425 = vld [vmem:[#allocation11 + $0x124] sm:$0xf]
    %v4426 = vld [vmem:[#allocation11 + $0x128] sm:$0xf]
    %v4427 = vld [vmem:[#allocation11 + $0x12c] sm:$0xf]
    %v4428 = vld [vmem:[#allocation11 + $0x130] sm:$0xf]
    %v4429 = vld [vmem:[#allocation11 + $0x134] sm:$0xf]
    %v4430 = vld [vmem:[#allocation11 + $0x138] sm:$0xf]
    %v4431 = vld [vmem:[#allocation11 + $0x13c] sm:$0xf]
    %v4432 = vld [vmem:[#allocation11 + $0x140] sm:$0xf]
    %v4433 = vld [vmem:[#allocation11 + $0x144] sm:$0xf]
    %v4434 = vld [vmem:[#allocation11 + $0x148] sm:$0xf]
    %v4435 = vld [vmem:[#allocation11 + $0x14c] sm:$0xf]
    %v4436 = vld [vmem:[#allocation11 + $0x150] sm:$0xf]
    %v4437 = vld [vmem:[#allocation11 + $0x154] sm:$0xf]
    %v4438 = vld [vmem:[#allocation11 + $0x158] sm:$0xf]
    %v4439 = vld [vmem:[#allocation11 + $0x15c] sm:$0xf]
    %v4440 = vld [vmem:[#allocation11 + $0x160] sm:$0xf]
    %v4441 = vld [vmem:[#allocation11 + $0x164] sm:$0xf]
    %v4442 = vld [vmem:[#allocation11 + $0x168] sm:$0xf]
    %v4443 = vld [vmem:[#allocation11 + $0x16c] sm:$0xf]
    %v4444 = vld [vmem:[#allocation11 + $0x170] sm:$0xf]
    %v4445 = vld [vmem:[#allocation11 + $0x174] sm:$0xf]
    %v4446 = vld [vmem:[#allocation11 + $0x178] sm:$0xf]
    %v4447 = vld [vmem:[#allocation11 + $0x17c] sm:$0xf]
    %v4448 = vld [vmem:[#allocation11 + $0x180] sm:$0xf]
    %v4449 = vld [vmem:[#allocation11 + $0x184] sm:$0xf]
    %v4450 = vld [vmem:[#allocation11 + $0x188] sm:$0xf]
    %v4451 = vld [vmem:[#allocation11 + $0x18c] sm:$0xf]
    %v4452 = vld [vmem:[#allocation11 + $0x190] sm:$0xf]
    %v4453 = vld [vmem:[#allocation11 + $0x194] sm:$0xf]
    %v4454 = vld [vmem:[#allocation11 + $0x198] sm:$0xf]
    %v4455 = vld [vmem:[#allocation11 + $0x19c] sm:$0xf]
    %v4456 = vld [vmem:[#allocation11 + $0x1a0] sm:$0xf]
    %v4457 = vld [vmem:[#allocation11 + $0x1a4] sm:$0xf]
    %v4458 = vld [vmem:[#allocation11 + $0x1a8] sm:$0xf]
    %v4459 = vld [vmem:[#allocation11 + $0x1ac] sm:$0xf]
    %v4460 = vld [vmem:[#allocation11 + $0x1b0] sm:$0xf]
    %v4461 = vld [vmem:[#allocation11 + $0x1b4] sm:$0xf]
    %v4462 = vld [vmem:[#allocation11 + $0x1b8] sm:$0xf]
    %v4463 = vld [vmem:[#allocation11 + $0x1bc] sm:$0xf]
    %v4464 = vld [vmem:[#allocation11 + $0x1c0] sm:$0xf]
    %v4465 = vld [vmem:[#allocation11 + $0x1c4] sm:$0xf]
    %v4466 = vld [vmem:[#allocation11 + $0x1c8] sm:$0xf]
    %v4467 = vld [vmem:[#allocation11 + $0x1cc] sm:$0xf]
    %v4468 = vld [vmem:[#allocation11 + $0x1d0] sm:$0xf]
    %v4469 = vld [vmem:[#allocation11 + $0x1d4] sm:$0xf]
    %v4470 = vld [vmem:[#allocation11 + $0x1d8] sm:$0xf]
    %v4471 = vld [vmem:[#allocation11 + $0x1dc] sm:$0xf]
    %v4472 = vld [vmem:[#allocation11 + $0x1e0] sm:$0xf]
    %v4473 = vld [vmem:[#allocation11 + $0x1e4] sm:$0xf]
    %v4474 = vld [vmem:[#allocation11 + $0x1e8] sm:$0xf]
    %v4475 = vld [vmem:[#allocation11 + $0x1ec] sm:$0xf]
    %v4476 = vld [vmem:[#allocation11 + $0x1f0] sm:$0xf]
    %v4477 = vld [vmem:[#allocation11 + $0x1f4] sm:$0xf]
    %v4478 = vld [vmem:[#allocation11 + $0x1f8] sm:$0xf]
    %v4479 = vld [vmem:[#allocation11 + $0x1fc] sm:$0xf]
    %v4608 = vunpack.c.l.b16 %v4352
    %v4609 = vunpack.c.l.b16 %v4353
    %v4610 = vunpack.c.l.b16 %v4354
    %v4611 = vunpack.c.l.b16 %v4355
    %v4612 = vunpack.c.l.b16 %v4356
    %v4613 = vunpack.c.l.b16 %v4357
    %v4614 = vunpack.c.l.b16 %v4358
    %v4615 = vunpack.c.l.b16 %v4359
    %v4616 = vunpack.c.l.b16 %v4360
    %v4617 = vunpack.c.l.b16 %v4361
    %v4618 = vunpack.c.l.b16 %v4362
    %v4619 = vunpack.c.l.b16 %v4363
    %v4620 = vunpack.c.l.b16 %v4364
    %v4621 = vunpack.c.l.b16 %v4365
    %v4622 = vunpack.c.l.b16 %v4366
    %v4623 = vunpack.c.l.b16 %v4367
    %v4624 = vunpack.c.l.b16 %v4368
    %v4625 = vunpack.c.l.b16 %v4369
    %v4626 = vunpack.c.l.b16 %v4370
    %v4627 = vunpack.c.l.b16 %v4371
    %v4628 = vunpack.c.l.b16 %v4372
    %v4629 = vunpack.c.l.b16 %v4373
    %v4630 = vunpack.c.l.b16 %v4374
    %v4631 = vunpack.c.l.b16 %v4375
    %v4632 = vunpack.c.l.b16 %v4376
    %v4633 = vunpack.c.l.b16 %v4377
    %v4634 = vunpack.c.l.b16 %v4378
    %v4635 = vunpack.c.l.b16 %v4379
    %v4636 = vunpack.c.l.b16 %v4380
    %v4637 = vunpack.c.l.b16 %v4381
    %v4638 = vunpack.c.l.b16 %v4382
    %v4639 = vunpack.c.l.b16 %v4383
    %v4640 = vunpack.c.l.b16 %v4384
    %v4641 = vunpack.c.l.b16 %v4385
    %v4642 = vunpack.c.l.b16 %v4386
    %v4643 = vunpack.c.l.b16 %v4387
    %v4644 = vunpack.c.l.b16 %v4388
    %v4645 = vunpack.c.l.b16 %v4389
    %v4646 = vunpack.c.l.b16 %v4390
    %v4647 = vunpack.c.l.b16 %v4391
    %v4648 = vunpack.c.l.b16 %v4392
    %v4649 = vunpack.c.l.b16 %v4393
    %v4650 = vunpack.c.l.b16 %v4394
    %v4651 = vunpack.c.l.b16 %v4395
    %v4652 = vunpack.c.l.b16 %v4396
    %v4653 = vunpack.c.l.b16 %v4397
    %v4654 = vunpack.c.l.b16 %v4398
    %v4655 = vunpack.c.l.b16 %v4399
    %v4656 = vunpack.c.l.b16 %v4400
    %v4657 = vunpack.c.l.b16 %v4401
    %v4658 = vunpack.c.l.b16 %v4402
    %v4659 = vunpack.c.l.b16 %v4403
    %v4660 = vunpack.c.l.b16 %v4404
    %v4661 = vunpack.c.l.b16 %v4405
    %v4662 = vunpack.c.l.b16 %v4406
    %v4663 = vunpack.c.l.b16 %v4407
    %v4664 = vunpack.c.l.b16 %v4408
    %v4665 = vunpack.c.l.b16 %v4409
    %v4666 = vunpack.c.l.b16 %v4410
    %v4667 = vunpack.c.l.b16 %v4411
    %v4668 = vunpack.c.l.b16 %v4412
    %v4669 = vunpack.c.l.b16 %v4413
    %v4670 = vunpack.c.l.b16 %v4414
    %v4671 = vunpack.c.l.b16 %v4415
    %v4672 = vunpack.c.l.b16 %v4416
    %v4673 = vunpack.c.l.b16 %v4417
    %v4674 = vunpack.c.l.b16 %v4418
    %v4675 = vunpack.c.l.b16 %v4419
    %v4676 = vunpack.c.l.b16 %v4420
    %v4677 = vunpack.c.l.b16 %v4421
    %v4678 = vunpack.c.l.b16 %v4422
    %v4679 = vunpack.c.l.b16 %v4423
    %v4680 = vunpack.c.l.b16 %v4424
    %v4681 = vunpack.c.l.b16 %v4425
    %v4682 = vunpack.c.l.b16 %v4426
    %v4683 = vunpack.c.l.b16 %v4427
    %v4684 = vunpack.c.l.b16 %v4428
    %v4685 = vunpack.c.l.b16 %v4429
    %v4686 = vunpack.c.l.b16 %v4430
    %v4687 = vunpack.c.l.b16 %v4431
    %v4688 = vunpack.c.l.b16 %v4432
    %v4689 = vunpack.c.l.b16 %v4433
    %v4690 = vunpack.c.l.b16 %v4434
    %v4691 = vunpack.c.l.b16 %v4435
    %v4692 = vunpack.c.l.b16 %v4436
    %v4693 = vunpack.c.l.b16 %v4437
    %v4694 = vunpack.c.l.b16 %v4438
    %v4695 = vunpack.c.l.b16 %v4439
    %v4696 = vunpack.c.l.b16 %v4440
    %v4697 = vunpack.c.l.b16 %v4441
    %v4698 = vunpack.c.l.b16 %v4442
    %v4699 = vunpack.c.l.b16 %v4443
    %v4700 = vunpack.c.l.b16 %v4444
    %v4701 = vunpack.c.l.b16 %v4445
    %v4702 = vunpack.c.l.b16 %v4446
    %v4703 = vunpack.c.l.b16 %v4447
    %v4704 = vunpack.c.l.b16 %v4448
    %v4705 = vunpack.c.l.b16 %v4449
    %v4706 = vunpack.c.l.b16 %v4450
    %v4707 = vunpack.c.l.b16 %v4451
    %v4708 = vunpack.c.l.b16 %v4452
    %v4709 = vunpack.c.l.b16 %v4453
    %v4710 = vunpack.c.l.b16 %v4454
    %v4711 = vunpack.c.l.b16 %v4455
    %v4712 = vunpack.c.l.b16 %v4456
    %v4713 = vunpack.c.l.b16 %v4457
    %v4714 = vunpack.c.l.b16 %v4458
    %v4715 = vunpack.c.l.b16 %v4459
    %v4716 = vunpack.c.l.b16 %v4460
    %v4717 = vunpack.c.l.b16 %v4461
    %v4718 = vunpack.c.l.b16 %v4462
    %v4719 = vunpack.c.l.b16 %v4463
    %v4720 = vunpack.c.l.b16 %v4464
    %v4721 = vunpack.c.l.b16 %v4465
    %v4722 = vunpack.c.l.b16 %v4466
    %v4723 = vunpack.c.l.b16 %v4467
    %v4724 = vunpack.c.l.b16 %v4468
    %v4725 = vunpack.c.l.b16 %v4469
    %v4726 = vunpack.c.l.b16 %v4470
    %v4727 = vunpack.c.l.b16 %v4471
    %v4728 = vunpack.c.l.b16 %v4472
    %v4729 = vunpack.c.l.b16 %v4473
    %v4730 = vunpack.c.l.b16 %v4474
    %v4731 = vunpack.c.l.b16 %v4475
    %v4732 = vunpack.c.l.b16 %v4476
    %v4733 = vunpack.c.l.b16 %v4477
    %v4734 = vunpack.c.l.b16 %v4478
    %v4735 = vunpack.c.l.b16 %v4479
    %v4736 = vpack.c.b16 %v4609, %v4608
    %v4737 = vpack.c.b16 %v4611, %v4610
    %v4738 = vpack.c.b16 %v4613, %v4612
    %v4739 = vpack.c.b16 %v4615, %v4614
    %v4740 = vpack.c.b16 %v4617, %v4616
    %v4741 = vpack.c.b16 %v4619, %v4618
    %v4742 = vpack.c.b16 %v4621, %v4620
    %v4743 = vpack.c.b16 %v4623, %v4622
    %v4744 = vpack.c.b16 %v4625, %v4624
    %v4745 = vpack.c.b16 %v4627, %v4626
    %v4746 = vpack.c.b16 %v4629, %v4628
    %v4747 = vpack.c.b16 %v4631, %v4630
    %v4748 = vpack.c.b16 %v4633, %v4632
    %v4749 = vpack.c.b16 %v4635, %v4634
    %v4750 = vpack.c.b16 %v4637, %v4636
    %v4751 = vpack.c.b16 %v4639, %v4638
    %v4752 = vpack.c.b16 %v4641, %v4640
    %v4753 = vpack.c.b16 %v4643, %v4642
    %v4754 = vpack.c.b16 %v4645, %v4644
    %v4755 = vpack.c.b16 %v4647, %v4646
    %v4756 = vpack.c.b16 %v4649, %v4648
    %v4757 = vpack.c.b16 %v4651, %v4650
    %v4758 = vpack.c.b16 %v4653, %v4652
    %v4759 = vpack.c.b16 %v4655, %v4654
    %v4760 = vpack.c.b16 %v4657, %v4656
    %v4761 = vpack.c.b16 %v4659, %v4658
    %v4762 = vpack.c.b16 %v4661, %v4660
    %v4763 = vpack.c.b16 %v4663, %v4662
    %v4764 = vpack.c.b16 %v4665, %v4664
    %v4765 = vpack.c.b16 %v4667, %v4666
    %v4766 = vpack.c.b16 %v4669, %v4668
    %v4767 = vpack.c.b16 %v4671, %v4670
    %v4768 = vpack.c.b16 %v4673, %v4672
    %v4769 = vpack.c.b16 %v4675, %v4674
    %v4770 = vpack.c.b16 %v4677, %v4676
    %v4771 = vpack.c.b16 %v4679, %v4678
    %v4772 = vpack.c.b16 %v4681, %v4680
    %v4773 = vpack.c.b16 %v4683, %v4682
    %v4774 = vpack.c.b16 %v4685, %v4684
    %v4775 = vpack.c.b16 %v4687, %v4686
    %v4776 = vpack.c.b16 %v4689, %v4688
    %v4777 = vpack.c.b16 %v4691, %v4690
    %v4778 = vpack.c.b16 %v4693, %v4692
    %v4779 = vpack.c.b16 %v4695, %v4694
    %v4780 = vpack.c.b16 %v4697, %v4696
    %v4781 = vpack.c.b16 %v4699, %v4698
    %v4782 = vpack.c.b16 %v4701, %v4700
    %v4783 = vpack.c.b16 %v4703, %v4702
    %v4784 = vpack.c.b16 %v4705, %v4704
    %v4785 = vpack.c.b16 %v4707, %v4706
    %v4786 = vpack.c.b16 %v4709, %v4708
    %v4787 = vpack.c.b16 %v4711, %v4710
    %v4788 = vpack.c.b16 %v4713, %v4712
    %v4789 = vpack.c.b16 %v4715, %v4714
    %v4790 = vpack.c.b16 %v4717, %v4716
    %v4791 = vpack.c.b16 %v4719, %v4718
    %v4792 = vpack.c.b16 %v4721, %v4720
    %v4793 = vpack.c.b16 %v4723, %v4722
    %v4794 = vpack.c.b16 %v4725, %v4724
    %v4795 = vpack.c.b16 %v4727, %v4726
    %v4796 = vpack.c.b16 %v4729, %v4728
    %v4797 = vpack.c.b16 %v4731, %v4730
    %v4798 = vpack.c.b16 %v4733, %v4732
    %v4799 = vpack.c.b16 %v4735, %v4734
    %4864 = vmatprep.subr.bf16.mxu0 0
    %4865 = vmatpush1.bf16.msra.mxu0 %v4743
    %4866 = vmatprep.subr.bf16.mxu0 0
    %4867 = vmatpush1.bf16.msra.mxu0 %v4742
    %4868 = vmatprep.subr.bf16.mxu0 0
    %4869 = vmatpush1.bf16.msra.mxu0 %v4741
    %4870 = vmatprep.subr.bf16.mxu0 0
    %4871 = vmatpush1.bf16.msra.mxu0 %v4740
    %4872 = vmatprep.subr.bf16.mxu0 0
    %4873 = vmatpush1.bf16.msra.mxu0 %v4739
    %4874 = vmatprep.subr.bf16.mxu0 0
    %4875 = vmatpush1.bf16.msra.mxu0 %v4738
    %4876 = vmatprep.subr.bf16.mxu0 0
    %4877 = vmatpush1.bf16.msra.mxu0 %v4737
    %4878 = vmatprep.subr.bf16.mxu0 0
    %4879 = vmatpush1.bf16.msra.mxu0 %v4736
    %4880 = vmatprep.subr.bf16.mxu0 0
    %4881 = vmatpush2.bf16.msra.mxu0 %v4751
    %4882 = vmatprep.subr.bf16.mxu0 0
    %4883 = vmatpush2.bf16.msra.mxu0 %v4750
    %4884 = vmatprep.subr.bf16.mxu0 0
    %4885 = vmatpush2.bf16.msra.mxu0 %v4749
    %4886 = vmatprep.subr.bf16.mxu0 0
    %4887 = vmatpush2.bf16.msra.mxu0 %v4748
    %4888 = vmatprep.subr.bf16.mxu0 0
    %4889 = vmatpush2.bf16.msra.mxu0 %v4747
    %4890 = vmatprep.subr.bf16.mxu0 0
    %4891 = vmatpush2.bf16.msra.mxu0 %v4746
    %4892 = vmatprep.subr.bf16.mxu0 0
    %4893 = vmatpush2.bf16.msra.mxu0 %v4745
    %4894 = vmatprep.subr.bf16.mxu0 0
    %4895 = vmatpush2.bf16.msra.mxu0 %v4744
    %4896 = vmatprep.mubr.bf16.mxu0 %v4314
    %4897 = vmatmul.mubr.bf16.gmra.mxu0 %v4308
    %v4898 = vpop.f32.mrf.mxu0
    %v4899 = vadd.f32 0.0, %v4898
    %v4900 = vpop.f32.mrf.mxu0
    %v4901 = vpop.f32.mrf.mxu0
    %v4902 = vadd.f32 0.0, %v4901
    %v4903 = vpop.f32.mrf.mxu0
    %4904 = vmatprep.mubr.bf16.mxu0 %v4315
    %4905 = vmatmul.mubr.bf16.gmra.mxu0 %v4309
    %v4906 = vpop.f32.mrf.mxu0
    %v4907 = vadd.f32 0.0, %v4906
    %v4908 = vpop.f32.mrf.mxu0
    %v4909 = vpop.f32.mrf.mxu0
    %v4910 = vadd.f32 0.0, %v4909
    %v4911 = vpop.f32.mrf.mxu0
    %4912 = vdwg.mxu0
    %4913 = vmatprep.subr.bf16.mxu0 0
    %4914 = vmatpush1.bf16.msra.mxu0 %v4759
    %4915 = vmatprep.subr.bf16.mxu0 0
    %4916 = vmatpush1.bf16.msra.mxu0 %v4758
    %4917 = vmatprep.subr.bf16.mxu0 0
    %4918 = vmatpush1.bf16.msra.mxu0 %v4757
    %4919 = vmatprep.subr.bf16.mxu0 0
    %4920 = vmatpush1.bf16.msra.mxu0 %v4756
    %4921 = vmatprep.subr.bf16.mxu0 0
    %4922 = vmatpush1.bf16.msra.mxu0 %v4755
    %4923 = vmatprep.subr.bf16.mxu0 0
    %4924 = vmatpush1.bf16.msra.mxu0 %v4754
    %4925 = vmatprep.subr.bf16.mxu0 0
    %4926 = vmatpush1.bf16.msra.mxu0 %v4753
    %4927 = vmatprep.subr.bf16.mxu0 0
    %4928 = vmatpush1.bf16.msra.mxu0 %v4752
    %4929 = vmatprep.subr.bf16.mxu0 0
    %4930 = vmatpush2.bf16.msra.mxu0 %v4767
    %4931 = vmatprep.subr.bf16.mxu0 0
    %4932 = vmatpush2.bf16.msra.mxu0 %v4766
    %4933 = vmatprep.subr.bf16.mxu0 0
    %4934 = vmatpush2.bf16.msra.mxu0 %v4765
    %4935 = vmatprep.subr.bf16.mxu0 0
    %4936 = vmatpush2.bf16.msra.mxu0 %v4764
    %4937 = vmatprep.subr.bf16.mxu0 0
    %4938 = vmatpush2.bf16.msra.mxu0 %v4763
    %4939 = vmatprep.subr.bf16.mxu0 0
    %4940 = vmatpush2.bf16.msra.mxu0 %v4762
    %4941 = vmatprep.subr.bf16.mxu0 0
    %4942 = vmatpush2.bf16.msra.mxu0 %v4761
    %4943 = vmatprep.subr.bf16.mxu0 0
    %4944 = vmatpush2.bf16.msra.mxu0 %v4760
    %4945 = vmatprep.mubr.bf16.mxu0 %v4326
    %4946 = vmatmul.mubr.bf16.gmra.mxu0 %v4320
    %v4947 = vpop.f32.mrf.mxu0
    %v4948 = vadd.f32 %v4899, %v4947
    %v4949 = vpop.f32.mrf.mxu0
    %v4950 = vpop.f32.mrf.mxu0
    %v4951 = vadd.f32 %v4902, %v4950
    %v4952 = vpop.f32.mrf.mxu0
    %4953 = vmatprep.mubr.bf16.mxu0 %v4327
    %4954 = vmatmul.mubr.bf16.gmra.mxu0 %v4321
    %v4955 = vpop.f32.mrf.mxu0
    %v4956 = vadd.f32 %v4907, %v4955
    %v4957 = vpop.f32.mrf.mxu0
    %v4958 = vpop.f32.mrf.mxu0
    %v4959 = vadd.f32 %v4910, %v4958
    %v4960 = vpop.f32.mrf.mxu0
    %4961 = vdwg.mxu0
    %4962 = vmatprep.subr.bf16.mxu0 0
    %4963 = vmatpush1.bf16.msra.mxu0 %v4775
    %4964 = vmatprep.subr.bf16.mxu0 0
    %4965 = vmatpush1.bf16.msra.mxu0 %v4774
    %4966 = vmatprep.subr.bf16.mxu0 0
    %4967 = vmatpush1.bf16.msra.mxu0 %v4773
    %4968 = vmatprep.subr.bf16.mxu0 0
    %4969 = vmatpush1.bf16.msra.mxu0 %v4772
    %4970 = vmatprep.subr.bf16.mxu0 0
    %4971 = vmatpush1.bf16.msra.mxu0 %v4771
    %4972 = vmatprep.subr.bf16.mxu0 0
    %4973 = vmatpush1.bf16.msra.mxu0 %v4770
    %4974 = vmatprep.subr.bf16.mxu0 0
    %4975 = vmatpush1.bf16.msra.mxu0 %v4769
    %4976 = vmatprep.subr.bf16.mxu0 0
    %4977 = vmatpush1.bf16.msra.mxu0 %v4768
    %4978 = vmatprep.subr.bf16.mxu0 0
    %4979 = vmatpush2.bf16.msra.mxu0 %v4783
    %4980 = vmatprep.subr.bf16.mxu0 0
    %4981 = vmatpush2.bf16.msra.mxu0 %v4782
    %4982 = vmatprep.subr.bf16.mxu0 0
    %4983 = vmatpush2.bf16.msra.mxu0 %v4781
    %4984 = vmatprep.subr.bf16.mxu0 0
    %4985 = vmatpush2.bf16.msra.mxu0 %v4780
    %4986 = vmatprep.subr.bf16.mxu0 0
    %4987 = vmatpush2.bf16.msra.mxu0 %v4779
    %4988 = vmatprep.subr.bf16.mxu0 0
    %4989 = vmatpush2.bf16.msra.mxu0 %v4778
    %4990 = vmatprep.subr.bf16.mxu0 0
    %4991 = vmatpush2.bf16.msra.mxu0 %v4777
    %4992 = vmatprep.subr.bf16.mxu0 0
    %4993 = vmatpush2.bf16.msra.mxu0 %v4776
    %4994 = vmatprep.mubr.bf16.mxu0 %v4338
    %4995 = vmatmul.mubr.bf16.gmra.mxu0 %v4332
    %v4996 = vpop.f32.mrf.mxu0
    %v4997 = vadd.f32 %v4948, %v4996
    %v4998 = vpop.f32.mrf.mxu0
    %v4999 = vpop.f32.mrf.mxu0
    %v5000 = vadd.f32 %v4951, %v4999
    %v5001 = vpop.f32.mrf.mxu0
    %5002 = vmatprep.mubr.bf16.mxu0 %v4339
    %5003 = vmatmul.mubr.bf16.gmra.mxu0 %v4333
    %v5004 = vpop.f32.mrf.mxu0
    %v5005 = vadd.f32 %v4956, %v5004
    %v5006 = vpop.f32.mrf.mxu0
    %v5007 = vpop.f32.mrf.mxu0
    %v5008 = vadd.f32 %v4959, %v5007
    %v5009 = vpop.f32.mrf.mxu0
    %5010 = vdwg.mxu0
    %5011 = vmatprep.subr.bf16.mxu0 0
    %5012 = vmatpush1.bf16.msra.mxu0 %v4791
    %5013 = vmatprep.subr.bf16.mxu0 0
    %5014 = vmatpush1.bf16.msra.mxu0 %v4790
    %5015 = vmatprep.subr.bf16.mxu0 0
    %5016 = vmatpush1.bf16.msra.mxu0 %v4789
    %5017 = vmatprep.subr.bf16.mxu0 0
    %5018 = vmatpush1.bf16.msra.mxu0 %v4788
    %5019 = vmatprep.subr.bf16.mxu0 0
    %5020 = vmatpush1.bf16.msra.mxu0 %v4787
    %5021 = vmatprep.subr.bf16.mxu0 0
    %5022 = vmatpush1.bf16.msra.mxu0 %v4786
    %5023 = vmatprep.subr.bf16.mxu0 0
    %5024 = vmatpush1.bf16.msra.mxu0 %v4785
    %5025 = vmatprep.subr.bf16.mxu0 0
    %5026 = vmatpush1.bf16.msra.mxu0 %v4784
    %5027 = vmatprep.subr.bf16.mxu0 0
    %5028 = vmatpush2.bf16.msra.mxu0 %v4799
    %5029 = vmatprep.subr.bf16.mxu0 0
    %5030 = vmatpush2.bf16.msra.mxu0 %v4798
    %5031 = vmatprep.subr.bf16.mxu0 0
    %5032 = vmatpush2.bf16.msra.mxu0 %v4797
    %5033 = vmatprep.subr.bf16.mxu0 0
    %5034 = vmatpush2.bf16.msra.mxu0 %v4796
    %5035 = vmatprep.subr.bf16.mxu0 0
    %5036 = vmatpush2.bf16.msra.mxu0 %v4795
    %5037 = vmatprep.subr.bf16.mxu0 0
    %5038 = vmatpush2.bf16.msra.mxu0 %v4794
    %5039 = vmatprep.subr.bf16.mxu0 0
    %5040 = vmatpush2.bf16.msra.mxu0 %v4793
    %5041 = vmatprep.subr.bf16.mxu0 0
    %5042 = vmatpush2.bf16.msra.mxu0 %v4792
    %5043 = vmatprep.mubr.bf16.mxu0 %v4350
    %5044 = vmatmul.mubr.bf16.gmra.mxu0 %v4344
    %v5045 = vpop.f32.mrf.mxu0
    %v5046 = vadd.f32 %v4997, %v5045
    %v5047 = vpop.f32.mrf.mxu0
    %v5048 = vpop.f32.mrf.mxu0
    %v5049 = vadd.f32 %v5000, %v5048
    %v5050 = vpop.f32.mrf.mxu0
    %5051 = vmatprep.mubr.bf16.mxu0 %v4351
    %5052 = vmatmul.mubr.bf16.gmra.mxu0 %v4345
    %v5053 = vpop.f32.mrf.mxu0
    %v5054 = vadd.f32 %v5005, %v5053
    %v5055 = vpop.f32.mrf.mxu0
    %v5056 = vpop.f32.mrf.mxu0
    %v5057 = vadd.f32 %v5008, %v5056
    %v5058 = vpop.f32.mrf.mxu0
    %5059 = vdwg.mxu0
    %5060 = vst [vmem:[#allocation13] sm:$0xff] %v5046
    %5061 = vst [vmem:[#allocation13 + $0x8] sm:$0xff] %v5049
    %5062 = vst [vmem:[#allocation13 + $0x10] sm:$0xff] %v5054
    %5063 = vst [vmem:[#allocation13 + $0x18] sm:$0xff] %v5057
    // Predicated region
    $region58: #{tpu_custom_call.1} parent=1 // pred_check
      _
    $region59: #{tpu_custom_call.1} parent=1 // pred_check_branch
      %5065 = sbr.rel (0) target = $region61
    $region60: #{tpu_custom_call.1} parent=1 // pred_region
      %s5067 = ssub.s32 512, 512
      %5068 = vsyncadd [#allocation4], %s5067
      %s5069 = sshll.u32 [#allocation13], 4
      %s5070 = int_to_ptr.vmem [resolvable:$true] %s5069
      %5075 = dma.vmem_to_hbm [thread:$0]  %s5070, 512, %s8, [#allocation4], 128, 128, 8
    $region61: #{tpu_custom_call.1} parent=1 // pred_fallthru
      _
    // Predicated region
    $region62: #{tpu_custom_call.1} parent=1 // pred_check
      _
    $region63: #{tpu_custom_call.1} parent=1 // pred_check_branch
      %5077 = sbr.rel (0) target = $region65
    $region64: #{tpu_custom_call.1} parent=1 // pred_region
      %5078 = dma.done [#allocation4], 512
    $region65: #{tpu_custom_call.1} parent=1 // pred_fallthru
      _
    %5079 = vsyncpa [#allocation3], 1
    %5080 = vsyncpa [#allocation6], 1
    %5081 = vsyncpa [#allocation9], 1
    %5082 = vsyncpa [#allocation12], 1
    %5083 = vsyncpa [#allocation4], 1

</llo_original>
